<compile_context>
chip_gen: v7x
topology: tpu7x:2x2x1
jax: 0.10.0
libtpu: 0.0.40
codegen_flags: <defaults>
</compile_context>

<pallas_src>
import functools

import jax
import jax.numpy as jnp
from jax.experimental import pallas as pl
from jax.experimental.pallas import tpu as pltpu


def _upsample2x_pair_kernel(x_ref, s_ref, o_ref, *, pad, precision, unroll):
    # x_ref: (cb, H, W) input planes.
    # s_ref: (n_terms, W, 2*Wo) constant 0/1 column-selection matrices (resident).
    # o_ref: (cb, Ho//2, 2*Wo) output planes in the "paired row" view.
    cb, H, W = x_ref.shape
    n_terms = s_ref.shape[0]
    half = o_ref.shape[1]                  # = H - pad
    q0 = pad // 2                          # input row offset feeding even output rows
    q1 = (pad + 1) // 2                    # input row offset feeding odd output rows
    cdt = s_ref.dtype                      # compute dtype (bf16 stays bf16, else f32)

    # Hoisted once per grid step (VMEM-resident constants).
    s0 = s_ref[0]
    s1 = s_ref[1] if n_terms == 2 else None

    def plane(c, carry):
        xc = x_ref[c].astype(cdt)                                   # (H, W)
        pair = jnp.dot(xc[q0:q0 + half, :], s0,
                       precision=precision,
                       preferred_element_type=jnp.float32)          # (half, 2*Wo)
        if s1 is not None:  # odd padding: odd output rows come from the next input row
            pair = pair + jnp.dot(xc[q1:q1 + half, :], s1,
                                  precision=precision,
                                  preferred_element_type=jnp.float32)
        o_ref[c] = pair.astype(o_ref.dtype)                         # full-plane store
        return carry

    jax.lax.fori_loop(0, cb, plane, None, unroll=unroll)


def _build_selection_matrices(W, Wo, pad, dtype):
    """0/1 matrices mapping a W-wide input row to a 2*Wo-wide output pair row."""
    src = (jnp.arange(Wo, dtype=jnp.int32) + pad) // 2              # source col per out col
    S = (jnp.arange(W, dtype=jnp.int32)[:, None] == src[None, :]).astype(dtype)  # (W, Wo)
    if pad % 2 == 0:
        # Even pad: both halves of the pair row come from the same input row.
        return jnp.concatenate([S, S], axis=1)[None]                # (1, W, 2*Wo)
    Z = jnp.zeros_like(S)
    return jnp.stack([jnp.concatenate([S, Z], axis=1),              # even half
                      jnp.concatenate([Z, S], axis=1)], axis=0)     # odd half  (2, W, 2*Wo)


def _pick_plane_block(nc, H, W, half, Wo2, itemsize, comp_itemsize, n_terms,
                      budget_bytes=16 * 1024 * 1024):
    """Largest divisor of nc whose real per-step VMEM footprint fits the budget."""
    def footprint(cb):
        in_blk = cb * H * W * itemsize
        out_blk = cb * half * Wo2 * itemsize
        s_resident = n_terms * W * Wo2 * comp_itemsize
        per_plane = (H * W + 3 * half * Wo2) * 4     # xc copy + f32 pair intermediates
        return 2 * (in_blk + out_blk) + s_resident + per_plane      # 2x = double buffering

    divisors = [d for d in range(1, nc + 1) if nc % d == 0]
    fitting = [d for d in divisors if footprint(d) <= budget_bytes] or [1]
    best = max(fitting)
    # Prefer >= 2 grid steps (megacore on v7x / pipeline overlap) only if that
    # does not shrink the block by more than 2x; on 1-TC chips bigger blocks win.
    multi = [d for d in fitting if nc // d >= 2]
    if multi and 2 * max(multi) >= best:
        best = max(multi)
    return best


def upsample2x(x: jax.Array, padding: int) -> jax.Array:
    """F.interpolate(x, scale_factor=2, mode='nearest') then crop `padding` on H/W."""
    N, C, H, W = x.shape
    p = int(padding)
    assert p >= 0, "padding must be non-negative"
    half = H - p
    Wh = W - p
    assert half > 0 and Wh > 0, "padding too large for input spatial size"
    Ho, Wo = 2 * half, 2 * Wh
    Wo2 = 2 * Wo
    nc = N * C

    if x.dtype == jnp.bfloat16:
        cdt = jnp.bfloat16
        precision = None                       # exact for 0/1 selection (f32 accumulation)
    else:
        cdt = jnp.float32
        precision = jax.lax.Precision.HIGHEST  # required for f32 bit-exactness

    s_terms = _build_selection_matrices(W, Wo, p, cdt)
    n_terms = int(s_terms.shape[0])

    xp = x.reshape(nc, H, W)                   # free contiguous reshape in the wrapper
    cb = _pick_plane_block(nc, H, W, half, Wo2, x.dtype.itemsize,
                           jnp.dtype(cdt).itemsize, n_terms)
    grid = (nc // cb,)

    # TODO(synk): for planes so large that even cb=1 exceeds the VMEM budget,
    # add an H-tiling grid axis (crop handled at the first/last H tile).

    kernel = functools.partial(_upsample2x_pair_kernel, pad=p,
                               precision=precision, unroll=bool(cb <= 8))

    flops = 2 * nc * n_terms * half * W * Wo2
    bytes_accessed = (x.size * x.dtype.itemsize
                      + nc * half * Wo2 * x.dtype.itemsize
                      + s_terms.size * s_terms.dtype.itemsize)

    out = pl.pallas_call(
        kernel,
        out_shape=jax.ShapeDtypeStruct((nc, half, Wo2), x.dtype),
        grid=grid,
        in_specs=[pl.BlockSpec((cb, H, W), lambda i: (i, 0, 0)),
                  pl.BlockSpec((n_terms, W, Wo2), lambda i: (0, 0, 0))],
        # NOTE: if profiling shows exposed output writeback (output is 4x the
        # input), pipeline_mode=pl.Buffered(3) on this spec is the next lever.
        out_specs=pl.BlockSpec((cb, half, Wo2), lambda i: (i, 0, 0)),
        compiler_params=pltpu.CompilerParams(
            dimension_semantics=("parallel",),
            vmem_limit_bytes=32 * 1024 * 1024,
        ),
        cost_estimate=pl.CostEstimate(
            flops=flops, transcendentals=0, bytes_accessed=bytes_accessed),
    )(xp, s_terms)

    # (nc, Ho//2, 2*Wo) row-major is exactly (N, C, Ho, Wo) row-major.
    return out.reshape(N, C, Ho, Wo)


def _reference_upsample2x(x: jax.Array, padding: int) -> jax.Array:
    # Pure-JAX reference mirroring F.interpolate(..., mode='nearest') + crop.
    r = jnp.repeat(jnp.repeat(x, 2, axis=2), 2, axis=3)
    if padding > 0:
        r = r[:, :, padding:-padding, padding:-padding]
    return r


if __name__ == "__main__":
    key = jax.random.PRNGKey(0)
    N, C, H, W = 2, 4, 16, 16

    x = jax.random.normal(key, (N, C, H, W), dtype=jnp.float32)
    # Round values to be bf16-representable so the 0/1 selection matmul is
    # bit-exact on both the f32 (HIGHEST) and bf16 paths -> exact comparison.
    x = x.astype(jnp.bfloat16).astype(jnp.float32)

    # f32 path: odd, even and zero padding (exercises 2-term and 1-term kernels).
    for padding in (1, 2, 0):
        out = jax.block_until_ready(upsample2x(x, padding))
        ref = _reference_upsample2x(x, padding)
        assert out.shape == ref.shape, (padding, out.shape, ref.shape)
        assert out.dtype == ref.dtype, (padding, out.dtype, ref.dtype)
        assert jnp.array_equal(out, ref), f"f32 mismatch at padding={padding}"

    # bf16 path (module's typical inference dtype), odd padding.
    x_bf16 = x.astype(jnp.bfloat16)
    out_bf16 = jax.block_until_ready(upsample2x(x_bf16, 1))
    ref_bf16 = _reference_upsample2x(x_bf16, 1)
    assert out_bf16.dtype == jnp.bfloat16
    assert jnp.array_equal(out_bf16, ref_bf16), "bf16 mismatch at padding=1"

    print("KERNEL_OK")
</pallas_src>

<mosaic_0001>
module attributes {stable_mosaic.version = 11 : i64} {
  func.func @_upsample2x_pair_kernel(%arg0: i32, %arg1: memref<4x16x16xf32, #tpu.memory_space<vmem>>, %arg2: memref<2x16x60xf32, #tpu.memory_space<vmem>>, %arg3: memref<4x15x60xf32, #tpu.memory_space<vmem>>) attributes {dimension_semantics = [#tpu.dimension_semantics<parallel>], iteration_bounds = array<i64: 2>, scalar_prefetch = 0 : i64, scratch_operands = 0 : i64, tpu.core_type = #tpu.core_type<tc>, window_params = [{transform_indices = @transform_0, window_bounds = array<i64: 4, 16, 16>}, {pipeline_mode = #tpu.pipeline_mode<synchronous>, transform_indices = @transform_1, window_bounds = array<i64: 2, 16, 60>}, {transform_indices = @transform_2, window_bounds = array<i64: 4, 15, 60>}]} {
    %c0 = arith.constant 0 : index
    %c0_0 = arith.constant 0 : index
    %c0_1 = arith.constant 0 : index
    %0 = vector.load %arg2[%c0, %c0_0, %c0_1] : memref<2x16x60xf32, #tpu.memory_space<vmem>>, vector<1x16x60xf32>
    %1 = vector.shape_cast %0 : vector<1x16x60xf32> to vector<16x60xf32>
    %c1 = arith.constant 1 : index
    %c0_2 = arith.constant 0 : index
    %c0_3 = arith.constant 0 : index
    %2 = vector.load %arg2[%c1, %c0_2, %c0_3] : memref<2x16x60xf32, #tpu.memory_space<vmem>>, vector<1x16x60xf32>
    %3 = vector.shape_cast %2 : vector<1x16x60xf32> to vector<16x60xf32>
    %c0_i32 = arith.constant 0 : i32
    %4 = arith.index_cast %c0_i32 : i32 to index
    %c0_4 = arith.constant 0 : index
    %c0_5 = arith.constant 0 : index
    %5 = vector.load %arg1[%4, %c0_4, %c0_5] : memref<4x16x16xf32, #tpu.memory_space<vmem>>, vector<1x16x16xf32>
    %6 = vector.shape_cast %5 : vector<1x16x16xf32> to vector<16x16xf32>
    %7 = vector.extract_strided_slice %6 {offsets = [0, 0], sizes = [15, 16], strides = [1, 1]} : vector<16x16xf32> to vector<15x16xf32>
    %cst = arith.constant dense<0.000000e+00> : vector<15x60xf32>
    %8 = tpu.matmul %7, %1, %cst {dimension_numbers = #tpu.dot_dimension_numbers<[1], [0], [0], [1], [0, 0, 1, 1], [], []>, precision = #tpu.contract_precision<fp32>} : vector<15x16xf32>, vector<16x60xf32>, vector<15x60xf32> -> vector<15x60xf32>
    %9 = vector.extract_strided_slice %6 {offsets = [1, 0], sizes = [15, 16], strides = [1, 1]} : vector<16x16xf32> to vector<15x16xf32>
    %cst_6 = arith.constant dense<0.000000e+00> : vector<15x60xf32>
    %10 = tpu.matmul %9, %3, %cst_6 {dimension_numbers = #tpu.dot_dimension_numbers<[1], [0], [0], [1], [0, 0, 1, 1], [], []>, precision = #tpu.contract_precision<fp32>} : vector<15x16xf32>, vector<16x60xf32>, vector<15x60xf32> -> vector<15x60xf32>
    %11 = arith.addf %8, %10 : vector<15x60xf32>
    %12 = arith.index_cast %c0_i32 : i32 to index
    %c0_7 = arith.constant 0 : index
    %c0_8 = arith.constant 0 : index
    %13 = vector.load %arg3[%12, %c0_7, %c0_8] : memref<4x15x60xf32, #tpu.memory_space<vmem>>, vector<1x15x60xf32>
    %14 = vector.shape_cast %13 : vector<1x15x60xf32> to vector<15x60xf32>
    %15 = vector.shape_cast %11 : vector<15x60xf32> to vector<1x15x60xf32>
    tpu.vector_store %arg3[%12, %c0_7, %c0_8], %15 {strides = array<i32>} : memref<4x15x60xf32, #tpu.memory_space<vmem>>, vector<1x15x60xf32>,
    %c1_i32 = arith.constant 1 : i32
    %16 = arith.index_cast %c1_i32 : i32 to index
    %c0_9 = arith.constant 0 : index
    %c0_10 = arith.constant 0 : index
    %17 = vector.load %arg1[%16, %c0_9, %c0_10] : memref<4x16x16xf32, #tpu.memory_space<vmem>>, vector<1x16x16xf32>
    %18 = vector.shape_cast %17 : vector<1x16x16xf32> to vector<16x16xf32>
    %19 = vector.extract_strided_slice %18 {offsets = [0, 0], sizes = [15, 16], strides = [1, 1]} : vector<16x16xf32> to vector<15x16xf32>
    %cst_11 = arith.constant dense<0.000000e+00> : vector<15x60xf32>
    %20 = tpu.matmul %19, %1, %cst_11 {dimension_numbers = #tpu.dot_dimension_numbers<[1], [0], [0], [1], [0, 0, 1, 1], [], []>, precision = #tpu.contract_precision<fp32>} : vector<15x16xf32>, vector<16x60xf32>, vector<15x60xf32> -> vector<15x60xf32>
    %21 = vector.extract_strided_slice %18 {offsets = [1, 0], sizes = [15, 16], strides = [1, 1]} : vector<16x16xf32> to vector<15x16xf32>
    %cst_12 = arith.constant dense<0.000000e+00> : vector<15x60xf32>
    %22 = tpu.matmul %21, %3, %cst_12 {dimension_numbers = #tpu.dot_dimension_numbers<[1], [0], [0], [1], [0, 0, 1, 1], [], []>, precision = #tpu.contract_precision<fp32>} : vector<15x16xf32>, vector<16x60xf32>, vector<15x60xf32> -> vector<15x60xf32>
    %23 = arith.addf %20, %22 : vector<15x60xf32>
    %24 = arith.index_cast %c1_i32 : i32 to index
    %c0_13 = arith.constant 0 : index
    %c0_14 = arith.constant 0 : index
    %25 = vector.load %arg3[%24, %c0_13, %c0_14] : memref<4x15x60xf32, #tpu.memory_space<vmem>>, vector<1x15x60xf32>
    %26 = vector.shape_cast %25 : vector<1x15x60xf32> to vector<15x60xf32>
    %27 = vector.shape_cast %23 : vector<15x60xf32> to vector<1x15x60xf32>
    tpu.vector_store %arg3[%24, %c0_13, %c0_14], %27 {strides = array<i32>} : memref<4x15x60xf32, #tpu.memory_space<vmem>>, vector<1x15x60xf32>,
    %c2_i32 = arith.constant 2 : i32
    %28 = arith.index_cast %c2_i32 : i32 to index
    %c0_15 = arith.constant 0 : index
    %c0_16 = arith.constant 0 : index
    %29 = vector.load %arg1[%28, %c0_15, %c0_16] : memref<4x16x16xf32, #tpu.memory_space<vmem>>, vector<1x16x16xf32>
    %30 = vector.shape_cast %29 : vector<1x16x16xf32> to vector<16x16xf32>
    %31 = vector.extract_strided_slice %30 {offsets = [0, 0], sizes = [15, 16], strides = [1, 1]} : vector<16x16xf32> to vector<15x16xf32>
    %cst_17 = arith.constant dense<0.000000e+00> : vector<15x60xf32>
    %32 = tpu.matmul %31, %1, %cst_17 {dimension_numbers = #tpu.dot_dimension_numbers<[1], [0], [0], [1], [0, 0, 1, 1], [], []>, precision = #tpu.contract_precision<fp32>} : vector<15x16xf32>, vector<16x60xf32>, vector<15x60xf32> -> vector<15x60xf32>
    %33 = vector.extract_strided_slice %30 {offsets = [1, 0], sizes = [15, 16], strides = [1, 1]} : vector<16x16xf32> to vector<15x16xf32>
    %cst_18 = arith.constant dense<0.000000e+00> : vector<15x60xf32>
    %34 = tpu.matmul %33, %3, %cst_18 {dimension_numbers = #tpu.dot_dimension_numbers<[1], [0], [0], [1], [0, 0, 1, 1], [], []>, precision = #tpu.contract_precision<fp32>} : vector<15x16xf32>, vector<16x60xf32>, vector<15x60xf32> -> vector<15x60xf32>
    %35 = arith.addf %32, %34 : vector<15x60xf32>
    %36 = arith.index_cast %c2_i32 : i32 to index
    %c0_19 = arith.constant 0 : index
    %c0_20 = arith.constant 0 : index
    %37 = vector.load %arg3[%36, %c0_19, %c0_20] : memref<4x15x60xf32, #tpu.memory_space<vmem>>, vector<1x15x60xf32>
    %38 = vector.shape_cast %37 : vector<1x15x60xf32> to vector<15x60xf32>
    %39 = vector.shape_cast %35 : vector<15x60xf32> to vector<1x15x60xf32>
    tpu.vector_store %arg3[%36, %c0_19, %c0_20], %39 {strides = array<i32>} : memref<4x15x60xf32, #tpu.memory_space<vmem>>, vector<1x15x60xf32>,
    %c3_i32 = arith.constant 3 : i32
    %40 = arith.index_cast %c3_i32 : i32 to index
    %c0_21 = arith.constant 0 : index
    %c0_22 = arith.constant 0 : index
    %41 = vector.load %arg1[%40, %c0_21, %c0_22] : memref<4x16x16xf32, #tpu.memory_space<vmem>>, vector<1x16x16xf32>
    %42 = vector.shape_cast %41 : vector<1x16x16xf32> to vector<16x16xf32>
    %43 = vector.extract_strided_slice %42 {offsets = [0, 0], sizes = [15, 16], strides = [1, 1]} : vector<16x16xf32> to vector<15x16xf32>
    %cst_23 = arith.constant dense<0.000000e+00> : vector<15x60xf32>
    %44 = tpu.matmul %43, %1, %cst_23 {dimension_numbers = #tpu.dot_dimension_numbers<[1], [0], [0], [1], [0, 0, 1, 1], [], []>, precision = #tpu.contract_precision<fp32>} : vector<15x16xf32>, vector<16x60xf32>, vector<15x60xf32> -> vector<15x60xf32>
    %45 = vector.extract_strided_slice %42 {offsets = [1, 0], sizes = [15, 16], strides = [1, 1]} : vector<16x16xf32> to vector<15x16xf32>
    %cst_24 = arith.constant dense<0.000000e+00> : vector<15x60xf32>
    %46 = tpu.matmul %45, %3, %cst_24 {dimension_numbers = #tpu.dot_dimension_numbers<[1], [0], [0], [1], [0, 0, 1, 1], [], []>, precision = #tpu.contract_precision<fp32>} : vector<15x16xf32>, vector<16x60xf32>, vector<15x60xf32> -> vector<15x60xf32>
    %47 = arith.addf %44, %46 : vector<15x60xf32>
    %48 = arith.index_cast %c3_i32 : i32 to index
    %c0_25 = arith.constant 0 : index
    %c0_26 = arith.constant 0 : index
    %49 = vector.load %arg3[%48, %c0_25, %c0_26] : memref<4x15x60xf32, #tpu.memory_space<vmem>>, vector<1x15x60xf32>
    %50 = vector.shape_cast %49 : vector<1x15x60xf32> to vector<15x60xf32>
    %51 = vector.shape_cast %47 : vector<15x60xf32> to vector<1x15x60xf32>
    tpu.vector_store %arg3[%48, %c0_25, %c0_26], %51 {strides = array<i32>} : memref<4x15x60xf32, #tpu.memory_space<vmem>>, vector<1x15x60xf32>,
    %c4_i32 = arith.constant 4 : i32
    return
  }
  func.func @transform_0(%arg0: i32) -> (i32, i32, i32) {
    %c0_i32 = arith.constant 0 : i32
    %c0_i32_0 = arith.constant 0 : i32
    %c0_i32_1 = arith.constant 0 : i32
    return %arg0, %c0_i32, %c0_i32_0 : i32, i32, i32
  }
  func.func @transform_1(%arg0: i32) -> (i32, i32, i32) {
    %c0_i32 = arith.constant 0 : i32
    %c0_i32_0 = arith.constant 0 : i32
    %c0_i32_1 = arith.constant 0 : i32
    %c0_i32_2 = arith.constant 0 : i32
    return %c0_i32, %c0_i32_0, %c0_i32_1 : i32, i32, i32
  }
  func.func @transform_2(%arg0: i32) -> (i32, i32, i32) {
    %c0_i32 = arith.constant 0 : i32
    %c0_i32_0 = arith.constant 0 : i32
    %c0_i32_1 = arith.constant 0 : i32
    return %arg0, %c0_i32, %c0_i32_0 : i32, i32, i32
  }
}

</mosaic_0001>

<llo_original>
// kernel: tpu_custom_call.1
$region0: #{tpu_custom_call.1}
  #allocation0 [shape = 'u32[]', space=smem, size = 0x4, offset = 0x4, fixed_abs, tag = 'smem constant byte address 0x4 - core index']
  #allocation1 [shape = 'u32[144,128]{1,0:T(1,128)}', space=vmem, size = 0x12000, scoped, tag = 'internal scratch']
  %s0 = inlined_call_operand.hbm [shape: f32[8,16,16], index: 0, kind: input, shape index: {}]
  %s1 = inlined_call_operand.hbm [shape: f32[2,16,60], index: 1, kind: input, shape index: {}]
  %s2 = inlined_call_operand.vmem [shape: f32[8,15,60], index: 2, kind: output, shape index: {}]
  %s3 = sld [smem:[#allocation0]]
  $region49: #{tpu_custom_call.1} parent=0
    _
  %s5 = ssub.s32 1, %s3
  %s6 = scalar_select 0, %s5, %s3
  $region1: #{tpu_custom_call.1} parent=0
    #allocation2 [shape = 'u8[65536]{0}', space=vmem, size = 0x10000, scoped, tag = 'input window, operand 0']
    #allocation3 [shape = 's32[2]{0}', space=sflag, size = 0x8, scoped, tag = 'scoped memory for tpu_custom_call.1']
    #allocation4 [shape = 'u8[16384]{0}', space=vmem, size = 0x4000, scoped, tag = 'input window, operand 1, single buffered']
    #allocation5 [shape = 's32[1]{0}', space=sflag, size = 0x4, scoped, tag = 'scoped memory for tpu_custom_call.1']
    %7 = vsyncpa [#allocation3], 0
    %s8 = scalar_lea.sflag [#allocation3], 1
    %9 = vsyncpa %s8, 0
    %10 = vsyncpa [#allocation5], 0
    loop: start=0, step=1, limit=4
    $region2: #{tpu_custom_call.1} parent=1 // loop_pre_header
      _
    $region3: #{tpu_custom_call.1} parent=1 // loop_header
      %s12 = sphi 0, %s16
      %p13 = scmp.ge.s32.totalorder %s12, 4
      %s22 = sphi 0, %s24
      %s25 = sphi 0, %s22
      %s26 = sphi 0, %s25
      %s42 = sphi 0, %s26
      %s46 = sphi 0, %s46
      %s48 = sphi 0, %s46
      %s49 = sphi 0, %s48
      %s63 = sphi 0, %s49
      %s69 = sphi 0, %s71
      %s72 = sphi 0, %s69
      %s73 = sphi 0, %s72
      %s89 = sphi 0, %s73
    $region4: #{tpu_custom_call.1} parent=1 // loop_header_branch
      %15 = sbr.rel (%p13) target = $region8
    $region5: #{tpu_custom_call.1} parent=1 // loop_body
      %s17 = ssub.s32 %s12, 1
      %s18 = ssub.s32 %s12, 2
      %s19 = sadd.s32 %s12, 1
      %s20 = ssub.s32 %s12, %s19
      %p21 = scmp.eq.s32.totalorder %s20, 0
      %s23 = sadd.s32 %s22, 1
      %s24 = scalar_select %p21, %s22, %s23
      %p27 = pneg %p21
      %p28 = scmp.eq.s32.totalorder %s12, 1
      %p29 = por %p27, %p28
      %p30 = scmp.ne.s32.totalorder %s22, %s25
      %p31 = scmp.eq.s32.totalorder %s12, 0
      %p32 = por %p30, %p31
      %p33 = scmp.ne.s32.totalorder %s22, %s25
      %p34 = scmp.eq.s32.totalorder %s17, 1
      %p35 = por %p33, %p34
      %p36 = scmp.ne.s32.totalorder %s25, %s26
      %p37 = scmp.eq.s32.totalorder %s17, 0
      %p38 = por %p36, %p37
      %p39 = scmp.ne.s32.totalorder %s25, %s26
      %p40 = scmp.eq.s32.totalorder %s18, 1
      %p41 = por %p39, %p40
      %p43 = scmp.ne.s32.totalorder %s26, %s42
      %p44 = scmp.eq.s32.totalorder %s18, 0
      %p45 = por %p43, %p44
      %s47 = sadd.s32 %s46, 1
      %p50 = scmp.eq.s32.totalorder %s12, 1
      %p51 = scmp.ne.s32.totalorder %s46, %s48
      %p52 = scmp.eq.s32.totalorder %s12, 0
      %p53 = por %p51, %p52
      %p54 = scmp.ne.s32.totalorder %s46, %s48
      %p55 = scmp.eq.s32.totalorder %s17, 1
      %p56 = por %p54, %p55
      %p57 = scmp.ne.s32.totalorder %s48, %s49
      %p58 = scmp.eq.s32.totalorder %s17, 0
      %p59 = por %p57, %p58
      %p60 = scmp.ne.s32.totalorder %s48, %s49
      %p61 = scmp.eq.s32.totalorder %s18, 1
      %p62 = por %p60, %p61
      %p64 = scmp.ne.s32.totalorder %s49, %s63
      %p65 = scmp.eq.s32.totalorder %s18, 0
      %p66 = por %p64, %p65
      %s67 = ssub.s32 %s12, %s19
      %p68 = scmp.eq.s32.totalorder %s67, 0
      %s70 = sadd.s32 %s69, 1
      %s71 = scalar_select %p68, %s69, %s70
      %p74 = pneg %p68
      %p75 = scmp.eq.s32.totalorder %s12, 1
      %p76 = por %p74, %p75
      %p77 = scmp.ne.s32.totalorder %s69, %s72
      %p78 = scmp.eq.s32.totalorder %s12, 0
      %p79 = por %p77, %p78
      %p80 = scmp.ne.s32.totalorder %s69, %s72
      %p81 = scmp.eq.s32.totalorder %s17, 1
      %p82 = por %p80, %p81
      %p83 = scmp.ne.s32.totalorder %s72, %s73
      %p84 = scmp.eq.s32.totalorder %s17, 0
      %p85 = por %p83, %p84
      %p86 = scmp.ne.s32.totalorder %s72, %s73
      %p87 = scmp.eq.s32.totalorder %s18, 1
      %p88 = por %p86, %p87
      %p90 = scmp.ne.s32.totalorder %s73, %s89
      %p91 = scmp.eq.s32.totalorder %s18, 0
      %p92 = por %p90, %p91
      %p93 = scmp.le.s32.totalorder 1, %s12
      %p94 = scmp.lt.s32.totalorder %s12, 3
      %p95 = pnand %p93, %p94
      %p96 = pneg %p95
      // Predicated region
      $region9: #{tpu_custom_call.1} parent=5 // pred_check
        _
      $region10: #{tpu_custom_call.1} parent=5 // pred_check_branch
        %98 = sbr.rel (%p95) target = $region12
      $region11: #{tpu_custom_call.1} parent=5 // pred_region
        %s99 = ssub.s32 %s12, 1
        // Predicated region
        $region13: #{tpu_custom_call.1} parent=11 // pred_check
          %p100 = pneg %p59
        $region14: #{tpu_custom_call.1} parent=11 // pred_check_branch
          %102 = sbr.rel (%p100) target = $region16
        $region15: #{tpu_custom_call.1} parent=11 // pred_region
          %s104 = ssub.s32 512, 512
          %105 = vsyncadd [#allocation5], %s104
          %s106 = sshll.u32 [#allocation4], 4
          %s107 = int_to_ptr.vmem [resolvable:$true] %s106
          %112 = dma.hbm_to_vmem [thread:$0]  %s1, 512, %s107, [#allocation5], 128, 128, 8
        $region16: #{tpu_custom_call.1} parent=11 // pred_fallthru
          _
      $region12: #{tpu_custom_call.1} parent=5 // pred_fallthru
        _
      %p113 = scmp.lt.s32.totalorder %s12, 2
      // Predicated region
      $region17: #{tpu_custom_call.1} parent=5 // pred_check
        %p114 = pneg %p113
      $region18: #{tpu_custom_call.1} parent=5 // pred_check_branch
        %116 = sbr.rel (%p114) target = $region20
      $region19: #{tpu_custom_call.1} parent=5 // pred_region
        // Predicated region
        $region21: #{tpu_custom_call.1} parent=19 // pred_check
          %p117 = pneg %p32
        $region22: #{tpu_custom_call.1} parent=19 // pred_check_branch
          %119 = sbr.rel (%p117) target = $region24
        $region23: #{tpu_custom_call.1} parent=19 // pred_region
          %s120 = sand.u32 %s22, 1
          %s121 = scalar_lea.sflag [#allocation3], %s120
          %s122 = sand.u32 %s22, 1
          %s123 = smul.addr %s122, 64
          %s124 = scalar_lea.vmem [#allocation2], %s123
          %s125 = smul.u32 4, %s12
          %s127 = ssub.s32 1024, 1024
          %128 = vsyncadd %s121, %s127
          %s129 = smul.addr %s125, 2
          %s130 = smul.addr %s129, 128
          %s131 = scalar_lea.hbm %s0, %s130
          %s132 = sshll.u32 %s124, 4
          %s133 = int_to_ptr.vmem [resolvable:$true] %s132
          %138 = dma.hbm_to_vmem [thread:$0]  %s131, 1024, %s133, %s121, 128, 128, 8
        $region24: #{tpu_custom_call.1} parent=19 // pred_fallthru
          _
      $region20: #{tpu_custom_call.1} parent=5 // pred_fallthru
        _
      %p139 = scmp.le.s32.totalorder 1, %s12
      %p140 = scmp.lt.s32.totalorder %s12, 3
      %p141 = pnand %p139, %p140
      %p142 = pneg %p141
      // Predicated region
      $region25: #{tpu_custom_call.1} parent=5 // pred_check
        _
      $region26: #{tpu_custom_call.1} parent=5 // pred_check_branch
        %144 = sbr.rel (%p141) target = $region28
      $region27: #{tpu_custom_call.1} parent=5 // pred_region
        %s145 = ssub.s32 %s12, 1
        %s146 = sand.u32 %s25, 1
        %s147 = scalar_lea.sflag [#allocation3], %s146
        %s148 = sand.u32 %s25, 1
        %s149 = smul.addr %s148, 64
        %s150 = scalar_lea.vmem [#allocation2], %s149
        // Predicated region
        $region29: #{tpu_custom_call.1} parent=27 // pred_check
          %p151 = pneg %p38
        $region30: #{tpu_custom_call.1} parent=27 // pred_check_branch
          %153 = sbr.rel (%p151) target = $region32
        $region31: #{tpu_custom_call.1} parent=27 // pred_region
          %154 = dma.done %s147, 1024
        $region32: #{tpu_custom_call.1} parent=27 // pred_fallthru
          _
        // Predicated region
        $region33: #{tpu_custom_call.1} parent=27 // pred_check
          %p155 = pneg %p59
        $region34: #{tpu_custom_call.1} parent=27 // pred_check_branch
          %157 = sbr.rel (%p155) target = $region36
        $region35: #{tpu_custom_call.1} parent=27 // pred_region
          %158 = dma.done [#allocation5], 512
        $region36: #{tpu_custom_call.1} parent=27 // pred_fallthru
          _
        %s159 = sand.u32 %s25, 1
        %s160 = scalar_lea.sflag [#allocation3], %s159
        %s161 = sand.u32 %s25, 1
        %s162 = smul.addr %s161, 64
        %s163 = scalar_lea.vmem [#allocation2], %s162
        %p164 = pneg %p38
        %p165 = pneg %p35
        %p166 = pneg %p59
        %p167 = pneg %p56
        %p168 = pneg %p85
        %p169 = pneg %p82
        %s170 = smul.u32 4, %s17
        %p171 = scmp.lt.s32.totalorder %s170, 7
        %s172 = scalar_select %p171, %s170, 7
        %s173 = smul.addr %s172, 2
        %s174 = smul.addr %s173, 8
        %s175 = scalar_lea.vmem %s2, %s174
        %s176 = smul.u32 4, %s17
        %s177 = smul.u32 4, %s17
        %p178 = scmp.lt.s32.totalorder %s177, 7
        %s179 = scalar_select %p178, %s177, 7
        %s180 = smul.addr %s179, 2
        %s181 = smul.addr %s180, 8
        %s182 = scalar_lea.vmem %s2, %s181
        %s183 = smul.u32 4, %s17
        %v184 = vld [vmem:[#allocation4] sm:$0xff]
        %v185 = vld [vmem:[#allocation4 + $0x8] sm:$0xff]
        %s186 = scalar_lea.vmem [#allocation4], 16
        %v187 = vld [vmem:[%s186] sm:$0xff]
        %v188 = vld [vmem:[%s186 + $0x8] sm:$0xff]
        %v189 = vld [vmem:[%s150] sm:$0xff]
        %v190 = vld [vmem:[%s150 + $0x8] sm:$0xff]
        %vm193 = vcmask 1046528
        %v194 = vrot.slane %v189, 1
        %v195 = vrot.slane %v190, 1
        %v196 = vsel %vm193, %v194, %v195
        %vm197 = vcmask 130048
        %v198 = vsel %vm197, %v196, 0
        %v200 = vsel %vm197, %v195, 0
        %202 = vmatprep.subr.mxu0 0.0
        %v203 = vand.u32 %v187, 4294901760
        %204 = vmatpush1.msra.mxu0 %v203
        %205 = vmatprep.subr.mxu0 0.0
        %v206 = vand.u32 %v188, 4294901760
        %207 = vmatpush1.msra.mxu0 %v206
        %208 = vmatprep.subr.mxu0 0.0
        %209 = vmatpush1.msra.mxu0 0.0
        %210 = vmatprep.subr.mxu0 0.0
        %211 = vmatpush1.msra.mxu0 0.0
        %212 = vmatprep.subr.mxu0 0.0
        %213 = vmatpush1.msra.mxu0 0.0
        %214 = vmatprep.subr.mxu0 0.0
        %215 = vmatpush1.msra.mxu0 0.0
        %216 = vmatprep.subr.mxu0 0.0
        %217 = vmatpush1.msra.mxu0 0.0
        %218 = vmatprep.subr.mxu0 0.0
        %219 = vmatpush1.msra.mxu0 0.0
        %220 = vmatprep.subr.mxu0 0.0
        %221 = vmatpush1.msra.mxu0 0.0
        %222 = vmatprep.subr.mxu0 0.0
        %223 = vmatpush1.msra.mxu0 0.0
        %224 = vmatprep.subr.mxu0 0.0
        %225 = vmatpush1.msra.mxu0 0.0
        %226 = vmatprep.subr.mxu0 0.0
        %227 = vmatpush1.msra.mxu0 0.0
        %228 = vmatprep.subr.mxu0 0.0
        %229 = vmatpush1.msra.mxu0 0.0
        %230 = vmatprep.subr.mxu0 0.0
        %231 = vmatpush1.msra.mxu0 0.0
        %232 = vmatprep.subr.mxu0 0.0
        %233 = vmatpush1.msra.mxu0 0.0
        %234 = vmatprep.subr.mxu0 0.0
        %235 = vmatpush1.msra.mxu0 0.0
        %236 = vmatprep.subr.mxu0 0.0
        %237 = vmatpush1.msra.mxu0 0.0
        %238 = vmatprep.subr.mxu0 0.0
        %239 = vmatpush1.msra.mxu0 0.0
        %240 = vmatprep.subr.mxu0 0.0
        %241 = vmatpush1.msra.mxu0 0.0
        %242 = vmatprep.subr.mxu0 0.0
        %243 = vmatpush1.msra.mxu0 0.0
        %244 = vmatprep.subr.mxu0 0.0
        %245 = vmatpush1.msra.mxu0 0.0
        %246 = vmatprep.subr.mxu0 0.0
        %247 = vmatpush1.msra.mxu0 0.0
        %248 = vmatprep.subr.mxu0 0.0
        %249 = vmatpush1.msra.mxu0 0.0
        %250 = vmatprep.subr.mxu0 0.0
        %251 = vmatpush1.msra.mxu0 0.0
        %252 = vmatprep.subr.mxu0 0.0
        %253 = vmatpush1.msra.mxu0 0.0
        %254 = vmatprep.subr.mxu0 0.0
        %255 = vmatpush1.msra.mxu0 0.0
        %256 = vmatprep.subr.mxu0 0.0
        %257 = vmatpush1.msra.mxu0 0.0
        %258 = vmatprep.subr.mxu0 0.0
        %259 = vmatpush1.msra.mxu0 0.0
        %260 = vmatprep.subr.mxu0 0.0
        %261 = vmatpush1.msra.mxu0 0.0
        %262 = vmatprep.subr.mxu0 0.0
        %263 = vmatpush1.msra.mxu0 0.0
        %264 = vmatprep.subr.mxu0 0.0
        %265 = vmatpush1.msra.mxu0 0.0
        %266 = vmatprep.subr.mxu0 0.0
        %267 = vmatpush1.msra.mxu0 0.0
        %268 = vmatprep.mubr.f32.mxu0 0.0
        %v269 = vand.u32 %v198, 4294901760
        %v270 = vsub.f32 %v198, %v269
        %v271 = vand.u32 %v270, 4294901760
        %v272 = vsub.f32 %v270, %v271
        %v273 = vand.u32 %v272, 4294901760
        %274 = vmatmul.mubr.f32.gmra.mrb[0].mxu0 %v273
        %v275 = vpop.f32.mrb[0].mxu0
        %v276 = vadd.f32 0.0, %v275
        %v277 = vpop.f32.mrb[0].mxu0
        %278 = vmatprep.mubr.f32.mxu0 0.0
        %v279 = vand.u32 %v200, 4294901760
        %v280 = vsub.f32 %v200, %v279
        %v281 = vand.u32 %v280, 4294901760
        %v282 = vsub.f32 %v280, %v281
        %v283 = vand.u32 %v282, 4294901760
        %284 = vmatmul.mubr.f32.gmra.mrb[0].mxu0 %v283
        %v285 = vpop.f32.mrb[0].mxu0
        %v286 = vadd.f32 0.0, %v285
        %v287 = vpop.f32.mrb[0].mxu0
        %288 = vdwg.mxu0
        %289 = vmatprep.subr.mxu0 0.0
        %v290 = vand.u32 %v187, 4294901760
        %v291 = vsub.f32 %v187, %v290
        %v292 = vand.u32 %v291, 4294901760
        %v293 = vsub.f32 %v291, %v292
        %v294 = vand.u32 %v293, 4294901760
        %295 = vmatpush1.msra.mxu0 %v294
        %296 = vmatprep.subr.mxu0 0.0
        %v297 = vand.u32 %v188, 4294901760
        %v298 = vsub.f32 %v188, %v297
        %v299 = vand.u32 %v298, 4294901760
        %v300 = vsub.f32 %v298, %v299
        %v301 = vand.u32 %v300, 4294901760
        %302 = vmatpush1.msra.mxu0 %v301
        %303 = vmatprep.subr.mxu0 0.0
        %304 = vmatpush1.msra.mxu0 0.0
        %305 = vmatprep.subr.mxu0 0.0
        %306 = vmatpush1.msra.mxu0 0.0
        %307 = vmatprep.subr.mxu0 0.0
        %308 = vmatpush1.msra.mxu0 0.0
        %309 = vmatprep.subr.mxu0 0.0
        %310 = vmatpush1.msra.mxu0 0.0
        %311 = vmatprep.subr.mxu0 0.0
        %312 = vmatpush1.msra.mxu0 0.0
        %313 = vmatprep.subr.mxu0 0.0
        %314 = vmatpush1.msra.mxu0 0.0
        %315 = vmatprep.subr.mxu0 0.0
        %316 = vmatpush1.msra.mxu0 0.0
        %317 = vmatprep.subr.mxu0 0.0
        %318 = vmatpush1.msra.mxu0 0.0
        %319 = vmatprep.subr.mxu0 0.0
        %320 = vmatpush1.msra.mxu0 0.0
        %321 = vmatprep.subr.mxu0 0.0
        %322 = vmatpush1.msra.mxu0 0.0
        %323 = vmatprep.subr.mxu0 0.0
        %324 = vmatpush1.msra.mxu0 0.0
        %325 = vmatprep.subr.mxu0 0.0
        %326 = vmatpush1.msra.mxu0 0.0
        %327 = vmatprep.subr.mxu0 0.0
        %328 = vmatpush1.msra.mxu0 0.0
        %329 = vmatprep.subr.mxu0 0.0
        %330 = vmatpush1.msra.mxu0 0.0
        %331 = vmatprep.subr.mxu0 0.0
        %332 = vmatpush1.msra.mxu0 0.0
        %333 = vmatprep.subr.mxu0 0.0
        %334 = vmatpush1.msra.mxu0 0.0
        %335 = vmatprep.subr.mxu0 0.0
        %336 = vmatpush1.msra.mxu0 0.0
        %337 = vmatprep.subr.mxu0 0.0
        %338 = vmatpush1.msra.mxu0 0.0
        %339 = vmatprep.subr.mxu0 0.0
        %340 = vmatpush1.msra.mxu0 0.0
        %341 = vmatprep.subr.mxu0 0.0
        %342 = vmatpush1.msra.mxu0 0.0
        %343 = vmatprep.subr.mxu0 0.0
        %344 = vmatpush1.msra.mxu0 0.0
        %345 = vmatprep.subr.mxu0 0.0
        %346 = vmatpush1.msra.mxu0 0.0
        %347 = vmatprep.subr.mxu0 0.0
        %348 = vmatpush1.msra.mxu0 0.0
        %349 = vmatprep.subr.mxu0 0.0
        %350 = vmatpush1.msra.mxu0 0.0
        %351 = vmatprep.subr.mxu0 0.0
        %352 = vmatpush1.msra.mxu0 0.0
        %353 = vmatprep.subr.mxu0 0.0
        %354 = vmatpush1.msra.mxu0 0.0
        %355 = vmatprep.subr.mxu0 0.0
        %356 = vmatpush1.msra.mxu0 0.0
        %357 = vmatprep.subr.mxu0 0.0
        %358 = vmatpush1.msra.mxu0 0.0
        %359 = vmatprep.subr.mxu0 0.0
        %360 = vmatpush1.msra.mxu0 0.0
        %361 = vmatprep.subr.mxu0 0.0
        %362 = vmatpush1.msra.mxu0 0.0
        %363 = vmatprep.mubr.f32.mxu0 0.0
        %v364 = vand.u32 %v198, 4294901760
        %365 = vmatmul.mubr.f32.gmra.mrb[0].mxu0 %v364
        %v366 = vpop.f32.mrb[0].mxu0
        %v367 = vadd.f32 %v276, %v366
        %v368 = vpop.f32.mrb[0].mxu0
        %369 = vmatprep.mubr.f32.mxu0 0.0
        %v370 = vand.u32 %v200, 4294901760
        %371 = vmatmul.mubr.f32.gmra.mrb[0].mxu0 %v370
        %v372 = vpop.f32.mrb[0].mxu0
        %v373 = vadd.f32 %v286, %v372
        %v374 = vpop.f32.mrb[0].mxu0
        %375 = vdwg.mxu0
        %376 = vmatprep.subr.mxu0 0.0
        %v377 = vand.u32 %v187, 4294901760
        %v378 = vsub.f32 %v187, %v377
        %379 = vmatpush1.msra.mxu0 %v378
        %380 = vmatprep.subr.mxu0 0.0
        %v381 = vand.u32 %v188, 4294901760
        %v382 = vsub.f32 %v188, %v381
        %383 = vmatpush1.msra.mxu0 %v382
        %384 = vmatprep.subr.mxu0 0.0
        %385 = vmatpush1.msra.mxu0 0.0
        %386 = vmatprep.subr.mxu0 0.0
        %387 = vmatpush1.msra.mxu0 0.0
        %388 = vmatprep.subr.mxu0 0.0
        %389 = vmatpush1.msra.mxu0 0.0
        %390 = vmatprep.subr.mxu0 0.0
        %391 = vmatpush1.msra.mxu0 0.0
        %392 = vmatprep.subr.mxu0 0.0
        %393 = vmatpush1.msra.mxu0 0.0
        %394 = vmatprep.subr.mxu0 0.0
        %395 = vmatpush1.msra.mxu0 0.0
        %396 = vmatprep.subr.mxu0 0.0
        %397 = vmatpush1.msra.mxu0 0.0
        %398 = vmatprep.subr.mxu0 0.0
        %399 = vmatpush1.msra.mxu0 0.0
        %400 = vmatprep.subr.mxu0 0.0
        %401 = vmatpush1.msra.mxu0 0.0
        %402 = vmatprep.subr.mxu0 0.0
        %403 = vmatpush1.msra.mxu0 0.0
        %404 = vmatprep.subr.mxu0 0.0
        %405 = vmatpush1.msra.mxu0 0.0
        %406 = vmatprep.subr.mxu0 0.0
        %407 = vmatpush1.msra.mxu0 0.0
        %408 = vmatprep.subr.mxu0 0.0
        %409 = vmatpush1.msra.mxu0 0.0
        %410 = vmatprep.subr.mxu0 0.0
        %411 = vmatpush1.msra.mxu0 0.0
        %412 = vmatprep.subr.mxu0 0.0
        %413 = vmatpush1.msra.mxu0 0.0
        %414 = vmatprep.subr.mxu0 0.0
        %415 = vmatpush1.msra.mxu0 0.0
        %416 = vmatprep.subr.mxu0 0.0
        %417 = vmatpush1.msra.mxu0 0.0
        %418 = vmatprep.subr.mxu0 0.0
        %419 = vmatpush1.msra.mxu0 0.0
        %420 = vmatprep.subr.mxu0 0.0
        %421 = vmatpush1.msra.mxu0 0.0
        %422 = vmatprep.subr.mxu0 0.0
        %423 = vmatpush1.msra.mxu0 0.0
        %424 = vmatprep.subr.mxu0 0.0
        %425 = vmatpush1.msra.mxu0 0.0
        %426 = vmatprep.subr.mxu0 0.0
        %427 = vmatpush1.msra.mxu0 0.0
        %428 = vmatprep.subr.mxu0 0.0
        %429 = vmatpush1.msra.mxu0 0.0
        %430 = vmatprep.subr.mxu0 0.0
        %431 = vmatpush1.msra.mxu0 0.0
        %432 = vmatprep.subr.mxu0 0.0
        %433 = vmatpush1.msra.mxu0 0.0
        %434 = vmatprep.subr.mxu0 0.0
        %435 = vmatpush1.msra.mxu0 0.0
        %436 = vmatprep.subr.mxu0 0.0
        %437 = vmatpush1.msra.mxu0 0.0
        %438 = vmatprep.subr.mxu0 0.0
        %439 = vmatpush1.msra.mxu0 0.0
        %440 = vmatprep.subr.mxu0 0.0
        %441 = vmatpush1.msra.mxu0 0.0
        %442 = vmatprep.subr.mxu0 0.0
        %443 = vmatpush1.msra.mxu0 0.0
        %444 = vmatprep.mubr.f32.mxu0 0.0
        %v445 = vand.u32 %v198, 4294901760
        %v446 = vsub.f32 %v198, %v445
        %447 = vmatmul.mubr.f32.gmra.mrb[0].mxu0 %v446
        %v448 = vpop.f32.mrb[0].mxu0
        %v449 = vadd.f32 %v367, %v448
        %v450 = vpop.f32.mrb[0].mxu0
        %451 = vmatprep.mubr.f32.mxu0 0.0
        %v452 = vand.u32 %v200, 4294901760
        %v453 = vsub.f32 %v200, %v452
        %454 = vmatmul.mubr.f32.gmra.mrb[0].mxu0 %v453
        %v455 = vpop.f32.mrb[0].mxu0
        %v456 = vadd.f32 %v373, %v455
        %v457 = vpop.f32.mrb[0].mxu0
        %458 = vdwg.mxu0
        %459 = vmatprep.subr.mxu0 0.0
        %v460 = vand.u32 %v187, 4294901760
        %461 = vmatpush1.msra.mxu0 %v460
        %462 = vmatprep.subr.mxu0 0.0
        %v463 = vand.u32 %v188, 4294901760
        %464 = vmatpush1.msra.mxu0 %v463
        %465 = vmatprep.subr.mxu0 0.0
        %466 = vmatpush1.msra.mxu0 0.0
        %467 = vmatprep.subr.mxu0 0.0
        %468 = vmatpush1.msra.mxu0 0.0
        %469 = vmatprep.subr.mxu0 0.0
        %470 = vmatpush1.msra.mxu0 0.0
        %471 = vmatprep.subr.mxu0 0.0
        %472 = vmatpush1.msra.mxu0 0.0
        %473 = vmatprep.subr.mxu0 0.0
        %474 = vmatpush1.msra.mxu0 0.0
        %475 = vmatprep.subr.mxu0 0.0
        %476 = vmatpush1.msra.mxu0 0.0
        %477 = vmatprep.subr.mxu0 0.0
        %478 = vmatpush1.msra.mxu0 0.0
        %479 = vmatprep.subr.mxu0 0.0
        %480 = vmatpush1.msra.mxu0 0.0
        %481 = vmatprep.subr.mxu0 0.0
        %482 = vmatpush1.msra.mxu0 0.0
        %483 = vmatprep.subr.mxu0 0.0
        %484 = vmatpush1.msra.mxu0 0.0
        %485 = vmatprep.subr.mxu0 0.0
        %486 = vmatpush1.msra.mxu0 0.0
        %487 = vmatprep.subr.mxu0 0.0
        %488 = vmatpush1.msra.mxu0 0.0
        %489 = vmatprep.subr.mxu0 0.0
        %490 = vmatpush1.msra.mxu0 0.0
        %491 = vmatprep.subr.mxu0 0.0
        %492 = vmatpush1.msra.mxu0 0.0
        %493 = vmatprep.subr.mxu0 0.0
        %494 = vmatpush1.msra.mxu0 0.0
        %495 = vmatprep.subr.mxu0 0.0
        %496 = vmatpush1.msra.mxu0 0.0
        %497 = vmatprep.subr.mxu0 0.0
        %498 = vmatpush1.msra.mxu0 0.0
        %499 = vmatprep.subr.mxu0 0.0
        %500 = vmatpush1.msra.mxu0 0.0
        %501 = vmatprep.subr.mxu0 0.0
        %502 = vmatpush1.msra.mxu0 0.0
        %503 = vmatprep.subr.mxu0 0.0
        %504 = vmatpush1.msra.mxu0 0.0
        %505 = vmatprep.subr.mxu0 0.0
        %506 = vmatpush1.msra.mxu0 0.0
        %507 = vmatprep.subr.mxu0 0.0
        %508 = vmatpush1.msra.mxu0 0.0
        %509 = vmatprep.subr.mxu0 0.0
        %510 = vmatpush1.msra.mxu0 0.0
        %511 = vmatprep.subr.mxu0 0.0
        %512 = vmatpush1.msra.mxu0 0.0
        %513 = vmatprep.subr.mxu0 0.0
        %514 = vmatpush1.msra.mxu0 0.0
        %515 = vmatprep.subr.mxu0 0.0
        %516 = vmatpush1.msra.mxu0 0.0
        %517 = vmatprep.subr.mxu0 0.0
        %518 = vmatpush1.msra.mxu0 0.0
        %519 = vmatprep.subr.mxu0 0.0
        %520 = vmatpush1.msra.mxu0 0.0
        %521 = vmatprep.subr.mxu0 0.0
        %522 = vmatpush1.msra.mxu0 0.0
        %523 = vmatprep.subr.mxu0 0.0
        %524 = vmatpush1.msra.mxu0 0.0
        %525 = vmatprep.mubr.f32.mxu0 0.0
        %v526 = vand.u32 %v198, 4294901760
        %v527 = vsub.f32 %v198, %v526
        %v528 = vand.u32 %v527, 4294901760
        %529 = vmatmul.mubr.f32.gmra.mrb[0].mxu0 %v528
        %v530 = vpop.f32.mrb[0].mxu0
        %v531 = vadd.f32 %v449, %v530
        %v532 = vpop.f32.mrb[0].mxu0
        %533 = vmatprep.mubr.f32.mxu0 0.0
        %v534 = vand.u32 %v200, 4294901760
        %v535 = vsub.f32 %v200, %v534
        %v536 = vand.u32 %v535, 4294901760
        %537 = vmatmul.mubr.f32.gmra.mrb[0].mxu0 %v536
        %v538 = vpop.f32.mrb[0].mxu0
        %v539 = vadd.f32 %v456, %v538
        %v540 = vpop.f32.mrb[0].mxu0
        %541 = vdwg.mxu0
        %542 = vmatprep.subr.mxu0 0.0
        %v543 = vand.u32 %v187, 4294901760
        %v544 = vsub.f32 %v187, %v543
        %v545 = vand.u32 %v544, 4294901760
        %546 = vmatpush1.msra.mxu0 %v545
        %547 = vmatprep.subr.mxu0 0.0
        %v548 = vand.u32 %v188, 4294901760
        %v549 = vsub.f32 %v188, %v548
        %v550 = vand.u32 %v549, 4294901760
        %551 = vmatpush1.msra.mxu0 %v550
        %552 = vmatprep.subr.mxu0 0.0
        %553 = vmatpush1.msra.mxu0 0.0
        %554 = vmatprep.subr.mxu0 0.0
        %555 = vmatpush1.msra.mxu0 0.0
        %556 = vmatprep.subr.mxu0 0.0
        %557 = vmatpush1.msra.mxu0 0.0
        %558 = vmatprep.subr.mxu0 0.0
        %559 = vmatpush1.msra.mxu0 0.0
        %560 = vmatprep.subr.mxu0 0.0
        %561 = vmatpush1.msra.mxu0 0.0
        %562 = vmatprep.subr.mxu0 0.0
        %563 = vmatpush1.msra.mxu0 0.0
        %564 = vmatprep.subr.mxu0 0.0
        %565 = vmatpush1.msra.mxu0 0.0
        %566 = vmatprep.subr.mxu0 0.0
        %567 = vmatpush1.msra.mxu0 0.0
        %568 = vmatprep.subr.mxu0 0.0
        %569 = vmatpush1.msra.mxu0 0.0
        %570 = vmatprep.subr.mxu0 0.0
        %571 = vmatpush1.msra.mxu0 0.0
        %572 = vmatprep.subr.mxu0 0.0
        %573 = vmatpush1.msra.mxu0 0.0
        %574 = vmatprep.subr.mxu0 0.0
        %575 = vmatpush1.msra.mxu0 0.0
        %576 = vmatprep.subr.mxu0 0.0
        %577 = vmatpush1.msra.mxu0 0.0
        %578 = vmatprep.subr.mxu0 0.0
        %579 = vmatpush1.msra.mxu0 0.0
        %580 = vmatprep.subr.mxu0 0.0
        %581 = vmatpush1.msra.mxu0 0.0
        %582 = vmatprep.subr.mxu0 0.0
        %583 = vmatpush1.msra.mxu0 0.0
        %584 = vmatprep.subr.mxu0 0.0
        %585 = vmatpush1.msra.mxu0 0.0
        %586 = vmatprep.subr.mxu0 0.0
        %587 = vmatpush1.msra.mxu0 0.0
        %588 = vmatprep.subr.mxu0 0.0
        %589 = vmatpush1.msra.mxu0 0.0
        %590 = vmatprep.subr.mxu0 0.0
        %591 = vmatpush1.msra.mxu0 0.0
        %592 = vmatprep.subr.mxu0 0.0
        %593 = vmatpush1.msra.mxu0 0.0
        %594 = vmatprep.subr.mxu0 0.0
        %595 = vmatpush1.msra.mxu0 0.0
        %596 = vmatprep.subr.mxu0 0.0
        %597 = vmatpush1.msra.mxu0 0.0
        %598 = vmatprep.subr.mxu0 0.0
        %599 = vmatpush1.msra.mxu0 0.0
        %600 = vmatprep.subr.mxu0 0.0
        %601 = vmatpush1.msra.mxu0 0.0
        %602 = vmatprep.subr.mxu0 0.0
        %603 = vmatpush1.msra.mxu0 0.0
        %604 = vmatprep.subr.mxu0 0.0
        %605 = vmatpush1.msra.mxu0 0.0
        %606 = vmatprep.subr.mxu0 0.0
        %607 = vmatpush1.msra.mxu0 0.0
        %608 = vmatprep.subr.mxu0 0.0
        %609 = vmatpush1.msra.mxu0 0.0
        %610 = vmatprep.subr.mxu0 0.0
        %611 = vmatpush1.msra.mxu0 0.0
        %612 = vmatprep.mubr.f32.mxu0 0.0
        %v613 = vand.u32 %v198, 4294901760
        %614 = vmatmul.mubr.f32.gmra.mrb[0].mxu0 %v613
        %v615 = vpop.f32.mrb[0].mxu0
        %v616 = vadd.f32 %v531, %v615
        %v617 = vpop.f32.mrb[0].mxu0
        %618 = vmatprep.mubr.f32.mxu0 0.0
        %v619 = vand.u32 %v200, 4294901760
        %620 = vmatmul.mubr.f32.gmra.mrb[0].mxu0 %v619
        %v621 = vpop.f32.mrb[0].mxu0
        %v622 = vadd.f32 %v539, %v621
        %v623 = vpop.f32.mrb[0].mxu0
        %624 = vdwg.mxu0
        %625 = vmatprep.subr.mxu0 0.0
        %v626 = vand.u32 %v187, 4294901760
        %627 = vmatpush1.msra.mxu0 %v626
        %628 = vmatprep.subr.mxu0 0.0
        %v629 = vand.u32 %v188, 4294901760
        %630 = vmatpush1.msra.mxu0 %v629
        %631 = vmatprep.subr.mxu0 0.0
        %632 = vmatpush1.msra.mxu0 0.0
        %633 = vmatprep.subr.mxu0 0.0
        %634 = vmatpush1.msra.mxu0 0.0
        %635 = vmatprep.subr.mxu0 0.0
        %636 = vmatpush1.msra.mxu0 0.0
        %637 = vmatprep.subr.mxu0 0.0
        %638 = vmatpush1.msra.mxu0 0.0
        %639 = vmatprep.subr.mxu0 0.0
        %640 = vmatpush1.msra.mxu0 0.0
        %641 = vmatprep.subr.mxu0 0.0
        %642 = vmatpush1.msra.mxu0 0.0
        %643 = vmatprep.subr.mxu0 0.0
        %644 = vmatpush1.msra.mxu0 0.0
        %645 = vmatprep.subr.mxu0 0.0
        %646 = vmatpush1.msra.mxu0 0.0
        %647 = vmatprep.subr.mxu0 0.0
        %648 = vmatpush1.msra.mxu0 0.0
        %649 = vmatprep.subr.mxu0 0.0
        %650 = vmatpush1.msra.mxu0 0.0
        %651 = vmatprep.subr.mxu0 0.0
        %652 = vmatpush1.msra.mxu0 0.0
        %653 = vmatprep.subr.mxu0 0.0
        %654 = vmatpush1.msra.mxu0 0.0
        %655 = vmatprep.subr.mxu0 0.0
        %656 = vmatpush1.msra.mxu0 0.0
        %657 = vmatprep.subr.mxu0 0.0
        %658 = vmatpush1.msra.mxu0 0.0
        %659 = vmatprep.subr.mxu0 0.0
        %660 = vmatpush1.msra.mxu0 0.0
        %661 = vmatprep.subr.mxu0 0.0
        %662 = vmatpush1.msra.mxu0 0.0
        %663 = vmatprep.subr.mxu0 0.0
        %664 = vmatpush1.msra.mxu0 0.0
        %665 = vmatprep.subr.mxu0 0.0
        %666 = vmatpush1.msra.mxu0 0.0
        %667 = vmatprep.subr.mxu0 0.0
        %668 = vmatpush1.msra.mxu0 0.0
        %669 = vmatprep.subr.mxu0 0.0
        %670 = vmatpush1.msra.mxu0 0.0
        %671 = vmatprep.subr.mxu0 0.0
        %672 = vmatpush1.msra.mxu0 0.0
        %673 = vmatprep.subr.mxu0 0.0
        %674 = vmatpush1.msra.mxu0 0.0
        %675 = vmatprep.subr.mxu0 0.0
        %676 = vmatpush1.msra.mxu0 0.0
        %677 = vmatprep.subr.mxu0 0.0
        %678 = vmatpush1.msra.mxu0 0.0
        %679 = vmatprep.subr.mxu0 0.0
        %680 = vmatpush1.msra.mxu0 0.0
        %681 = vmatprep.subr.mxu0 0.0
        %682 = vmatpush1.msra.mxu0 0.0
        %683 = vmatprep.subr.mxu0 0.0
        %684 = vmatpush1.msra.mxu0 0.0
        %685 = vmatprep.subr.mxu0 0.0
        %686 = vmatpush1.msra.mxu0 0.0
        %687 = vmatprep.subr.mxu0 0.0
        %688 = vmatpush1.msra.mxu0 0.0
        %689 = vmatprep.subr.mxu0 0.0
        %690 = vmatpush1.msra.mxu0 0.0
        %691 = vmatprep.mubr.f32.mxu0 0.0
        %v692 = vand.u32 %v198, 4294901760
        %693 = vmatmul.mubr.f32.gmra.mrb[0].mxu0 %v692
        %v694 = vpop.f32.mrb[0].mxu0
        %v695 = vadd.f32 %v616, %v694
        %v696 = vpop.f32.mrb[0].mxu0
        %697 = vmatprep.mubr.f32.mxu0 0.0
        %v698 = vand.u32 %v200, 4294901760
        %699 = vmatmul.mubr.f32.gmra.mrb[0].mxu0 %v698
        %v700 = vpop.f32.mrb[0].mxu0
        %v701 = vadd.f32 %v622, %v700
        %v702 = vpop.f32.mrb[0].mxu0
        %703 = vdwg.mxu0
        %v704 = vsel %vm197, %v189, 0
        %v706 = vsel %vm197, %v190, 0
        %708 = vmatprep.subr.mxu0 0.0
        %v709 = vand.u32 %v184, 4294901760
        %710 = vmatpush1.msra.mxu0 %v709
        %711 = vmatprep.subr.mxu0 0.0
        %v712 = vand.u32 %v185, 4294901760
        %713 = vmatpush1.msra.mxu0 %v712
        %714 = vmatprep.subr.mxu0 0.0
        %715 = vmatpush1.msra.mxu0 0.0
        %716 = vmatprep.subr.mxu0 0.0
        %717 = vmatpush1.msra.mxu0 0.0
        %718 = vmatprep.subr.mxu0 0.0
        %719 = vmatpush1.msra.mxu0 0.0
        %720 = vmatprep.subr.mxu0 0.0
        %721 = vmatpush1.msra.mxu0 0.0
        %722 = vmatprep.subr.mxu0 0.0
        %723 = vmatpush1.msra.mxu0 0.0
        %724 = vmatprep.subr.mxu0 0.0
        %725 = vmatpush1.msra.mxu0 0.0
        %726 = vmatprep.subr.mxu0 0.0
        %727 = vmatpush1.msra.mxu0 0.0
        %728 = vmatprep.subr.mxu0 0.0
        %729 = vmatpush1.msra.mxu0 0.0
        %730 = vmatprep.subr.mxu0 0.0
        %731 = vmatpush1.msra.mxu0 0.0
        %732 = vmatprep.subr.mxu0 0.0
        %733 = vmatpush1.msra.mxu0 0.0
        %734 = vmatprep.subr.mxu0 0.0
        %735 = vmatpush1.msra.mxu0 0.0
        %736 = vmatprep.subr.mxu0 0.0
        %737 = vmatpush1.msra.mxu0 0.0
        %738 = vmatprep.subr.mxu0 0.0
        %739 = vmatpush1.msra.mxu0 0.0
        %740 = vmatprep.subr.mxu0 0.0
        %741 = vmatpush1.msra.mxu0 0.0
        %742 = vmatprep.subr.mxu0 0.0
        %743 = vmatpush1.msra.mxu0 0.0
        %744 = vmatprep.subr.mxu0 0.0
        %745 = vmatpush1.msra.mxu0 0.0
        %746 = vmatprep.subr.mxu0 0.0
        %747 = vmatpush1.msra.mxu0 0.0
        %748 = vmatprep.subr.mxu0 0.0
        %749 = vmatpush1.msra.mxu0 0.0
        %750 = vmatprep.subr.mxu0 0.0
        %751 = vmatpush1.msra.mxu0 0.0
        %752 = vmatprep.subr.mxu0 0.0
        %753 = vmatpush1.msra.mxu0 0.0
        %754 = vmatprep.subr.mxu0 0.0
        %755 = vmatpush1.msra.mxu0 0.0
        %756 = vmatprep.subr.mxu0 0.0
        %757 = vmatpush1.msra.mxu0 0.0
        %758 = vmatprep.subr.mxu0 0.0
        %759 = vmatpush1.msra.mxu0 0.0
        %760 = vmatprep.subr.mxu0 0.0
        %761 = vmatpush1.msra.mxu0 0.0
        %762 = vmatprep.subr.mxu0 0.0
        %763 = vmatpush1.msra.mxu0 0.0
        %764 = vmatprep.subr.mxu0 0.0
        %765 = vmatpush1.msra.mxu0 0.0
        %766 = vmatprep.subr.mxu0 0.0
        %767 = vmatpush1.msra.mxu0 0.0
        %768 = vmatprep.subr.mxu0 0.0
        %769 = vmatpush1.msra.mxu0 0.0
        %770 = vmatprep.subr.mxu0 0.0
        %771 = vmatpush1.msra.mxu0 0.0
        %772 = vmatprep.subr.mxu0 0.0
        %773 = vmatpush1.msra.mxu0 0.0
        %774 = vmatprep.mubr.f32.mxu0 0.0
        %v775 = vand.u32 %v704, 4294901760
        %v776 = vsub.f32 %v704, %v775
        %v777 = vand.u32 %v776, 4294901760
        %v778 = vsub.f32 %v776, %v777
        %v779 = vand.u32 %v778, 4294901760
        %780 = vmatmul.mubr.f32.gmra.mrb[0].mxu0 %v779
        %v781 = vpop.f32.mrb[0].mxu0
        %v782 = vadd.f32 %v695, %v781
        %v783 = vpop.f32.mrb[0].mxu0
        %784 = vmatprep.mubr.f32.mxu0 0.0
        %v785 = vand.u32 %v706, 4294901760
        %v786 = vsub.f32 %v706, %v785
        %v787 = vand.u32 %v786, 4294901760
        %v788 = vsub.f32 %v786, %v787
        %v789 = vand.u32 %v788, 4294901760
        %790 = vmatmul.mubr.f32.gmra.mrb[0].mxu0 %v789
        %v791 = vpop.f32.mrb[0].mxu0
        %v792 = vadd.f32 %v701, %v791
        %v793 = vpop.f32.mrb[0].mxu0
        %794 = vdwg.mxu0
        %795 = vmatprep.subr.mxu0 0.0
        %v796 = vand.u32 %v184, 4294901760
        %v797 = vsub.f32 %v184, %v796
        %v798 = vand.u32 %v797, 4294901760
        %v799 = vsub.f32 %v797, %v798
        %v800 = vand.u32 %v799, 4294901760
        %801 = vmatpush1.msra.mxu0 %v800
        %802 = vmatprep.subr.mxu0 0.0
        %v803 = vand.u32 %v185, 4294901760
        %v804 = vsub.f32 %v185, %v803
        %v805 = vand.u32 %v804, 4294901760
        %v806 = vsub.f32 %v804, %v805
        %v807 = vand.u32 %v806, 4294901760
        %808 = vmatpush1.msra.mxu0 %v807
        %809 = vmatprep.subr.mxu0 0.0
        %810 = vmatpush1.msra.mxu0 0.0
        %811 = vmatprep.subr.mxu0 0.0
        %812 = vmatpush1.msra.mxu0 0.0
        %813 = vmatprep.subr.mxu0 0.0
        %814 = vmatpush1.msra.mxu0 0.0
        %815 = vmatprep.subr.mxu0 0.0
        %816 = vmatpush1.msra.mxu0 0.0
        %817 = vmatprep.subr.mxu0 0.0
        %818 = vmatpush1.msra.mxu0 0.0
        %819 = vmatprep.subr.mxu0 0.0
        %820 = vmatpush1.msra.mxu0 0.0
        %821 = vmatprep.subr.mxu0 0.0
        %822 = vmatpush1.msra.mxu0 0.0
        %823 = vmatprep.subr.mxu0 0.0
        %824 = vmatpush1.msra.mxu0 0.0
        %825 = vmatprep.subr.mxu0 0.0
        %826 = vmatpush1.msra.mxu0 0.0
        %827 = vmatprep.subr.mxu0 0.0
        %828 = vmatpush1.msra.mxu0 0.0
        %829 = vmatprep.subr.mxu0 0.0
        %830 = vmatpush1.msra.mxu0 0.0
        %831 = vmatprep.subr.mxu0 0.0
        %832 = vmatpush1.msra.mxu0 0.0
        %833 = vmatprep.subr.mxu0 0.0
        %834 = vmatpush1.msra.mxu0 0.0
        %835 = vmatprep.subr.mxu0 0.0
        %836 = vmatpush1.msra.mxu0 0.0
        %837 = vmatprep.subr.mxu0 0.0
        %838 = vmatpush1.msra.mxu0 0.0
        %839 = vmatprep.subr.mxu0 0.0
        %840 = vmatpush1.msra.mxu0 0.0
        %841 = vmatprep.subr.mxu0 0.0
        %842 = vmatpush1.msra.mxu0 0.0
        %843 = vmatprep.subr.mxu0 0.0
        %844 = vmatpush1.msra.mxu0 0.0
        %845 = vmatprep.subr.mxu0 0.0
        %846 = vmatpush1.msra.mxu0 0.0
        %847 = vmatprep.subr.mxu0 0.0
        %848 = vmatpush1.msra.mxu0 0.0
        %849 = vmatprep.subr.mxu0 0.0
        %850 = vmatpush1.msra.mxu0 0.0
        %851 = vmatprep.subr.mxu0 0.0
        %852 = vmatpush1.msra.mxu0 0.0
        %853 = vmatprep.subr.mxu0 0.0
        %854 = vmatpush1.msra.mxu0 0.0
        %855 = vmatprep.subr.mxu0 0.0
        %856 = vmatpush1.msra.mxu0 0.0
        %857 = vmatprep.subr.mxu0 0.0
        %858 = vmatpush1.msra.mxu0 0.0
        %859 = vmatprep.subr.mxu0 0.0
        %860 = vmatpush1.msra.mxu0 0.0
        %861 = vmatprep.subr.mxu0 0.0
        %862 = vmatpush1.msra.mxu0 0.0
        %863 = vmatprep.subr.mxu0 0.0
        %864 = vmatpush1.msra.mxu0 0.0
        %865 = vmatprep.subr.mxu0 0.0
        %866 = vmatpush1.msra.mxu0 0.0
        %867 = vmatprep.subr.mxu0 0.0
        %868 = vmatpush1.msra.mxu0 0.0
        %869 = vmatprep.mubr.f32.mxu0 0.0
        %v870 = vand.u32 %v704, 4294901760
        %871 = vmatmul.mubr.f32.gmra.mrb[0].mxu0 %v870
        %v872 = vpop.f32.mrb[0].mxu0
        %v873 = vadd.f32 %v782, %v872
        %v874 = vpop.f32.mrb[0].mxu0
        %875 = vmatprep.mubr.f32.mxu0 0.0
        %v876 = vand.u32 %v706, 4294901760
        %877 = vmatmul.mubr.f32.gmra.mrb[0].mxu0 %v876
        %v878 = vpop.f32.mrb[0].mxu0
        %v879 = vadd.f32 %v792, %v878
        %v880 = vpop.f32.mrb[0].mxu0
        %881 = vdwg.mxu0
        %882 = vmatprep.subr.mxu0 0.0
        %v883 = vand.u32 %v184, 4294901760
        %v884 = vsub.f32 %v184, %v883
        %885 = vmatpush1.msra.mxu0 %v884
        %886 = vmatprep.subr.mxu0 0.0
        %v887 = vand.u32 %v185, 4294901760
        %v888 = vsub.f32 %v185, %v887
        %889 = vmatpush1.msra.mxu0 %v888
        %890 = vmatprep.subr.mxu0 0.0
        %891 = vmatpush1.msra.mxu0 0.0
        %892 = vmatprep.subr.mxu0 0.0
        %893 = vmatpush1.msra.mxu0 0.0
        %894 = vmatprep.subr.mxu0 0.0
        %895 = vmatpush1.msra.mxu0 0.0
        %896 = vmatprep.subr.mxu0 0.0
        %897 = vmatpush1.msra.mxu0 0.0
        %898 = vmatprep.subr.mxu0 0.0
        %899 = vmatpush1.msra.mxu0 0.0
        %900 = vmatprep.subr.mxu0 0.0
        %901 = vmatpush1.msra.mxu0 0.0
        %902 = vmatprep.subr.mxu0 0.0
        %903 = vmatpush1.msra.mxu0 0.0
        %904 = vmatprep.subr.mxu0 0.0
        %905 = vmatpush1.msra.mxu0 0.0
        %906 = vmatprep.subr.mxu0 0.0
        %907 = vmatpush1.msra.mxu0 0.0
        %908 = vmatprep.subr.mxu0 0.0
        %909 = vmatpush1.msra.mxu0 0.0
        %910 = vmatprep.subr.mxu0 0.0
        %911 = vmatpush1.msra.mxu0 0.0
        %912 = vmatprep.subr.mxu0 0.0
        %913 = vmatpush1.msra.mxu0 0.0
        %914 = vmatprep.subr.mxu0 0.0
        %915 = vmatpush1.msra.mxu0 0.0
        %916 = vmatprep.subr.mxu0 0.0
        %917 = vmatpush1.msra.mxu0 0.0
        %918 = vmatprep.subr.mxu0 0.0
        %919 = vmatpush1.msra.mxu0 0.0
        %920 = vmatprep.subr.mxu0 0.0
        %921 = vmatpush1.msra.mxu0 0.0
        %922 = vmatprep.subr.mxu0 0.0
        %923 = vmatpush1.msra.mxu0 0.0
        %924 = vmatprep.subr.mxu0 0.0
        %925 = vmatpush1.msra.mxu0 0.0
        %926 = vmatprep.subr.mxu0 0.0
        %927 = vmatpush1.msra.mxu0 0.0
        %928 = vmatprep.subr.mxu0 0.0
        %929 = vmatpush1.msra.mxu0 0.0
        %930 = vmatprep.subr.mxu0 0.0
        %931 = vmatpush1.msra.mxu0 0.0
        %932 = vmatprep.subr.mxu0 0.0
        %933 = vmatpush1.msra.mxu0 0.0
        %934 = vmatprep.subr.mxu0 0.0
        %935 = vmatpush1.msra.mxu0 0.0
        %936 = vmatprep.subr.mxu0 0.0
        %937 = vmatpush1.msra.mxu0 0.0
        %938 = vmatprep.subr.mxu0 0.0
        %939 = vmatpush1.msra.mxu0 0.0
        %940 = vmatprep.subr.mxu0 0.0
        %941 = vmatpush1.msra.mxu0 0.0
        %942 = vmatprep.subr.mxu0 0.0
        %943 = vmatpush1.msra.mxu0 0.0
        %944 = vmatprep.subr.mxu0 0.0
        %945 = vmatpush1.msra.mxu0 0.0
        %946 = vmatprep.subr.mxu0 0.0
        %947 = vmatpush1.msra.mxu0 0.0
        %948 = vmatprep.subr.mxu0 0.0
        %949 = vmatpush1.msra.mxu0 0.0
        %950 = vmatprep.mubr.f32.mxu0 0.0
        %v951 = vand.u32 %v704, 4294901760
        %v952 = vsub.f32 %v704, %v951
        %953 = vmatmul.mubr.f32.gmra.mrb[0].mxu0 %v952
        %v954 = vpop.f32.mrb[0].mxu0
        %v955 = vadd.f32 %v873, %v954
        %v956 = vpop.f32.mrb[0].mxu0
        %957 = vmatprep.mubr.f32.mxu0 0.0
        %v958 = vand.u32 %v706, 4294901760
        %v959 = vsub.f32 %v706, %v958
        %960 = vmatmul.mubr.f32.gmra.mrb[0].mxu0 %v959
        %v961 = vpop.f32.mrb[0].mxu0
        %v962 = vadd.f32 %v879, %v961
        %v963 = vpop.f32.mrb[0].mxu0
        %964 = vdwg.mxu0
        %965 = vmatprep.subr.mxu0 0.0
        %v966 = vand.u32 %v184, 4294901760
        %967 = vmatpush1.msra.mxu0 %v966
        %968 = vmatprep.subr.mxu0 0.0
        %v969 = vand.u32 %v185, 4294901760
        %970 = vmatpush1.msra.mxu0 %v969
        %971 = vmatprep.subr.mxu0 0.0
        %972 = vmatpush1.msra.mxu0 0.0
        %973 = vmatprep.subr.mxu0 0.0
        %974 = vmatpush1.msra.mxu0 0.0
        %975 = vmatprep.subr.mxu0 0.0
        %976 = vmatpush1.msra.mxu0 0.0
        %977 = vmatprep.subr.mxu0 0.0
        %978 = vmatpush1.msra.mxu0 0.0
        %979 = vmatprep.subr.mxu0 0.0
        %980 = vmatpush1.msra.mxu0 0.0
        %981 = vmatprep.subr.mxu0 0.0
        %982 = vmatpush1.msra.mxu0 0.0
        %983 = vmatprep.subr.mxu0 0.0
        %984 = vmatpush1.msra.mxu0 0.0
        %985 = vmatprep.subr.mxu0 0.0
        %986 = vmatpush1.msra.mxu0 0.0
        %987 = vmatprep.subr.mxu0 0.0
        %988 = vmatpush1.msra.mxu0 0.0
        %989 = vmatprep.subr.mxu0 0.0
        %990 = vmatpush1.msra.mxu0 0.0
        %991 = vmatprep.subr.mxu0 0.0
        %992 = vmatpush1.msra.mxu0 0.0
        %993 = vmatprep.subr.mxu0 0.0
        %994 = vmatpush1.msra.mxu0 0.0
        %995 = vmatprep.subr.mxu0 0.0
        %996 = vmatpush1.msra.mxu0 0.0
        %997 = vmatprep.subr.mxu0 0.0
        %998 = vmatpush1.msra.mxu0 0.0
        %999 = vmatprep.subr.mxu0 0.0
        %1000 = vmatpush1.msra.mxu0 0.0
        %1001 = vmatprep.subr.mxu0 0.0
        %1002 = vmatpush1.msra.mxu0 0.0
        %1003 = vmatprep.subr.mxu0 0.0
        %1004 = vmatpush1.msra.mxu0 0.0
        %1005 = vmatprep.subr.mxu0 0.0
        %1006 = vmatpush1.msra.mxu0 0.0
        %1007 = vmatprep.subr.mxu0 0.0
        %1008 = vmatpush1.msra.mxu0 0.0
        %1009 = vmatprep.subr.mxu0 0.0
        %1010 = vmatpush1.msra.mxu0 0.0
        %1011 = vmatprep.subr.mxu0 0.0
        %1012 = vmatpush1.msra.mxu0 0.0
        %1013 = vmatprep.subr.mxu0 0.0
        %1014 = vmatpush1.msra.mxu0 0.0
        %1015 = vmatprep.subr.mxu0 0.0
        %1016 = vmatpush1.msra.mxu0 0.0
        %1017 = vmatprep.subr.mxu0 0.0
        %1018 = vmatpush1.msra.mxu0 0.0
        %1019 = vmatprep.subr.mxu0 0.0
        %1020 = vmatpush1.msra.mxu0 0.0
        %1021 = vmatprep.subr.mxu0 0.0
        %1022 = vmatpush1.msra.mxu0 0.0
        %1023 = vmatprep.subr.mxu0 0.0
        %1024 = vmatpush1.msra.mxu0 0.0
        %1025 = vmatprep.subr.mxu0 0.0
        %1026 = vmatpush1.msra.mxu0 0.0
        %1027 = vmatprep.subr.mxu0 0.0
        %1028 = vmatpush1.msra.mxu0 0.0
        %1029 = vmatprep.subr.mxu0 0.0
        %1030 = vmatpush1.msra.mxu0 0.0
        %1031 = vmatprep.mubr.f32.mxu0 0.0
        %v1032 = vand.u32 %v704, 4294901760
        %v1033 = vsub.f32 %v704, %v1032
        %v1034 = vand.u32 %v1033, 4294901760
        %1035 = vmatmul.mubr.f32.gmra.mrb[0].mxu0 %v1034
        %v1036 = vpop.f32.mrb[0].mxu0
        %v1037 = vadd.f32 %v955, %v1036
        %v1038 = vpop.f32.mrb[0].mxu0
        %1039 = vmatprep.mubr.f32.mxu0 0.0
        %v1040 = vand.u32 %v706, 4294901760
        %v1041 = vsub.f32 %v706, %v1040
        %v1042 = vand.u32 %v1041, 4294901760
        %1043 = vmatmul.mubr.f32.gmra.mrb[0].mxu0 %v1042
        %v1044 = vpop.f32.mrb[0].mxu0
        %v1045 = vadd.f32 %v962, %v1044
        %v1046 = vpop.f32.mrb[0].mxu0
        %1047 = vdwg.mxu0
        %1048 = vmatprep.subr.mxu0 0.0
        %v1049 = vand.u32 %v184, 4294901760
        %v1050 = vsub.f32 %v184, %v1049
        %v1051 = vand.u32 %v1050, 4294901760
        %1052 = vmatpush1.msra.mxu0 %v1051
        %1053 = vmatprep.subr.mxu0 0.0
        %v1054 = vand.u32 %v185, 4294901760
        %v1055 = vsub.f32 %v185, %v1054
        %v1056 = vand.u32 %v1055, 4294901760
        %1057 = vmatpush1.msra.mxu0 %v1056
        %1058 = vmatprep.subr.mxu0 0.0
        %1059 = vmatpush1.msra.mxu0 0.0
        %1060 = vmatprep.subr.mxu0 0.0
        %1061 = vmatpush1.msra.mxu0 0.0
        %1062 = vmatprep.subr.mxu0 0.0
        %1063 = vmatpush1.msra.mxu0 0.0
        %1064 = vmatprep.subr.mxu0 0.0
        %1065 = vmatpush1.msra.mxu0 0.0
        %1066 = vmatprep.subr.mxu0 0.0
        %1067 = vmatpush1.msra.mxu0 0.0
        %1068 = vmatprep.subr.mxu0 0.0
        %1069 = vmatpush1.msra.mxu0 0.0
        %1070 = vmatprep.subr.mxu0 0.0
        %1071 = vmatpush1.msra.mxu0 0.0
        %1072 = vmatprep.subr.mxu0 0.0
        %1073 = vmatpush1.msra.mxu0 0.0
        %1074 = vmatprep.subr.mxu0 0.0
        %1075 = vmatpush1.msra.mxu0 0.0
        %1076 = vmatprep.subr.mxu0 0.0
        %1077 = vmatpush1.msra.mxu0 0.0
        %1078 = vmatprep.subr.mxu0 0.0
        %1079 = vmatpush1.msra.mxu0 0.0
        %1080 = vmatprep.subr.mxu0 0.0
        %1081 = vmatpush1.msra.mxu0 0.0
        %1082 = vmatprep.subr.mxu0 0.0
        %1083 = vmatpush1.msra.mxu0 0.0
        %1084 = vmatprep.subr.mxu0 0.0
        %1085 = vmatpush1.msra.mxu0 0.0
        %1086 = vmatprep.subr.mxu0 0.0
        %1087 = vmatpush1.msra.mxu0 0.0
        %1088 = vmatprep.subr.mxu0 0.0
        %1089 = vmatpush1.msra.mxu0 0.0
        %1090 = vmatprep.subr.mxu0 0.0
        %1091 = vmatpush1.msra.mxu0 0.0
        %1092 = vmatprep.subr.mxu0 0.0
        %1093 = vmatpush1.msra.mxu0 0.0
        %1094 = vmatprep.subr.mxu0 0.0
        %1095 = vmatpush1.msra.mxu0 0.0
        %1096 = vmatprep.subr.mxu0 0.0
        %1097 = vmatpush1.msra.mxu0 0.0
        %1098 = vmatprep.subr.mxu0 0.0
        %1099 = vmatpush1.msra.mxu0 0.0
        %1100 = vmatprep.subr.mxu0 0.0
        %1101 = vmatpush1.msra.mxu0 0.0
        %1102 = vmatprep.subr.mxu0 0.0
        %1103 = vmatpush1.msra.mxu0 0.0
        %1104 = vmatprep.subr.mxu0 0.0
        %1105 = vmatpush1.msra.mxu0 0.0
        %1106 = vmatprep.subr.mxu0 0.0
        %1107 = vmatpush1.msra.mxu0 0.0
        %1108 = vmatprep.subr.mxu0 0.0
        %1109 = vmatpush1.msra.mxu0 0.0
        %1110 = vmatprep.subr.mxu0 0.0
        %1111 = vmatpush1.msra.mxu0 0.0
        %1112 = vmatprep.subr.mxu0 0.0
        %1113 = vmatpush1.msra.mxu0 0.0
        %1114 = vmatprep.subr.mxu0 0.0
        %1115 = vmatpush1.msra.mxu0 0.0
        %1116 = vmatprep.subr.mxu0 0.0
        %1117 = vmatpush1.msra.mxu0 0.0
        %1118 = vmatprep.mubr.f32.mxu0 0.0
        %v1119 = vand.u32 %v704, 4294901760
        %1120 = vmatmul.mubr.f32.gmra.mrb[0].mxu0 %v1119
        %v1121 = vpop.f32.mrb[0].mxu0
        %v1122 = vadd.f32 %v1037, %v1121
        %v1123 = vpop.f32.mrb[0].mxu0
        %1124 = vmatprep.mubr.f32.mxu0 0.0
        %v1125 = vand.u32 %v706, 4294901760
        %1126 = vmatmul.mubr.f32.gmra.mrb[0].mxu0 %v1125
        %v1127 = vpop.f32.mrb[0].mxu0
        %v1128 = vadd.f32 %v1045, %v1127
        %v1129 = vpop.f32.mrb[0].mxu0
        %1130 = vdwg.mxu0
        %1131 = vmatprep.subr.mxu0 0.0
        %v1132 = vand.u32 %v184, 4294901760
        %1133 = vmatpush1.msra.mxu0 %v1132
        %1134 = vmatprep.subr.mxu0 0.0
        %v1135 = vand.u32 %v185, 4294901760
        %1136 = vmatpush1.msra.mxu0 %v1135
        %1137 = vmatprep.subr.mxu0 0.0
        %1138 = vmatpush1.msra.mxu0 0.0
        %1139 = vmatprep.subr.mxu0 0.0
        %1140 = vmatpush1.msra.mxu0 0.0
        %1141 = vmatprep.subr.mxu0 0.0
        %1142 = vmatpush1.msra.mxu0 0.0
        %1143 = vmatprep.subr.mxu0 0.0
        %1144 = vmatpush1.msra.mxu0 0.0
        %1145 = vmatprep.subr.mxu0 0.0
        %1146 = vmatpush1.msra.mxu0 0.0
        %1147 = vmatprep.subr.mxu0 0.0
        %1148 = vmatpush1.msra.mxu0 0.0
        %1149 = vmatprep.subr.mxu0 0.0
        %1150 = vmatpush1.msra.mxu0 0.0
        %1151 = vmatprep.subr.mxu0 0.0
        %1152 = vmatpush1.msra.mxu0 0.0
        %1153 = vmatprep.subr.mxu0 0.0
        %1154 = vmatpush1.msra.mxu0 0.0
        %1155 = vmatprep.subr.mxu0 0.0
        %1156 = vmatpush1.msra.mxu0 0.0
        %1157 = vmatprep.subr.mxu0 0.0
        %1158 = vmatpush1.msra.mxu0 0.0
        %1159 = vmatprep.subr.mxu0 0.0
        %1160 = vmatpush1.msra.mxu0 0.0
        %1161 = vmatprep.subr.mxu0 0.0
        %1162 = vmatpush1.msra.mxu0 0.0
        %1163 = vmatprep.subr.mxu0 0.0
        %1164 = vmatpush1.msra.mxu0 0.0
        %1165 = vmatprep.subr.mxu0 0.0
        %1166 = vmatpush1.msra.mxu0 0.0
        %1167 = vmatprep.subr.mxu0 0.0
        %1168 = vmatpush1.msra.mxu0 0.0
        %1169 = vmatprep.subr.mxu0 0.0
        %1170 = vmatpush1.msra.mxu0 0.0
        %1171 = vmatprep.subr.mxu0 0.0
        %1172 = vmatpush1.msra.mxu0 0.0
        %1173 = vmatprep.subr.mxu0 0.0
        %1174 = vmatpush1.msra.mxu0 0.0
        %1175 = vmatprep.subr.mxu0 0.0
        %1176 = vmatpush1.msra.mxu0 0.0
        %1177 = vmatprep.subr.mxu0 0.0
        %1178 = vmatpush1.msra.mxu0 0.0
        %1179 = vmatprep.subr.mxu0 0.0
        %1180 = vmatpush1.msra.mxu0 0.0
        %1181 = vmatprep.subr.mxu0 0.0
        %1182 = vmatpush1.msra.mxu0 0.0
        %1183 = vmatprep.subr.mxu0 0.0
        %1184 = vmatpush1.msra.mxu0 0.0
        %1185 = vmatprep.subr.mxu0 0.0
        %1186 = vmatpush1.msra.mxu0 0.0
        %1187 = vmatprep.subr.mxu0 0.0
        %1188 = vmatpush1.msra.mxu0 0.0
        %1189 = vmatprep.subr.mxu0 0.0
        %1190 = vmatpush1.msra.mxu0 0.0
        %1191 = vmatprep.subr.mxu0 0.0
        %1192 = vmatpush1.msra.mxu0 0.0
        %1193 = vmatprep.subr.mxu0 0.0
        %1194 = vmatpush1.msra.mxu0 0.0
        %1195 = vmatprep.subr.mxu0 0.0
        %1196 = vmatpush1.msra.mxu0 0.0
        %1197 = vmatprep.mubr.f32.mxu0 0.0
        %v1198 = vand.u32 %v704, 4294901760
        %1199 = vmatmul.mubr.f32.gmra.mrb[0].mxu0 %v1198
        %v1200 = vpop.f32.mrb[0].mxu0
        %v1201 = vadd.f32 %v1122, %v1200
        %v1202 = vpop.f32.mrb[0].mxu0
        %1203 = vmatprep.mubr.f32.mxu0 0.0
        %v1204 = vand.u32 %v706, 4294901760
        %1205 = vmatmul.mubr.f32.gmra.mrb[0].mxu0 %v1204
        %v1206 = vpop.f32.mrb[0].mxu0
        %v1207 = vadd.f32 %v1128, %v1206
        %v1208 = vpop.f32.mrb[0].mxu0
        %1209 = vdwg.mxu0
        %vm1210 = vcmask 490496
        %1211 = vst.msk [vmem:[%s182] sm:$0xff] %vm1210, %v1201
        %vm1212 = vcmask 489472
        %1213 = vst.msk [vmem:[%s182 + $0x8] sm:$0x7f] %vm1212, %v1207
        %s1214 = scalar_lea.vmem %s150, 16 [#allocation2]
        %v1215 = vld [vmem:[%s1214] sm:$0xff]
        %v1216 = vld [vmem:[%s1214 + $0x8] sm:$0xff]
        %v1219 = vrot.slane %v1215, 1
        %v1220 = vrot.slane %v1216, 1
        %v1221 = vsel %vm193, %v1219, %v1220
        %v1222 = vsel %vm197, %v1221, 0
        %v1224 = vsel %vm197, %v1220, 0
        %1226 = vmatprep.subr.mxu0 0.0
        %v1227 = vand.u32 %v187, 4294901760
        %1228 = vmatpush1.msra.mxu0 %v1227
        %1229 = vmatprep.subr.mxu0 0.0
        %v1230 = vand.u32 %v188, 4294901760
        %1231 = vmatpush1.msra.mxu0 %v1230
        %1232 = vmatprep.subr.mxu0 0.0
        %1233 = vmatpush1.msra.mxu0 0.0
        %1234 = vmatprep.subr.mxu0 0.0
        %1235 = vmatpush1.msra.mxu0 0.0
        %1236 = vmatprep.subr.mxu0 0.0
        %1237 = vmatpush1.msra.mxu0 0.0
        %1238 = vmatprep.subr.mxu0 0.0
        %1239 = vmatpush1.msra.mxu0 0.0
        %1240 = vmatprep.subr.mxu0 0.0
        %1241 = vmatpush1.msra.mxu0 0.0
        %1242 = vmatprep.subr.mxu0 0.0
        %1243 = vmatpush1.msra.mxu0 0.0
        %1244 = vmatprep.subr.mxu0 0.0
        %1245 = vmatpush1.msra.mxu0 0.0
        %1246 = vmatprep.subr.mxu0 0.0
        %1247 = vmatpush1.msra.mxu0 0.0
        %1248 = vmatprep.subr.mxu0 0.0
        %1249 = vmatpush1.msra.mxu0 0.0
        %1250 = vmatprep.subr.mxu0 0.0
        %1251 = vmatpush1.msra.mxu0 0.0
        %1252 = vmatprep.subr.mxu0 0.0
        %1253 = vmatpush1.msra.mxu0 0.0
        %1254 = vmatprep.subr.mxu0 0.0
        %1255 = vmatpush1.msra.mxu0 0.0
        %1256 = vmatprep.subr.mxu0 0.0
        %1257 = vmatpush1.msra.mxu0 0.0
        %1258 = vmatprep.subr.mxu0 0.0
        %1259 = vmatpush1.msra.mxu0 0.0
        %1260 = vmatprep.subr.mxu0 0.0
        %1261 = vmatpush1.msra.mxu0 0.0
        %1262 = vmatprep.subr.mxu0 0.0
        %1263 = vmatpush1.msra.mxu0 0.0
        %1264 = vmatprep.subr.mxu0 0.0
        %1265 = vmatpush1.msra.mxu0 0.0
        %1266 = vmatprep.subr.mxu0 0.0
        %1267 = vmatpush1.msra.mxu0 0.0
        %1268 = vmatprep.subr.mxu0 0.0
        %1269 = vmatpush1.msra.mxu0 0.0
        %1270 = vmatprep.subr.mxu0 0.0
        %1271 = vmatpush1.msra.mxu0 0.0
        %1272 = vmatprep.subr.mxu0 0.0
        %1273 = vmatpush1.msra.mxu0 0.0
        %1274 = vmatprep.subr.mxu0 0.0
        %1275 = vmatpush1.msra.mxu0 0.0
        %1276 = vmatprep.subr.mxu0 0.0
        %1277 = vmatpush1.msra.mxu0 0.0
        %1278 = vmatprep.subr.mxu0 0.0
        %1279 = vmatpush1.msra.mxu0 0.0
        %1280 = vmatprep.subr.mxu0 0.0
        %1281 = vmatpush1.msra.mxu0 0.0
        %1282 = vmatprep.subr.mxu0 0.0
        %1283 = vmatpush1.msra.mxu0 0.0
        %1284 = vmatprep.subr.mxu0 0.0
        %1285 = vmatpush1.msra.mxu0 0.0
        %1286 = vmatprep.subr.mxu0 0.0
        %1287 = vmatpush1.msra.mxu0 0.0
        %1288 = vmatprep.subr.mxu0 0.0
        %1289 = vmatpush1.msra.mxu0 0.0
        %1290 = vmatprep.subr.mxu0 0.0
        %1291 = vmatpush1.msra.mxu0 0.0
        %1292 = vmatprep.mubr.f32.mxu0 0.0
        %v1293 = vand.u32 %v1222, 4294901760
        %v1294 = vsub.f32 %v1222, %v1293
        %v1295 = vand.u32 %v1294, 4294901760
        %v1296 = vsub.f32 %v1294, %v1295
        %v1297 = vand.u32 %v1296, 4294901760
        %1298 = vmatmul.mubr.f32.gmra.mrb[0].mxu0 %v1297
        %v1299 = vpop.f32.mrb[0].mxu0
        %v1300 = vadd.f32 0.0, %v1299
        %v1301 = vpop.f32.mrb[0].mxu0
        %1302 = vmatprep.mubr.f32.mxu0 0.0
        %v1303 = vand.u32 %v1224, 4294901760
        %v1304 = vsub.f32 %v1224, %v1303
        %v1305 = vand.u32 %v1304, 4294901760
        %v1306 = vsub.f32 %v1304, %v1305
        %v1307 = vand.u32 %v1306, 4294901760
        %1308 = vmatmul.mubr.f32.gmra.mrb[0].mxu0 %v1307
        %v1309 = vpop.f32.mrb[0].mxu0
        %v1310 = vadd.f32 0.0, %v1309
        %v1311 = vpop.f32.mrb[0].mxu0
        %1312 = vdwg.mxu0
        %1313 = vmatprep.subr.mxu0 0.0
        %v1314 = vand.u32 %v187, 4294901760
        %v1315 = vsub.f32 %v187, %v1314
        %v1316 = vand.u32 %v1315, 4294901760
        %v1317 = vsub.f32 %v1315, %v1316
        %v1318 = vand.u32 %v1317, 4294901760
        %1319 = vmatpush1.msra.mxu0 %v1318
        %1320 = vmatprep.subr.mxu0 0.0
        %v1321 = vand.u32 %v188, 4294901760
        %v1322 = vsub.f32 %v188, %v1321
        %v1323 = vand.u32 %v1322, 4294901760
        %v1324 = vsub.f32 %v1322, %v1323
        %v1325 = vand.u32 %v1324, 4294901760
        %1326 = vmatpush1.msra.mxu0 %v1325
        %1327 = vmatprep.subr.mxu0 0.0
        %1328 = vmatpush1.msra.mxu0 0.0
        %1329 = vmatprep.subr.mxu0 0.0
        %1330 = vmatpush1.msra.mxu0 0.0
        %1331 = vmatprep.subr.mxu0 0.0
        %1332 = vmatpush1.msra.mxu0 0.0
        %1333 = vmatprep.subr.mxu0 0.0
        %1334 = vmatpush1.msra.mxu0 0.0
        %1335 = vmatprep.subr.mxu0 0.0
        %1336 = vmatpush1.msra.mxu0 0.0
        %1337 = vmatprep.subr.mxu0 0.0
        %1338 = vmatpush1.msra.mxu0 0.0
        %1339 = vmatprep.subr.mxu0 0.0
        %1340 = vmatpush1.msra.mxu0 0.0
        %1341 = vmatprep.subr.mxu0 0.0
        %1342 = vmatpush1.msra.mxu0 0.0
        %1343 = vmatprep.subr.mxu0 0.0
        %1344 = vmatpush1.msra.mxu0 0.0
        %1345 = vmatprep.subr.mxu0 0.0
        %1346 = vmatpush1.msra.mxu0 0.0
        %1347 = vmatprep.subr.mxu0 0.0
        %1348 = vmatpush1.msra.mxu0 0.0
        %1349 = vmatprep.subr.mxu0 0.0
        %1350 = vmatpush1.msra.mxu0 0.0
        %1351 = vmatprep.subr.mxu0 0.0
        %1352 = vmatpush1.msra.mxu0 0.0
        %1353 = vmatprep.subr.mxu0 0.0
        %1354 = vmatpush1.msra.mxu0 0.0
        %1355 = vmatprep.subr.mxu0 0.0
        %1356 = vmatpush1.msra.mxu0 0.0
        %1357 = vmatprep.subr.mxu0 0.0
        %1358 = vmatpush1.msra.mxu0 0.0
        %1359 = vmatprep.subr.mxu0 0.0
        %1360 = vmatpush1.msra.mxu0 0.0
        %1361 = vmatprep.subr.mxu0 0.0
        %1362 = vmatpush1.msra.mxu0 0.0
        %1363 = vmatprep.subr.mxu0 0.0
        %1364 = vmatpush1.msra.mxu0 0.0
        %1365 = vmatprep.subr.mxu0 0.0
        %1366 = vmatpush1.msra.mxu0 0.0
        %1367 = vmatprep.subr.mxu0 0.0
        %1368 = vmatpush1.msra.mxu0 0.0
        %1369 = vmatprep.subr.mxu0 0.0
        %1370 = vmatpush1.msra.mxu0 0.0
        %1371 = vmatprep.subr.mxu0 0.0
        %1372 = vmatpush1.msra.mxu0 0.0
        %1373 = vmatprep.subr.mxu0 0.0
        %1374 = vmatpush1.msra.mxu0 0.0
        %1375 = vmatprep.subr.mxu0 0.0
        %1376 = vmatpush1.msra.mxu0 0.0
        %1377 = vmatprep.subr.mxu0 0.0
        %1378 = vmatpush1.msra.mxu0 0.0
        %1379 = vmatprep.subr.mxu0 0.0
        %1380 = vmatpush1.msra.mxu0 0.0
        %1381 = vmatprep.subr.mxu0 0.0
        %1382 = vmatpush1.msra.mxu0 0.0
        %1383 = vmatprep.subr.mxu0 0.0
        %1384 = vmatpush1.msra.mxu0 0.0
        %1385 = vmatprep.subr.mxu0 0.0
        %1386 = vmatpush1.msra.mxu0 0.0
        %1387 = vmatprep.mubr.f32.mxu0 0.0
        %v1388 = vand.u32 %v1222, 4294901760
        %1389 = vmatmul.mubr.f32.gmra.mrb[0].mxu0 %v1388
        %v1390 = vpop.f32.mrb[0].mxu0
        %v1391 = vadd.f32 %v1300, %v1390
        %v1392 = vpop.f32.mrb[0].mxu0
        %1393 = vmatprep.mubr.f32.mxu0 0.0
        %v1394 = vand.u32 %v1224, 4294901760
        %1395 = vmatmul.mubr.f32.gmra.mrb[0].mxu0 %v1394
        %v1396 = vpop.f32.mrb[0].mxu0
        %v1397 = vadd.f32 %v1310, %v1396
        %v1398 = vpop.f32.mrb[0].mxu0
        %1399 = vdwg.mxu0
        %1400 = vmatprep.subr.mxu0 0.0
        %v1401 = vand.u32 %v187, 4294901760
        %v1402 = vsub.f32 %v187, %v1401
        %1403 = vmatpush1.msra.mxu0 %v1402
        %1404 = vmatprep.subr.mxu0 0.0
        %v1405 = vand.u32 %v188, 4294901760
        %v1406 = vsub.f32 %v188, %v1405
        %1407 = vmatpush1.msra.mxu0 %v1406
        %1408 = vmatprep.subr.mxu0 0.0
        %1409 = vmatpush1.msra.mxu0 0.0
        %1410 = vmatprep.subr.mxu0 0.0
        %1411 = vmatpush1.msra.mxu0 0.0
        %1412 = vmatprep.subr.mxu0 0.0
        %1413 = vmatpush1.msra.mxu0 0.0
        %1414 = vmatprep.subr.mxu0 0.0
        %1415 = vmatpush1.msra.mxu0 0.0
        %1416 = vmatprep.subr.mxu0 0.0
        %1417 = vmatpush1.msra.mxu0 0.0
        %1418 = vmatprep.subr.mxu0 0.0
        %1419 = vmatpush1.msra.mxu0 0.0
        %1420 = vmatprep.subr.mxu0 0.0
        %1421 = vmatpush1.msra.mxu0 0.0
        %1422 = vmatprep.subr.mxu0 0.0
        %1423 = vmatpush1.msra.mxu0 0.0
        %1424 = vmatprep.subr.mxu0 0.0
        %1425 = vmatpush1.msra.mxu0 0.0
        %1426 = vmatprep.subr.mxu0 0.0
        %1427 = vmatpush1.msra.mxu0 0.0
        %1428 = vmatprep.subr.mxu0 0.0
        %1429 = vmatpush1.msra.mxu0 0.0
        %1430 = vmatprep.subr.mxu0 0.0
        %1431 = vmatpush1.msra.mxu0 0.0
        %1432 = vmatprep.subr.mxu0 0.0
        %1433 = vmatpush1.msra.mxu0 0.0
        %1434 = vmatprep.subr.mxu0 0.0
        %1435 = vmatpush1.msra.mxu0 0.0
        %1436 = vmatprep.subr.mxu0 0.0
        %1437 = vmatpush1.msra.mxu0 0.0
        %1438 = vmatprep.subr.mxu0 0.0
        %1439 = vmatpush1.msra.mxu0 0.0
        %1440 = vmatprep.subr.mxu0 0.0
        %1441 = vmatpush1.msra.mxu0 0.0
        %1442 = vmatprep.subr.mxu0 0.0
        %1443 = vmatpush1.msra.mxu0 0.0
        %1444 = vmatprep.subr.mxu0 0.0
        %1445 = vmatpush1.msra.mxu0 0.0
        %1446 = vmatprep.subr.mxu0 0.0
        %1447 = vmatpush1.msra.mxu0 0.0
        %1448 = vmatprep.subr.mxu0 0.0
        %1449 = vmatpush1.msra.mxu0 0.0
        %1450 = vmatprep.subr.mxu0 0.0
        %1451 = vmatpush1.msra.mxu0 0.0
        %1452 = vmatprep.subr.mxu0 0.0
        %1453 = vmatpush1.msra.mxu0 0.0
        %1454 = vmatprep.subr.mxu0 0.0
        %1455 = vmatpush1.msra.mxu0 0.0
        %1456 = vmatprep.subr.mxu0 0.0
        %1457 = vmatpush1.msra.mxu0 0.0
        %1458 = vmatprep.subr.mxu0 0.0
        %1459 = vmatpush1.msra.mxu0 0.0
        %1460 = vmatprep.subr.mxu0 0.0
        %1461 = vmatpush1.msra.mxu0 0.0
        %1462 = vmatprep.subr.mxu0 0.0
        %1463 = vmatpush1.msra.mxu0 0.0
        %1464 = vmatprep.subr.mxu0 0.0
        %1465 = vmatpush1.msra.mxu0 0.0
        %1466 = vmatprep.subr.mxu0 0.0
        %1467 = vmatpush1.msra.mxu0 0.0
        %1468 = vmatprep.mubr.f32.mxu0 0.0
        %v1469 = vand.u32 %v1222, 4294901760
        %v1470 = vsub.f32 %v1222, %v1469
        %1471 = vmatmul.mubr.f32.gmra.mrb[0].mxu0 %v1470
        %v1472 = vpop.f32.mrb[0].mxu0
        %v1473 = vadd.f32 %v1391, %v1472
        %v1474 = vpop.f32.mrb[0].mxu0
        %1475 = vmatprep.mubr.f32.mxu0 0.0
        %v1476 = vand.u32 %v1224, 4294901760
        %v1477 = vsub.f32 %v1224, %v1476
        %1478 = vmatmul.mubr.f32.gmra.mrb[0].mxu0 %v1477
        %v1479 = vpop.f32.mrb[0].mxu0
        %v1480 = vadd.f32 %v1397, %v1479
        %v1481 = vpop.f32.mrb[0].mxu0
        %1482 = vdwg.mxu0
        %1483 = vmatprep.subr.mxu0 0.0
        %v1484 = vand.u32 %v187, 4294901760
        %1485 = vmatpush1.msra.mxu0 %v1484
        %1486 = vmatprep.subr.mxu0 0.0
        %v1487 = vand.u32 %v188, 4294901760
        %1488 = vmatpush1.msra.mxu0 %v1487
        %1489 = vmatprep.subr.mxu0 0.0
        %1490 = vmatpush1.msra.mxu0 0.0
        %1491 = vmatprep.subr.mxu0 0.0
        %1492 = vmatpush1.msra.mxu0 0.0
        %1493 = vmatprep.subr.mxu0 0.0
        %1494 = vmatpush1.msra.mxu0 0.0
        %1495 = vmatprep.subr.mxu0 0.0
        %1496 = vmatpush1.msra.mxu0 0.0
        %1497 = vmatprep.subr.mxu0 0.0
        %1498 = vmatpush1.msra.mxu0 0.0
        %1499 = vmatprep.subr.mxu0 0.0
        %1500 = vmatpush1.msra.mxu0 0.0
        %1501 = vmatprep.subr.mxu0 0.0
        %1502 = vmatpush1.msra.mxu0 0.0
        %1503 = vmatprep.subr.mxu0 0.0
        %1504 = vmatpush1.msra.mxu0 0.0
        %1505 = vmatprep.subr.mxu0 0.0
        %1506 = vmatpush1.msra.mxu0 0.0
        %1507 = vmatprep.subr.mxu0 0.0
        %1508 = vmatpush1.msra.mxu0 0.0
        %1509 = vmatprep.subr.mxu0 0.0
        %1510 = vmatpush1.msra.mxu0 0.0
        %1511 = vmatprep.subr.mxu0 0.0
        %1512 = vmatpush1.msra.mxu0 0.0
        %1513 = vmatprep.subr.mxu0 0.0
        %1514 = vmatpush1.msra.mxu0 0.0
        %1515 = vmatprep.subr.mxu0 0.0
        %1516 = vmatpush1.msra.mxu0 0.0
        %1517 = vmatprep.subr.mxu0 0.0
        %1518 = vmatpush1.msra.mxu0 0.0
        %1519 = vmatprep.subr.mxu0 0.0
        %1520 = vmatpush1.msra.mxu0 0.0
        %1521 = vmatprep.subr.mxu0 0.0
        %1522 = vmatpush1.msra.mxu0 0.0
        %1523 = vmatprep.subr.mxu0 0.0
        %1524 = vmatpush1.msra.mxu0 0.0
        %1525 = vmatprep.subr.mxu0 0.0
        %1526 = vmatpush1.msra.mxu0 0.0
        %1527 = vmatprep.subr.mxu0 0.0
        %1528 = vmatpush1.msra.mxu0 0.0
        %1529 = vmatprep.subr.mxu0 0.0
        %1530 = vmatpush1.msra.mxu0 0.0
        %1531 = vmatprep.subr.mxu0 0.0
        %1532 = vmatpush1.msra.mxu0 0.0
        %1533 = vmatprep.subr.mxu0 0.0
        %1534 = vmatpush1.msra.mxu0 0.0
        %1535 = vmatprep.subr.mxu0 0.0
        %1536 = vmatpush1.msra.mxu0 0.0
        %1537 = vmatprep.subr.mxu0 0.0
        %1538 = vmatpush1.msra.mxu0 0.0
        %1539 = vmatprep.subr.mxu0 0.0
        %1540 = vmatpush1.msra.mxu0 0.0
        %1541 = vmatprep.subr.mxu0 0.0
        %1542 = vmatpush1.msra.mxu0 0.0
        %1543 = vmatprep.subr.mxu0 0.0
        %1544 = vmatpush1.msra.mxu0 0.0
        %1545 = vmatprep.subr.mxu0 0.0
        %1546 = vmatpush1.msra.mxu0 0.0
        %1547 = vmatprep.subr.mxu0 0.0
        %1548 = vmatpush1.msra.mxu0 0.0
        %1549 = vmatprep.mubr.f32.mxu0 0.0
        %v1550 = vand.u32 %v1222, 4294901760
        %v1551 = vsub.f32 %v1222, %v1550
        %v1552 = vand.u32 %v1551, 4294901760
        %1553 = vmatmul.mubr.f32.gmra.mrb[0].mxu0 %v1552
        %v1554 = vpop.f32.mrb[0].mxu0
        %v1555 = vadd.f32 %v1473, %v1554
        %v1556 = vpop.f32.mrb[0].mxu0
        %1557 = vmatprep.mubr.f32.mxu0 0.0
        %v1558 = vand.u32 %v1224, 4294901760
        %v1559 = vsub.f32 %v1224, %v1558
        %v1560 = vand.u32 %v1559, 4294901760
        %1561 = vmatmul.mubr.f32.gmra.mrb[0].mxu0 %v1560
        %v1562 = vpop.f32.mrb[0].mxu0
        %v1563 = vadd.f32 %v1480, %v1562
        %v1564 = vpop.f32.mrb[0].mxu0
        %1565 = vdwg.mxu0
        %1566 = vmatprep.subr.mxu0 0.0
        %v1567 = vand.u32 %v187, 4294901760
        %v1568 = vsub.f32 %v187, %v1567
        %v1569 = vand.u32 %v1568, 4294901760
        %1570 = vmatpush1.msra.mxu0 %v1569
        %1571 = vmatprep.subr.mxu0 0.0
        %v1572 = vand.u32 %v188, 4294901760
        %v1573 = vsub.f32 %v188, %v1572
        %v1574 = vand.u32 %v1573, 4294901760
        %1575 = vmatpush1.msra.mxu0 %v1574
        %1576 = vmatprep.subr.mxu0 0.0
        %1577 = vmatpush1.msra.mxu0 0.0
        %1578 = vmatprep.subr.mxu0 0.0
        %1579 = vmatpush1.msra.mxu0 0.0
        %1580 = vmatprep.subr.mxu0 0.0
        %1581 = vmatpush1.msra.mxu0 0.0
        %1582 = vmatprep.subr.mxu0 0.0
        %1583 = vmatpush1.msra.mxu0 0.0
        %1584 = vmatprep.subr.mxu0 0.0
        %1585 = vmatpush1.msra.mxu0 0.0
        %1586 = vmatprep.subr.mxu0 0.0
        %1587 = vmatpush1.msra.mxu0 0.0
        %1588 = vmatprep.subr.mxu0 0.0
        %1589 = vmatpush1.msra.mxu0 0.0
        %1590 = vmatprep.subr.mxu0 0.0
        %1591 = vmatpush1.msra.mxu0 0.0
        %1592 = vmatprep.subr.mxu0 0.0
        %1593 = vmatpush1.msra.mxu0 0.0
        %1594 = vmatprep.subr.mxu0 0.0
        %1595 = vmatpush1.msra.mxu0 0.0
        %1596 = vmatprep.subr.mxu0 0.0
        %1597 = vmatpush1.msra.mxu0 0.0
        %1598 = vmatprep.subr.mxu0 0.0
        %1599 = vmatpush1.msra.mxu0 0.0
        %1600 = vmatprep.subr.mxu0 0.0
        %1601 = vmatpush1.msra.mxu0 0.0
        %1602 = vmatprep.subr.mxu0 0.0
        %1603 = vmatpush1.msra.mxu0 0.0
        %1604 = vmatprep.subr.mxu0 0.0
        %1605 = vmatpush1.msra.mxu0 0.0
        %1606 = vmatprep.subr.mxu0 0.0
        %1607 = vmatpush1.msra.mxu0 0.0
        %1608 = vmatprep.subr.mxu0 0.0
        %1609 = vmatpush1.msra.mxu0 0.0
        %1610 = vmatprep.subr.mxu0 0.0
        %1611 = vmatpush1.msra.mxu0 0.0
        %1612 = vmatprep.subr.mxu0 0.0
        %1613 = vmatpush1.msra.mxu0 0.0
        %1614 = vmatprep.subr.mxu0 0.0
        %1615 = vmatpush1.msra.mxu0 0.0
        %1616 = vmatprep.subr.mxu0 0.0
        %1617 = vmatpush1.msra.mxu0 0.0
        %1618 = vmatprep.subr.mxu0 0.0
        %1619 = vmatpush1.msra.mxu0 0.0
        %1620 = vmatprep.subr.mxu0 0.0
        %1621 = vmatpush1.msra.mxu0 0.0
        %1622 = vmatprep.subr.mxu0 0.0
        %1623 = vmatpush1.msra.mxu0 0.0
        %1624 = vmatprep.subr.mxu0 0.0
        %1625 = vmatpush1.msra.mxu0 0.0
        %1626 = vmatprep.subr.mxu0 0.0
        %1627 = vmatpush1.msra.mxu0 0.0
        %1628 = vmatprep.subr.mxu0 0.0
        %1629 = vmatpush1.msra.mxu0 0.0
        %1630 = vmatprep.subr.mxu0 0.0
        %1631 = vmatpush1.msra.mxu0 0.0
        %1632 = vmatprep.subr.mxu0 0.0
        %1633 = vmatpush1.msra.mxu0 0.0
        %1634 = vmatprep.subr.mxu0 0.0
        %1635 = vmatpush1.msra.mxu0 0.0
        %1636 = vmatprep.mubr.f32.mxu0 0.0
        %v1637 = vand.u32 %v1222, 4294901760
        %1638 = vmatmul.mubr.f32.gmra.mrb[0].mxu0 %v1637
        %v1639 = vpop.f32.mrb[0].mxu0
        %v1640 = vadd.f32 %v1555, %v1639
        %v1641 = vpop.f32.mrb[0].mxu0
        %1642 = vmatprep.mubr.f32.mxu0 0.0
        %v1643 = vand.u32 %v1224, 4294901760
        %1644 = vmatmul.mubr.f32.gmra.mrb[0].mxu0 %v1643
        %v1645 = vpop.f32.mrb[0].mxu0
        %v1646 = vadd.f32 %v1563, %v1645
        %v1647 = vpop.f32.mrb[0].mxu0
        %1648 = vdwg.mxu0
        %1649 = vmatprep.subr.mxu0 0.0
        %v1650 = vand.u32 %v187, 4294901760
        %1651 = vmatpush1.msra.mxu0 %v1650
        %1652 = vmatprep.subr.mxu0 0.0
        %v1653 = vand.u32 %v188, 4294901760
        %1654 = vmatpush1.msra.mxu0 %v1653
        %1655 = vmatprep.subr.mxu0 0.0
        %1656 = vmatpush1.msra.mxu0 0.0
        %1657 = vmatprep.subr.mxu0 0.0
        %1658 = vmatpush1.msra.mxu0 0.0
        %1659 = vmatprep.subr.mxu0 0.0
        %1660 = vmatpush1.msra.mxu0 0.0
        %1661 = vmatprep.subr.mxu0 0.0
        %1662 = vmatpush1.msra.mxu0 0.0
        %1663 = vmatprep.subr.mxu0 0.0
        %1664 = vmatpush1.msra.mxu0 0.0
        %1665 = vmatprep.subr.mxu0 0.0
        %1666 = vmatpush1.msra.mxu0 0.0
        %1667 = vmatprep.subr.mxu0 0.0
        %1668 = vmatpush1.msra.mxu0 0.0
        %1669 = vmatprep.subr.mxu0 0.0
        %1670 = vmatpush1.msra.mxu0 0.0
        %1671 = vmatprep.subr.mxu0 0.0
        %1672 = vmatpush1.msra.mxu0 0.0
        %1673 = vmatprep.subr.mxu0 0.0
        %1674 = vmatpush1.msra.mxu0 0.0
        %1675 = vmatprep.subr.mxu0 0.0
        %1676 = vmatpush1.msra.mxu0 0.0
        %1677 = vmatprep.subr.mxu0 0.0
        %1678 = vmatpush1.msra.mxu0 0.0
        %1679 = vmatprep.subr.mxu0 0.0
        %1680 = vmatpush1.msra.mxu0 0.0
        %1681 = vmatprep.subr.mxu0 0.0
        %1682 = vmatpush1.msra.mxu0 0.0
        %1683 = vmatprep.subr.mxu0 0.0
        %1684 = vmatpush1.msra.mxu0 0.0
        %1685 = vmatprep.subr.mxu0 0.0
        %1686 = vmatpush1.msra.mxu0 0.0
        %1687 = vmatprep.subr.mxu0 0.0
        %1688 = vmatpush1.msra.mxu0 0.0
        %1689 = vmatprep.subr.mxu0 0.0
        %1690 = vmatpush1.msra.mxu0 0.0
        %1691 = vmatprep.subr.mxu0 0.0
        %1692 = vmatpush1.msra.mxu0 0.0
        %1693 = vmatprep.subr.mxu0 0.0
        %1694 = vmatpush1.msra.mxu0 0.0
        %1695 = vmatprep.subr.mxu0 0.0
        %1696 = vmatpush1.msra.mxu0 0.0
        %1697 = vmatprep.subr.mxu0 0.0
        %1698 = vmatpush1.msra.mxu0 0.0
        %1699 = vmatprep.subr.mxu0 0.0
        %1700 = vmatpush1.msra.mxu0 0.0
        %1701 = vmatprep.subr.mxu0 0.0
        %1702 = vmatpush1.msra.mxu0 0.0
        %1703 = vmatprep.subr.mxu0 0.0
        %1704 = vmatpush1.msra.mxu0 0.0
        %1705 = vmatprep.subr.mxu0 0.0
        %1706 = vmatpush1.msra.mxu0 0.0
        %1707 = vmatprep.subr.mxu0 0.0
        %1708 = vmatpush1.msra.mxu0 0.0
        %1709 = vmatprep.subr.mxu0 0.0
        %1710 = vmatpush1.msra.mxu0 0.0
        %1711 = vmatprep.subr.mxu0 0.0
        %1712 = vmatpush1.msra.mxu0 0.0
        %1713 = vmatprep.subr.mxu0 0.0
        %1714 = vmatpush1.msra.mxu0 0.0
        %1715 = vmatprep.mubr.f32.mxu0 0.0
        %v1716 = vand.u32 %v1222, 4294901760
        %1717 = vmatmul.mubr.f32.gmra.mrb[0].mxu0 %v1716
        %v1718 = vpop.f32.mrb[0].mxu0
        %v1719 = vadd.f32 %v1640, %v1718
        %v1720 = vpop.f32.mrb[0].mxu0
        %1721 = vmatprep.mubr.f32.mxu0 0.0
        %v1722 = vand.u32 %v1224, 4294901760
        %1723 = vmatmul.mubr.f32.gmra.mrb[0].mxu0 %v1722
        %v1724 = vpop.f32.mrb[0].mxu0
        %v1725 = vadd.f32 %v1646, %v1724
        %v1726 = vpop.f32.mrb[0].mxu0
        %1727 = vdwg.mxu0
        %v1728 = vsel %vm197, %v1215, 0
        %v1730 = vsel %vm197, %v1216, 0
        %1732 = vmatprep.subr.mxu0 0.0
        %v1733 = vand.u32 %v184, 4294901760
        %1734 = vmatpush1.msra.mxu0 %v1733
        %1735 = vmatprep.subr.mxu0 0.0
        %v1736 = vand.u32 %v185, 4294901760
        %1737 = vmatpush1.msra.mxu0 %v1736
        %1738 = vmatprep.subr.mxu0 0.0
        %1739 = vmatpush1.msra.mxu0 0.0
        %1740 = vmatprep.subr.mxu0 0.0
        %1741 = vmatpush1.msra.mxu0 0.0
        %1742 = vmatprep.subr.mxu0 0.0
        %1743 = vmatpush1.msra.mxu0 0.0
        %1744 = vmatprep.subr.mxu0 0.0
        %1745 = vmatpush1.msra.mxu0 0.0
        %1746 = vmatprep.subr.mxu0 0.0
        %1747 = vmatpush1.msra.mxu0 0.0
        %1748 = vmatprep.subr.mxu0 0.0
        %1749 = vmatpush1.msra.mxu0 0.0
        %1750 = vmatprep.subr.mxu0 0.0
        %1751 = vmatpush1.msra.mxu0 0.0
        %1752 = vmatprep.subr.mxu0 0.0
        %1753 = vmatpush1.msra.mxu0 0.0
        %1754 = vmatprep.subr.mxu0 0.0
        %1755 = vmatpush1.msra.mxu0 0.0
        %1756 = vmatprep.subr.mxu0 0.0
        %1757 = vmatpush1.msra.mxu0 0.0
        %1758 = vmatprep.subr.mxu0 0.0
        %1759 = vmatpush1.msra.mxu0 0.0
        %1760 = vmatprep.subr.mxu0 0.0
        %1761 = vmatpush1.msra.mxu0 0.0
        %1762 = vmatprep.subr.mxu0 0.0
        %1763 = vmatpush1.msra.mxu0 0.0
        %1764 = vmatprep.subr.mxu0 0.0
        %1765 = vmatpush1.msra.mxu0 0.0
        %1766 = vmatprep.subr.mxu0 0.0
        %1767 = vmatpush1.msra.mxu0 0.0
        %1768 = vmatprep.subr.mxu0 0.0
        %1769 = vmatpush1.msra.mxu0 0.0
        %1770 = vmatprep.subr.mxu0 0.0
        %1771 = vmatpush1.msra.mxu0 0.0
        %1772 = vmatprep.subr.mxu0 0.0
        %1773 = vmatpush1.msra.mxu0 0.0
        %1774 = vmatprep.subr.mxu0 0.0
        %1775 = vmatpush1.msra.mxu0 0.0
        %1776 = vmatprep.subr.mxu0 0.0
        %1777 = vmatpush1.msra.mxu0 0.0
        %1778 = vmatprep.subr.mxu0 0.0
        %1779 = vmatpush1.msra.mxu0 0.0
        %1780 = vmatprep.subr.mxu0 0.0
        %1781 = vmatpush1.msra.mxu0 0.0
        %1782 = vmatprep.subr.mxu0 0.0
        %1783 = vmatpush1.msra.mxu0 0.0
        %1784 = vmatprep.subr.mxu0 0.0
        %1785 = vmatpush1.msra.mxu0 0.0
        %1786 = vmatprep.subr.mxu0 0.0
        %1787 = vmatpush1.msra.mxu0 0.0
        %1788 = vmatprep.subr.mxu0 0.0
        %1789 = vmatpush1.msra.mxu0 0.0
        %1790 = vmatprep.subr.mxu0 0.0
        %1791 = vmatpush1.msra.mxu0 0.0
        %1792 = vmatprep.subr.mxu0 0.0
        %1793 = vmatpush1.msra.mxu0 0.0
        %1794 = vmatprep.subr.mxu0 0.0
        %1795 = vmatpush1.msra.mxu0 0.0
        %1796 = vmatprep.subr.mxu0 0.0
        %1797 = vmatpush1.msra.mxu0 0.0
        %1798 = vmatprep.mubr.f32.mxu0 0.0
        %v1799 = vand.u32 %v1728, 4294901760
        %v1800 = vsub.f32 %v1728, %v1799
        %v1801 = vand.u32 %v1800, 4294901760
        %v1802 = vsub.f32 %v1800, %v1801
        %v1803 = vand.u32 %v1802, 4294901760
        %1804 = vmatmul.mubr.f32.gmra.mrb[0].mxu0 %v1803
        %v1805 = vpop.f32.mrb[0].mxu0
        %v1806 = vadd.f32 %v1719, %v1805
        %v1807 = vpop.f32.mrb[0].mxu0
        %1808 = vmatprep.mubr.f32.mxu0 0.0
        %v1809 = vand.u32 %v1730, 4294901760
        %v1810 = vsub.f32 %v1730, %v1809
        %v1811 = vand.u32 %v1810, 4294901760
        %v1812 = vsub.f32 %v1810, %v1811
        %v1813 = vand.u32 %v1812, 4294901760
        %1814 = vmatmul.mubr.f32.gmra.mrb[0].mxu0 %v1813
        %v1815 = vpop.f32.mrb[0].mxu0
        %v1816 = vadd.f32 %v1725, %v1815
        %v1817 = vpop.f32.mrb[0].mxu0
        %1818 = vdwg.mxu0
        %1819 = vmatprep.subr.mxu0 0.0
        %v1820 = vand.u32 %v184, 4294901760
        %v1821 = vsub.f32 %v184, %v1820
        %v1822 = vand.u32 %v1821, 4294901760
        %v1823 = vsub.f32 %v1821, %v1822
        %v1824 = vand.u32 %v1823, 4294901760
        %1825 = vmatpush1.msra.mxu0 %v1824
        %1826 = vmatprep.subr.mxu0 0.0
        %v1827 = vand.u32 %v185, 4294901760
        %v1828 = vsub.f32 %v185, %v1827
        %v1829 = vand.u32 %v1828, 4294901760
        %v1830 = vsub.f32 %v1828, %v1829
        %v1831 = vand.u32 %v1830, 4294901760
        %1832 = vmatpush1.msra.mxu0 %v1831
        %1833 = vmatprep.subr.mxu0 0.0
        %1834 = vmatpush1.msra.mxu0 0.0
        %1835 = vmatprep.subr.mxu0 0.0
        %1836 = vmatpush1.msra.mxu0 0.0
        %1837 = vmatprep.subr.mxu0 0.0
        %1838 = vmatpush1.msra.mxu0 0.0
        %1839 = vmatprep.subr.mxu0 0.0
        %1840 = vmatpush1.msra.mxu0 0.0
        %1841 = vmatprep.subr.mxu0 0.0
        %1842 = vmatpush1.msra.mxu0 0.0
        %1843 = vmatprep.subr.mxu0 0.0
        %1844 = vmatpush1.msra.mxu0 0.0
        %1845 = vmatprep.subr.mxu0 0.0
        %1846 = vmatpush1.msra.mxu0 0.0
        %1847 = vmatprep.subr.mxu0 0.0
        %1848 = vmatpush1.msra.mxu0 0.0
        %1849 = vmatprep.subr.mxu0 0.0
        %1850 = vmatpush1.msra.mxu0 0.0
        %1851 = vmatprep.subr.mxu0 0.0
        %1852 = vmatpush1.msra.mxu0 0.0
        %1853 = vmatprep.subr.mxu0 0.0
        %1854 = vmatpush1.msra.mxu0 0.0
        %1855 = vmatprep.subr.mxu0 0.0
        %1856 = vmatpush1.msra.mxu0 0.0
        %1857 = vmatprep.subr.mxu0 0.0
        %1858 = vmatpush1.msra.mxu0 0.0
        %1859 = vmatprep.subr.mxu0 0.0
        %1860 = vmatpush1.msra.mxu0 0.0
        %1861 = vmatprep.subr.mxu0 0.0
        %1862 = vmatpush1.msra.mxu0 0.0
        %1863 = vmatprep.subr.mxu0 0.0
        %1864 = vmatpush1.msra.mxu0 0.0
        %1865 = vmatprep.subr.mxu0 0.0
        %1866 = vmatpush1.msra.mxu0 0.0
        %1867 = vmatprep.subr.mxu0 0.0
        %1868 = vmatpush1.msra.mxu0 0.0
        %1869 = vmatprep.subr.mxu0 0.0
        %1870 = vmatpush1.msra.mxu0 0.0
        %1871 = vmatprep.subr.mxu0 0.0
        %1872 = vmatpush1.msra.mxu0 0.0
        %1873 = vmatprep.subr.mxu0 0.0
        %1874 = vmatpush1.msra.mxu0 0.0
        %1875 = vmatprep.subr.mxu0 0.0
        %1876 = vmatpush1.msra.mxu0 0.0
        %1877 = vmatprep.subr.mxu0 0.0
        %1878 = vmatpush1.msra.mxu0 0.0
        %1879 = vmatprep.subr.mxu0 0.0
        %1880 = vmatpush1.msra.mxu0 0.0
        %1881 = vmatprep.subr.mxu0 0.0
        %1882 = vmatpush1.msra.mxu0 0.0
        %1883 = vmatprep.subr.mxu0 0.0
        %1884 = vmatpush1.msra.mxu0 0.0
        %1885 = vmatprep.subr.mxu0 0.0
        %1886 = vmatpush1.msra.mxu0 0.0
        %1887 = vmatprep.subr.mxu0 0.0
        %1888 = vmatpush1.msra.mxu0 0.0
        %1889 = vmatprep.subr.mxu0 0.0
        %1890 = vmatpush1.msra.mxu0 0.0
        %1891 = vmatprep.subr.mxu0 0.0
        %1892 = vmatpush1.msra.mxu0 0.0
        %1893 = vmatprep.mubr.f32.mxu0 0.0
        %v1894 = vand.u32 %v1728, 4294901760
        %1895 = vmatmul.mubr.f32.gmra.mrb[0].mxu0 %v1894
        %v1896 = vpop.f32.mrb[0].mxu0
        %v1897 = vadd.f32 %v1806, %v1896
        %v1898 = vpop.f32.mrb[0].mxu0
        %1899 = vmatprep.mubr.f32.mxu0 0.0
        %v1900 = vand.u32 %v1730, 4294901760
        %1901 = vmatmul.mubr.f32.gmra.mrb[0].mxu0 %v1900
        %v1902 = vpop.f32.mrb[0].mxu0
        %v1903 = vadd.f32 %v1816, %v1902
        %v1904 = vpop.f32.mrb[0].mxu0
        %1905 = vdwg.mxu0
        %1906 = vmatprep.subr.mxu0 0.0
        %v1907 = vand.u32 %v184, 4294901760
        %v1908 = vsub.f32 %v184, %v1907
        %1909 = vmatpush1.msra.mxu0 %v1908
        %1910 = vmatprep.subr.mxu0 0.0
        %v1911 = vand.u32 %v185, 4294901760
        %v1912 = vsub.f32 %v185, %v1911
        %1913 = vmatpush1.msra.mxu0 %v1912
        %1914 = vmatprep.subr.mxu0 0.0
        %1915 = vmatpush1.msra.mxu0 0.0
        %1916 = vmatprep.subr.mxu0 0.0
        %1917 = vmatpush1.msra.mxu0 0.0
        %1918 = vmatprep.subr.mxu0 0.0
        %1919 = vmatpush1.msra.mxu0 0.0
        %1920 = vmatprep.subr.mxu0 0.0
        %1921 = vmatpush1.msra.mxu0 0.0
        %1922 = vmatprep.subr.mxu0 0.0
        %1923 = vmatpush1.msra.mxu0 0.0
        %1924 = vmatprep.subr.mxu0 0.0
        %1925 = vmatpush1.msra.mxu0 0.0
        %1926 = vmatprep.subr.mxu0 0.0
        %1927 = vmatpush1.msra.mxu0 0.0
        %1928 = vmatprep.subr.mxu0 0.0
        %1929 = vmatpush1.msra.mxu0 0.0
        %1930 = vmatprep.subr.mxu0 0.0
        %1931 = vmatpush1.msra.mxu0 0.0
        %1932 = vmatprep.subr.mxu0 0.0
        %1933 = vmatpush1.msra.mxu0 0.0
        %1934 = vmatprep.subr.mxu0 0.0
        %1935 = vmatpush1.msra.mxu0 0.0
        %1936 = vmatprep.subr.mxu0 0.0
        %1937 = vmatpush1.msra.mxu0 0.0
        %1938 = vmatprep.subr.mxu0 0.0
        %1939 = vmatpush1.msra.mxu0 0.0
        %1940 = vmatprep.subr.mxu0 0.0
        %1941 = vmatpush1.msra.mxu0 0.0
        %1942 = vmatprep.subr.mxu0 0.0
        %1943 = vmatpush1.msra.mxu0 0.0
        %1944 = vmatprep.subr.mxu0 0.0
        %1945 = vmatpush1.msra.mxu0 0.0
        %1946 = vmatprep.subr.mxu0 0.0
        %1947 = vmatpush1.msra.mxu0 0.0
        %1948 = vmatprep.subr.mxu0 0.0
        %1949 = vmatpush1.msra.mxu0 0.0
        %1950 = vmatprep.subr.mxu0 0.0
        %1951 = vmatpush1.msra.mxu0 0.0
        %1952 = vmatprep.subr.mxu0 0.0
        %1953 = vmatpush1.msra.mxu0 0.0
        %1954 = vmatprep.subr.mxu0 0.0
        %1955 = vmatpush1.msra.mxu0 0.0
        %1956 = vmatprep.subr.mxu0 0.0
        %1957 = vmatpush1.msra.mxu0 0.0
        %1958 = vmatprep.subr.mxu0 0.0
        %1959 = vmatpush1.msra.mxu0 0.0
        %1960 = vmatprep.subr.mxu0 0.0
        %1961 = vmatpush1.msra.mxu0 0.0
        %1962 = vmatprep.subr.mxu0 0.0
        %1963 = vmatpush1.msra.mxu0 0.0
        %1964 = vmatprep.subr.mxu0 0.0
        %1965 = vmatpush1.msra.mxu0 0.0
        %1966 = vmatprep.subr.mxu0 0.0
        %1967 = vmatpush1.msra.mxu0 0.0
        %1968 = vmatprep.subr.mxu0 0.0
        %1969 = vmatpush1.msra.mxu0 0.0
        %1970 = vmatprep.subr.mxu0 0.0
        %1971 = vmatpush1.msra.mxu0 0.0
        %1972 = vmatprep.subr.mxu0 0.0
        %1973 = vmatpush1.msra.mxu0 0.0
        %1974 = vmatprep.mubr.f32.mxu0 0.0
        %v1975 = vand.u32 %v1728, 4294901760
        %v1976 = vsub.f32 %v1728, %v1975
        %1977 = vmatmul.mubr.f32.gmra.mrb[0].mxu0 %v1976
        %v1978 = vpop.f32.mrb[0].mxu0
        %v1979 = vadd.f32 %v1897, %v1978
        %v1980 = vpop.f32.mrb[0].mxu0
        %1981 = vmatprep.mubr.f32.mxu0 0.0
        %v1982 = vand.u32 %v1730, 4294901760
        %v1983 = vsub.f32 %v1730, %v1982
        %1984 = vmatmul.mubr.f32.gmra.mrb[0].mxu0 %v1983
        %v1985 = vpop.f32.mrb[0].mxu0
        %v1986 = vadd.f32 %v1903, %v1985
        %v1987 = vpop.f32.mrb[0].mxu0
        %1988 = vdwg.mxu0
        %1989 = vmatprep.subr.mxu0 0.0
        %v1990 = vand.u32 %v184, 4294901760
        %1991 = vmatpush1.msra.mxu0 %v1990
        %1992 = vmatprep.subr.mxu0 0.0
        %v1993 = vand.u32 %v185, 4294901760
        %1994 = vmatpush1.msra.mxu0 %v1993
        %1995 = vmatprep.subr.mxu0 0.0
        %1996 = vmatpush1.msra.mxu0 0.0
        %1997 = vmatprep.subr.mxu0 0.0
        %1998 = vmatpush1.msra.mxu0 0.0
        %1999 = vmatprep.subr.mxu0 0.0
        %2000 = vmatpush1.msra.mxu0 0.0
        %2001 = vmatprep.subr.mxu0 0.0
        %2002 = vmatpush1.msra.mxu0 0.0
        %2003 = vmatprep.subr.mxu0 0.0
        %2004 = vmatpush1.msra.mxu0 0.0
        %2005 = vmatprep.subr.mxu0 0.0
        %2006 = vmatpush1.msra.mxu0 0.0
        %2007 = vmatprep.subr.mxu0 0.0
        %2008 = vmatpush1.msra.mxu0 0.0
        %2009 = vmatprep.subr.mxu0 0.0
        %2010 = vmatpush1.msra.mxu0 0.0
        %2011 = vmatprep.subr.mxu0 0.0
        %2012 = vmatpush1.msra.mxu0 0.0
        %2013 = vmatprep.subr.mxu0 0.0
        %2014 = vmatpush1.msra.mxu0 0.0
        %2015 = vmatprep.subr.mxu0 0.0
        %2016 = vmatpush1.msra.mxu0 0.0
        %2017 = vmatprep.subr.mxu0 0.0
        %2018 = vmatpush1.msra.mxu0 0.0
        %2019 = vmatprep.subr.mxu0 0.0
        %2020 = vmatpush1.msra.mxu0 0.0
        %2021 = vmatprep.subr.mxu0 0.0
        %2022 = vmatpush1.msra.mxu0 0.0
        %2023 = vmatprep.subr.mxu0 0.0
        %2024 = vmatpush1.msra.mxu0 0.0
        %2025 = vmatprep.subr.mxu0 0.0
        %2026 = vmatpush1.msra.mxu0 0.0
        %2027 = vmatprep.subr.mxu0 0.0
        %2028 = vmatpush1.msra.mxu0 0.0
        %2029 = vmatprep.subr.mxu0 0.0
        %2030 = vmatpush1.msra.mxu0 0.0
        %2031 = vmatprep.subr.mxu0 0.0
        %2032 = vmatpush1.msra.mxu0 0.0
        %2033 = vmatprep.subr.mxu0 0.0
        %2034 = vmatpush1.msra.mxu0 0.0
        %2035 = vmatprep.subr.mxu0 0.0
        %2036 = vmatpush1.msra.mxu0 0.0
        %2037 = vmatprep.subr.mxu0 0.0
        %2038 = vmatpush1.msra.mxu0 0.0
        %2039 = vmatprep.subr.mxu0 0.0
        %2040 = vmatpush1.msra.mxu0 0.0
        %2041 = vmatprep.subr.mxu0 0.0
        %2042 = vmatpush1.msra.mxu0 0.0
        %2043 = vmatprep.subr.mxu0 0.0
        %2044 = vmatpush1.msra.mxu0 0.0
        %2045 = vmatprep.subr.mxu0 0.0
        %2046 = vmatpush1.msra.mxu0 0.0
        %2047 = vmatprep.subr.mxu0 0.0
        %2048 = vmatpush1.msra.mxu0 0.0
        %2049 = vmatprep.subr.mxu0 0.0
        %2050 = vmatpush1.msra.mxu0 0.0
        %2051 = vmatprep.subr.mxu0 0.0
        %2052 = vmatpush1.msra.mxu0 0.0
        %2053 = vmatprep.subr.mxu0 0.0
        %2054 = vmatpush1.msra.mxu0 0.0
        %2055 = vmatprep.mubr.f32.mxu0 0.0
        %v2056 = vand.u32 %v1728, 4294901760
        %v2057 = vsub.f32 %v1728, %v2056
        %v2058 = vand.u32 %v2057, 4294901760
        %2059 = vmatmul.mubr.f32.gmra.mrb[0].mxu0 %v2058
        %v2060 = vpop.f32.mrb[0].mxu0
        %v2061 = vadd.f32 %v1979, %v2060
        %v2062 = vpop.f32.mrb[0].mxu0
        %2063 = vmatprep.mubr.f32.mxu0 0.0
        %v2064 = vand.u32 %v1730, 4294901760
        %v2065 = vsub.f32 %v1730, %v2064
        %v2066 = vand.u32 %v2065, 4294901760
        %2067 = vmatmul.mubr.f32.gmra.mrb[0].mxu0 %v2066
        %v2068 = vpop.f32.mrb[0].mxu0
        %v2069 = vadd.f32 %v1986, %v2068
        %v2070 = vpop.f32.mrb[0].mxu0
        %2071 = vdwg.mxu0
        %2072 = vmatprep.subr.mxu0 0.0
        %v2073 = vand.u32 %v184, 4294901760
        %v2074 = vsub.f32 %v184, %v2073
        %v2075 = vand.u32 %v2074, 4294901760
        %2076 = vmatpush1.msra.mxu0 %v2075
        %2077 = vmatprep.subr.mxu0 0.0
        %v2078 = vand.u32 %v185, 4294901760
        %v2079 = vsub.f32 %v185, %v2078
        %v2080 = vand.u32 %v2079, 4294901760
        %2081 = vmatpush1.msra.mxu0 %v2080
        %2082 = vmatprep.subr.mxu0 0.0
        %2083 = vmatpush1.msra.mxu0 0.0
        %2084 = vmatprep.subr.mxu0 0.0
        %2085 = vmatpush1.msra.mxu0 0.0
        %2086 = vmatprep.subr.mxu0 0.0
        %2087 = vmatpush1.msra.mxu0 0.0
        %2088 = vmatprep.subr.mxu0 0.0
        %2089 = vmatpush1.msra.mxu0 0.0
        %2090 = vmatprep.subr.mxu0 0.0
        %2091 = vmatpush1.msra.mxu0 0.0
        %2092 = vmatprep.subr.mxu0 0.0
        %2093 = vmatpush1.msra.mxu0 0.0
        %2094 = vmatprep.subr.mxu0 0.0
        %2095 = vmatpush1.msra.mxu0 0.0
        %2096 = vmatprep.subr.mxu0 0.0
        %2097 = vmatpush1.msra.mxu0 0.0
        %2098 = vmatprep.subr.mxu0 0.0
        %2099 = vmatpush1.msra.mxu0 0.0
        %2100 = vmatprep.subr.mxu0 0.0
        %2101 = vmatpush1.msra.mxu0 0.0
        %2102 = vmatprep.subr.mxu0 0.0
        %2103 = vmatpush1.msra.mxu0 0.0
        %2104 = vmatprep.subr.mxu0 0.0
        %2105 = vmatpush1.msra.mxu0 0.0
        %2106 = vmatprep.subr.mxu0 0.0
        %2107 = vmatpush1.msra.mxu0 0.0
        %2108 = vmatprep.subr.mxu0 0.0
        %2109 = vmatpush1.msra.mxu0 0.0
        %2110 = vmatprep.subr.mxu0 0.0
        %2111 = vmatpush1.msra.mxu0 0.0
        %2112 = vmatprep.subr.mxu0 0.0
        %2113 = vmatpush1.msra.mxu0 0.0
        %2114 = vmatprep.subr.mxu0 0.0
        %2115 = vmatpush1.msra.mxu0 0.0
        %2116 = vmatprep.subr.mxu0 0.0
        %2117 = vmatpush1.msra.mxu0 0.0
        %2118 = vmatprep.subr.mxu0 0.0
        %2119 = vmatpush1.msra.mxu0 0.0
        %2120 = vmatprep.subr.mxu0 0.0
        %2121 = vmatpush1.msra.mxu0 0.0
        %2122 = vmatprep.subr.mxu0 0.0
        %2123 = vmatpush1.msra.mxu0 0.0
        %2124 = vmatprep.subr.mxu0 0.0
        %2125 = vmatpush1.msra.mxu0 0.0
        %2126 = vmatprep.subr.mxu0 0.0
        %2127 = vmatpush1.msra.mxu0 0.0
        %2128 = vmatprep.subr.mxu0 0.0
        %2129 = vmatpush1.msra.mxu0 0.0
        %2130 = vmatprep.subr.mxu0 0.0
        %2131 = vmatpush1.msra.mxu0 0.0
        %2132 = vmatprep.subr.mxu0 0.0
        %2133 = vmatpush1.msra.mxu0 0.0
        %2134 = vmatprep.subr.mxu0 0.0
        %2135 = vmatpush1.msra.mxu0 0.0
        %2136 = vmatprep.subr.mxu0 0.0
        %2137 = vmatpush1.msra.mxu0 0.0
        %2138 = vmatprep.subr.mxu0 0.0
        %2139 = vmatpush1.msra.mxu0 0.0
        %2140 = vmatprep.subr.mxu0 0.0
        %2141 = vmatpush1.msra.mxu0 0.0
        %2142 = vmatprep.mubr.f32.mxu0 0.0
        %v2143 = vand.u32 %v1728, 4294901760
        %2144 = vmatmul.mubr.f32.gmra.mrb[0].mxu0 %v2143
        %v2145 = vpop.f32.mrb[0].mxu0
        %v2146 = vadd.f32 %v2061, %v2145
        %v2147 = vpop.f32.mrb[0].mxu0
        %2148 = vmatprep.mubr.f32.mxu0 0.0
        %v2149 = vand.u32 %v1730, 4294901760
        %2150 = vmatmul.mubr.f32.gmra.mrb[0].mxu0 %v2149
        %v2151 = vpop.f32.mrb[0].mxu0
        %v2152 = vadd.f32 %v2069, %v2151
        %v2153 = vpop.f32.mrb[0].mxu0
        %2154 = vdwg.mxu0
        %2155 = vmatprep.subr.mxu0 0.0
        %v2156 = vand.u32 %v184, 4294901760
        %2157 = vmatpush1.msra.mxu0 %v2156
        %2158 = vmatprep.subr.mxu0 0.0
        %v2159 = vand.u32 %v185, 4294901760
        %2160 = vmatpush1.msra.mxu0 %v2159
        %2161 = vmatprep.subr.mxu0 0.0
        %2162 = vmatpush1.msra.mxu0 0.0
        %2163 = vmatprep.subr.mxu0 0.0
        %2164 = vmatpush1.msra.mxu0 0.0
        %2165 = vmatprep.subr.mxu0 0.0
        %2166 = vmatpush1.msra.mxu0 0.0
        %2167 = vmatprep.subr.mxu0 0.0
        %2168 = vmatpush1.msra.mxu0 0.0
        %2169 = vmatprep.subr.mxu0 0.0
        %2170 = vmatpush1.msra.mxu0 0.0
        %2171 = vmatprep.subr.mxu0 0.0
        %2172 = vmatpush1.msra.mxu0 0.0
        %2173 = vmatprep.subr.mxu0 0.0
        %2174 = vmatpush1.msra.mxu0 0.0
        %2175 = vmatprep.subr.mxu0 0.0
        %2176 = vmatpush1.msra.mxu0 0.0
        %2177 = vmatprep.subr.mxu0 0.0
        %2178 = vmatpush1.msra.mxu0 0.0
        %2179 = vmatprep.subr.mxu0 0.0
        %2180 = vmatpush1.msra.mxu0 0.0
        %2181 = vmatprep.subr.mxu0 0.0
        %2182 = vmatpush1.msra.mxu0 0.0
        %2183 = vmatprep.subr.mxu0 0.0
        %2184 = vmatpush1.msra.mxu0 0.0
        %2185 = vmatprep.subr.mxu0 0.0
        %2186 = vmatpush1.msra.mxu0 0.0
        %2187 = vmatprep.subr.mxu0 0.0
        %2188 = vmatpush1.msra.mxu0 0.0
        %2189 = vmatprep.subr.mxu0 0.0
        %2190 = vmatpush1.msra.mxu0 0.0
        %2191 = vmatprep.subr.mxu0 0.0
        %2192 = vmatpush1.msra.mxu0 0.0
        %2193 = vmatprep.subr.mxu0 0.0
        %2194 = vmatpush1.msra.mxu0 0.0
        %2195 = vmatprep.subr.mxu0 0.0
        %2196 = vmatpush1.msra.mxu0 0.0
        %2197 = vmatprep.subr.mxu0 0.0
        %2198 = vmatpush1.msra.mxu0 0.0
        %2199 = vmatprep.subr.mxu0 0.0
        %2200 = vmatpush1.msra.mxu0 0.0
        %2201 = vmatprep.subr.mxu0 0.0
        %2202 = vmatpush1.msra.mxu0 0.0
        %2203 = vmatprep.subr.mxu0 0.0
        %2204 = vmatpush1.msra.mxu0 0.0
        %2205 = vmatprep.subr.mxu0 0.0
        %2206 = vmatpush1.msra.mxu0 0.0
        %2207 = vmatprep.subr.mxu0 0.0
        %2208 = vmatpush1.msra.mxu0 0.0
        %2209 = vmatprep.subr.mxu0 0.0
        %2210 = vmatpush1.msra.mxu0 0.0
        %2211 = vmatprep.subr.mxu0 0.0
        %2212 = vmatpush1.msra.mxu0 0.0
        %2213 = vmatprep.subr.mxu0 0.0
        %2214 = vmatpush1.msra.mxu0 0.0
        %2215 = vmatprep.subr.mxu0 0.0
        %2216 = vmatpush1.msra.mxu0 0.0
        %2217 = vmatprep.subr.mxu0 0.0
        %2218 = vmatpush1.msra.mxu0 0.0
        %2219 = vmatprep.subr.mxu0 0.0
        %2220 = vmatpush1.msra.mxu0 0.0
        %2221 = vmatprep.mubr.f32.mxu0 0.0
        %v2222 = vand.u32 %v1728, 4294901760
        %2223 = vmatmul.mubr.f32.gmra.mrb[0].mxu0 %v2222
        %v2224 = vpop.f32.mrb[0].mxu0
        %v2225 = vadd.f32 %v2146, %v2224
        %v2226 = vpop.f32.mrb[0].mxu0
        %2227 = vmatprep.mubr.f32.mxu0 0.0
        %v2228 = vand.u32 %v1730, 4294901760
        %2229 = vmatmul.mubr.f32.gmra.mrb[0].mxu0 %v2228
        %v2230 = vpop.f32.mrb[0].mxu0
        %v2231 = vadd.f32 %v2152, %v2230
        %v2232 = vpop.f32.mrb[0].mxu0
        %2233 = vdwg.mxu0
        %s2234 = scalar_lea.vmem %s182, 16
        %2235 = vst.msk [vmem:[%s2234] sm:$0xff] %vm1210, %v2225
        %2236 = vst.msk [vmem:[%s2234 + $0x8] sm:$0x7f] %vm1212, %v2231
        %s2237 = scalar_lea.vmem %s150, 32 [#allocation2]
        %v2238 = vld [vmem:[%s2237] sm:$0xff]
        %v2239 = vld [vmem:[%s2237 + $0x8] sm:$0xff]
        %v2242 = vrot.slane %v2238, 1
        %v2243 = vrot.slane %v2239, 1
        %v2244 = vsel %vm193, %v2242, %v2243
        %v2245 = vsel %vm197, %v2244, 0
        %v2247 = vsel %vm197, %v2243, 0
        %2249 = vmatprep.subr.mxu0 0.0
        %v2250 = vand.u32 %v187, 4294901760
        %2251 = vmatpush1.msra.mxu0 %v2250
        %2252 = vmatprep.subr.mxu0 0.0
        %v2253 = vand.u32 %v188, 4294901760
        %2254 = vmatpush1.msra.mxu0 %v2253
        %2255 = vmatprep.subr.mxu0 0.0
        %2256 = vmatpush1.msra.mxu0 0.0
        %2257 = vmatprep.subr.mxu0 0.0
        %2258 = vmatpush1.msra.mxu0 0.0
        %2259 = vmatprep.subr.mxu0 0.0
        %2260 = vmatpush1.msra.mxu0 0.0
        %2261 = vmatprep.subr.mxu0 0.0
        %2262 = vmatpush1.msra.mxu0 0.0
        %2263 = vmatprep.subr.mxu0 0.0
        %2264 = vmatpush1.msra.mxu0 0.0
        %2265 = vmatprep.subr.mxu0 0.0
        %2266 = vmatpush1.msra.mxu0 0.0
        %2267 = vmatprep.subr.mxu0 0.0
        %2268 = vmatpush1.msra.mxu0 0.0
        %2269 = vmatprep.subr.mxu0 0.0
        %2270 = vmatpush1.msra.mxu0 0.0
        %2271 = vmatprep.subr.mxu0 0.0
        %2272 = vmatpush1.msra.mxu0 0.0
        %2273 = vmatprep.subr.mxu0 0.0
        %2274 = vmatpush1.msra.mxu0 0.0
        %2275 = vmatprep.subr.mxu0 0.0
        %2276 = vmatpush1.msra.mxu0 0.0
        %2277 = vmatprep.subr.mxu0 0.0
        %2278 = vmatpush1.msra.mxu0 0.0
        %2279 = vmatprep.subr.mxu0 0.0
        %2280 = vmatpush1.msra.mxu0 0.0
        %2281 = vmatprep.subr.mxu0 0.0
        %2282 = vmatpush1.msra.mxu0 0.0
        %2283 = vmatprep.subr.mxu0 0.0
        %2284 = vmatpush1.msra.mxu0 0.0
        %2285 = vmatprep.subr.mxu0 0.0
        %2286 = vmatpush1.msra.mxu0 0.0
        %2287 = vmatprep.subr.mxu0 0.0
        %2288 = vmatpush1.msra.mxu0 0.0
        %2289 = vmatprep.subr.mxu0 0.0
        %2290 = vmatpush1.msra.mxu0 0.0
        %2291 = vmatprep.subr.mxu0 0.0
        %2292 = vmatpush1.msra.mxu0 0.0
        %2293 = vmatprep.subr.mxu0 0.0
        %2294 = vmatpush1.msra.mxu0 0.0
        %2295 = vmatprep.subr.mxu0 0.0
        %2296 = vmatpush1.msra.mxu0 0.0
        %2297 = vmatprep.subr.mxu0 0.0
        %2298 = vmatpush1.msra.mxu0 0.0
        %2299 = vmatprep.subr.mxu0 0.0
        %2300 = vmatpush1.msra.mxu0 0.0
        %2301 = vmatprep.subr.mxu0 0.0
        %2302 = vmatpush1.msra.mxu0 0.0
        %2303 = vmatprep.subr.mxu0 0.0
        %2304 = vmatpush1.msra.mxu0 0.0
        %2305 = vmatprep.subr.mxu0 0.0
        %2306 = vmatpush1.msra.mxu0 0.0
        %2307 = vmatprep.subr.mxu0 0.0
        %2308 = vmatpush1.msra.mxu0 0.0
        %2309 = vmatprep.subr.mxu0 0.0
        %2310 = vmatpush1.msra.mxu0 0.0
        %2311 = vmatprep.subr.mxu0 0.0
        %2312 = vmatpush1.msra.mxu0 0.0
        %2313 = vmatprep.subr.mxu0 0.0
        %2314 = vmatpush1.msra.mxu0 0.0
        %2315 = vmatprep.mubr.f32.mxu0 0.0
        %v2316 = vand.u32 %v2245, 4294901760
        %v2317 = vsub.f32 %v2245, %v2316
        %v2318 = vand.u32 %v2317, 4294901760
        %v2319 = vsub.f32 %v2317, %v2318
        %v2320 = vand.u32 %v2319, 4294901760
        %2321 = vmatmul.mubr.f32.gmra.mrb[0].mxu0 %v2320
        %v2322 = vpop.f32.mrb[0].mxu0
        %v2323 = vadd.f32 0.0, %v2322
        %v2324 = vpop.f32.mrb[0].mxu0
        %2325 = vmatprep.mubr.f32.mxu0 0.0
        %v2326 = vand.u32 %v2247, 4294901760
        %v2327 = vsub.f32 %v2247, %v2326
        %v2328 = vand.u32 %v2327, 4294901760
        %v2329 = vsub.f32 %v2327, %v2328
        %v2330 = vand.u32 %v2329, 4294901760
        %2331 = vmatmul.mubr.f32.gmra.mrb[0].mxu0 %v2330
        %v2332 = vpop.f32.mrb[0].mxu0
        %v2333 = vadd.f32 0.0, %v2332
        %v2334 = vpop.f32.mrb[0].mxu0
        %2335 = vdwg.mxu0
        %2336 = vmatprep.subr.mxu0 0.0
        %v2337 = vand.u32 %v187, 4294901760
        %v2338 = vsub.f32 %v187, %v2337
        %v2339 = vand.u32 %v2338, 4294901760
        %v2340 = vsub.f32 %v2338, %v2339
        %v2341 = vand.u32 %v2340, 4294901760
        %2342 = vmatpush1.msra.mxu0 %v2341
        %2343 = vmatprep.subr.mxu0 0.0
        %v2344 = vand.u32 %v188, 4294901760
        %v2345 = vsub.f32 %v188, %v2344
        %v2346 = vand.u32 %v2345, 4294901760
        %v2347 = vsub.f32 %v2345, %v2346
        %v2348 = vand.u32 %v2347, 4294901760
        %2349 = vmatpush1.msra.mxu0 %v2348
        %2350 = vmatprep.subr.mxu0 0.0
        %2351 = vmatpush1.msra.mxu0 0.0
        %2352 = vmatprep.subr.mxu0 0.0
        %2353 = vmatpush1.msra.mxu0 0.0
        %2354 = vmatprep.subr.mxu0 0.0
        %2355 = vmatpush1.msra.mxu0 0.0
        %2356 = vmatprep.subr.mxu0 0.0
        %2357 = vmatpush1.msra.mxu0 0.0
        %2358 = vmatprep.subr.mxu0 0.0
        %2359 = vmatpush1.msra.mxu0 0.0
        %2360 = vmatprep.subr.mxu0 0.0
        %2361 = vmatpush1.msra.mxu0 0.0
        %2362 = vmatprep.subr.mxu0 0.0
        %2363 = vmatpush1.msra.mxu0 0.0
        %2364 = vmatprep.subr.mxu0 0.0
        %2365 = vmatpush1.msra.mxu0 0.0
        %2366 = vmatprep.subr.mxu0 0.0
        %2367 = vmatpush1.msra.mxu0 0.0
        %2368 = vmatprep.subr.mxu0 0.0
        %2369 = vmatpush1.msra.mxu0 0.0
        %2370 = vmatprep.subr.mxu0 0.0
        %2371 = vmatpush1.msra.mxu0 0.0
        %2372 = vmatprep.subr.mxu0 0.0
        %2373 = vmatpush1.msra.mxu0 0.0
        %2374 = vmatprep.subr.mxu0 0.0
        %2375 = vmatpush1.msra.mxu0 0.0
        %2376 = vmatprep.subr.mxu0 0.0
        %2377 = vmatpush1.msra.mxu0 0.0
        %2378 = vmatprep.subr.mxu0 0.0
        %2379 = vmatpush1.msra.mxu0 0.0
        %2380 = vmatprep.subr.mxu0 0.0
        %2381 = vmatpush1.msra.mxu0 0.0
        %2382 = vmatprep.subr.mxu0 0.0
        %2383 = vmatpush1.msra.mxu0 0.0
        %2384 = vmatprep.subr.mxu0 0.0
        %2385 = vmatpush1.msra.mxu0 0.0
        %2386 = vmatprep.subr.mxu0 0.0
        %2387 = vmatpush1.msra.mxu0 0.0
        %2388 = vmatprep.subr.mxu0 0.0
        %2389 = vmatpush1.msra.mxu0 0.0
        %2390 = vmatprep.subr.mxu0 0.0
        %2391 = vmatpush1.msra.mxu0 0.0
        %2392 = vmatprep.subr.mxu0 0.0
        %2393 = vmatpush1.msra.mxu0 0.0
        %2394 = vmatprep.subr.mxu0 0.0
        %2395 = vmatpush1.msra.mxu0 0.0
        %2396 = vmatprep.subr.mxu0 0.0
        %2397 = vmatpush1.msra.mxu0 0.0
        %2398 = vmatprep.subr.mxu0 0.0
        %2399 = vmatpush1.msra.mxu0 0.0
        %2400 = vmatprep.subr.mxu0 0.0
        %2401 = vmatpush1.msra.mxu0 0.0
        %2402 = vmatprep.subr.mxu0 0.0
        %2403 = vmatpush1.msra.mxu0 0.0
        %2404 = vmatprep.subr.mxu0 0.0
        %2405 = vmatpush1.msra.mxu0 0.0
        %2406 = vmatprep.subr.mxu0 0.0
        %2407 = vmatpush1.msra.mxu0 0.0
        %2408 = vmatprep.subr.mxu0 0.0
        %2409 = vmatpush1.msra.mxu0 0.0
        %2410 = vmatprep.mubr.f32.mxu0 0.0
        %v2411 = vand.u32 %v2245, 4294901760
        %2412 = vmatmul.mubr.f32.gmra.mrb[0].mxu0 %v2411
        %v2413 = vpop.f32.mrb[0].mxu0
        %v2414 = vadd.f32 %v2323, %v2413
        %v2415 = vpop.f32.mrb[0].mxu0
        %2416 = vmatprep.mubr.f32.mxu0 0.0
        %v2417 = vand.u32 %v2247, 4294901760
        %2418 = vmatmul.mubr.f32.gmra.mrb[0].mxu0 %v2417
        %v2419 = vpop.f32.mrb[0].mxu0
        %v2420 = vadd.f32 %v2333, %v2419
        %v2421 = vpop.f32.mrb[0].mxu0
        %2422 = vdwg.mxu0
        %2423 = vmatprep.subr.mxu0 0.0
        %v2424 = vand.u32 %v187, 4294901760
        %v2425 = vsub.f32 %v187, %v2424
        %2426 = vmatpush1.msra.mxu0 %v2425
        %2427 = vmatprep.subr.mxu0 0.0
        %v2428 = vand.u32 %v188, 4294901760
        %v2429 = vsub.f32 %v188, %v2428
        %2430 = vmatpush1.msra.mxu0 %v2429
        %2431 = vmatprep.subr.mxu0 0.0
        %2432 = vmatpush1.msra.mxu0 0.0
        %2433 = vmatprep.subr.mxu0 0.0
        %2434 = vmatpush1.msra.mxu0 0.0
        %2435 = vmatprep.subr.mxu0 0.0
        %2436 = vmatpush1.msra.mxu0 0.0
        %2437 = vmatprep.subr.mxu0 0.0
        %2438 = vmatpush1.msra.mxu0 0.0
        %2439 = vmatprep.subr.mxu0 0.0
        %2440 = vmatpush1.msra.mxu0 0.0
        %2441 = vmatprep.subr.mxu0 0.0
        %2442 = vmatpush1.msra.mxu0 0.0
        %2443 = vmatprep.subr.mxu0 0.0
        %2444 = vmatpush1.msra.mxu0 0.0
        %2445 = vmatprep.subr.mxu0 0.0
        %2446 = vmatpush1.msra.mxu0 0.0
        %2447 = vmatprep.subr.mxu0 0.0
        %2448 = vmatpush1.msra.mxu0 0.0
        %2449 = vmatprep.subr.mxu0 0.0
        %2450 = vmatpush1.msra.mxu0 0.0
        %2451 = vmatprep.subr.mxu0 0.0
        %2452 = vmatpush1.msra.mxu0 0.0
        %2453 = vmatprep.subr.mxu0 0.0
        %2454 = vmatpush1.msra.mxu0 0.0
        %2455 = vmatprep.subr.mxu0 0.0
        %2456 = vmatpush1.msra.mxu0 0.0
        %2457 = vmatprep.subr.mxu0 0.0
        %2458 = vmatpush1.msra.mxu0 0.0
        %2459 = vmatprep.subr.mxu0 0.0
        %2460 = vmatpush1.msra.mxu0 0.0
        %2461 = vmatprep.subr.mxu0 0.0
        %2462 = vmatpush1.msra.mxu0 0.0
        %2463 = vmatprep.subr.mxu0 0.0
        %2464 = vmatpush1.msra.mxu0 0.0
        %2465 = vmatprep.subr.mxu0 0.0
        %2466 = vmatpush1.msra.mxu0 0.0
        %2467 = vmatprep.subr.mxu0 0.0
        %2468 = vmatpush1.msra.mxu0 0.0
        %2469 = vmatprep.subr.mxu0 0.0
        %2470 = vmatpush1.msra.mxu0 0.0
        %2471 = vmatprep.subr.mxu0 0.0
        %2472 = vmatpush1.msra.mxu0 0.0
        %2473 = vmatprep.subr.mxu0 0.0
        %2474 = vmatpush1.msra.mxu0 0.0
        %2475 = vmatprep.subr.mxu0 0.0
        %2476 = vmatpush1.msra.mxu0 0.0
        %2477 = vmatprep.subr.mxu0 0.0
        %2478 = vmatpush1.msra.mxu0 0.0
        %2479 = vmatprep.subr.mxu0 0.0
        %2480 = vmatpush1.msra.mxu0 0.0
        %2481 = vmatprep.subr.mxu0 0.0
        %2482 = vmatpush1.msra.mxu0 0.0
        %2483 = vmatprep.subr.mxu0 0.0
        %2484 = vmatpush1.msra.mxu0 0.0
        %2485 = vmatprep.subr.mxu0 0.0
        %2486 = vmatpush1.msra.mxu0 0.0
        %2487 = vmatprep.subr.mxu0 0.0
        %2488 = vmatpush1.msra.mxu0 0.0
        %2489 = vmatprep.subr.mxu0 0.0
        %2490 = vmatpush1.msra.mxu0 0.0
        %2491 = vmatprep.mubr.f32.mxu0 0.0
        %v2492 = vand.u32 %v2245, 4294901760
        %v2493 = vsub.f32 %v2245, %v2492
        %2494 = vmatmul.mubr.f32.gmra.mrb[0].mxu0 %v2493
        %v2495 = vpop.f32.mrb[0].mxu0
        %v2496 = vadd.f32 %v2414, %v2495
        %v2497 = vpop.f32.mrb[0].mxu0
        %2498 = vmatprep.mubr.f32.mxu0 0.0
        %v2499 = vand.u32 %v2247, 4294901760
        %v2500 = vsub.f32 %v2247, %v2499
        %2501 = vmatmul.mubr.f32.gmra.mrb[0].mxu0 %v2500
        %v2502 = vpop.f32.mrb[0].mxu0
        %v2503 = vadd.f32 %v2420, %v2502
        %v2504 = vpop.f32.mrb[0].mxu0
        %2505 = vdwg.mxu0
        %2506 = vmatprep.subr.mxu0 0.0
        %v2507 = vand.u32 %v187, 4294901760
        %2508 = vmatpush1.msra.mxu0 %v2507
        %2509 = vmatprep.subr.mxu0 0.0
        %v2510 = vand.u32 %v188, 4294901760
        %2511 = vmatpush1.msra.mxu0 %v2510
        %2512 = vmatprep.subr.mxu0 0.0
        %2513 = vmatpush1.msra.mxu0 0.0
        %2514 = vmatprep.subr.mxu0 0.0
        %2515 = vmatpush1.msra.mxu0 0.0
        %2516 = vmatprep.subr.mxu0 0.0
        %2517 = vmatpush1.msra.mxu0 0.0
        %2518 = vmatprep.subr.mxu0 0.0
        %2519 = vmatpush1.msra.mxu0 0.0
        %2520 = vmatprep.subr.mxu0 0.0
        %2521 = vmatpush1.msra.mxu0 0.0
        %2522 = vmatprep.subr.mxu0 0.0
        %2523 = vmatpush1.msra.mxu0 0.0
        %2524 = vmatprep.subr.mxu0 0.0
        %2525 = vmatpush1.msra.mxu0 0.0
        %2526 = vmatprep.subr.mxu0 0.0
        %2527 = vmatpush1.msra.mxu0 0.0
        %2528 = vmatprep.subr.mxu0 0.0
        %2529 = vmatpush1.msra.mxu0 0.0
        %2530 = vmatprep.subr.mxu0 0.0
        %2531 = vmatpush1.msra.mxu0 0.0
        %2532 = vmatprep.subr.mxu0 0.0
        %2533 = vmatpush1.msra.mxu0 0.0
        %2534 = vmatprep.subr.mxu0 0.0
        %2535 = vmatpush1.msra.mxu0 0.0
        %2536 = vmatprep.subr.mxu0 0.0
        %2537 = vmatpush1.msra.mxu0 0.0
        %2538 = vmatprep.subr.mxu0 0.0
        %2539 = vmatpush1.msra.mxu0 0.0
        %2540 = vmatprep.subr.mxu0 0.0
        %2541 = vmatpush1.msra.mxu0 0.0
        %2542 = vmatprep.subr.mxu0 0.0
        %2543 = vmatpush1.msra.mxu0 0.0
        %2544 = vmatprep.subr.mxu0 0.0
        %2545 = vmatpush1.msra.mxu0 0.0
        %2546 = vmatprep.subr.mxu0 0.0
        %2547 = vmatpush1.msra.mxu0 0.0
        %2548 = vmatprep.subr.mxu0 0.0
        %2549 = vmatpush1.msra.mxu0 0.0
        %2550 = vmatprep.subr.mxu0 0.0
        %2551 = vmatpush1.msra.mxu0 0.0
        %2552 = vmatprep.subr.mxu0 0.0
        %2553 = vmatpush1.msra.mxu0 0.0
        %2554 = vmatprep.subr.mxu0 0.0
        %2555 = vmatpush1.msra.mxu0 0.0
        %2556 = vmatprep.subr.mxu0 0.0
        %2557 = vmatpush1.msra.mxu0 0.0
        %2558 = vmatprep.subr.mxu0 0.0
        %2559 = vmatpush1.msra.mxu0 0.0
        %2560 = vmatprep.subr.mxu0 0.0
        %2561 = vmatpush1.msra.mxu0 0.0
        %2562 = vmatprep.subr.mxu0 0.0
        %2563 = vmatpush1.msra.mxu0 0.0
        %2564 = vmatprep.subr.mxu0 0.0
        %2565 = vmatpush1.msra.mxu0 0.0
        %2566 = vmatprep.subr.mxu0 0.0
        %2567 = vmatpush1.msra.mxu0 0.0
        %2568 = vmatprep.subr.mxu0 0.0
        %2569 = vmatpush1.msra.mxu0 0.0
        %2570 = vmatprep.subr.mxu0 0.0
        %2571 = vmatpush1.msra.mxu0 0.0
        %2572 = vmatprep.mubr.f32.mxu0 0.0
        %v2573 = vand.u32 %v2245, 4294901760
        %v2574 = vsub.f32 %v2245, %v2573
        %v2575 = vand.u32 %v2574, 4294901760
        %2576 = vmatmul.mubr.f32.gmra.mrb[0].mxu0 %v2575
        %v2577 = vpop.f32.mrb[0].mxu0
        %v2578 = vadd.f32 %v2496, %v2577
        %v2579 = vpop.f32.mrb[0].mxu0
        %2580 = vmatprep.mubr.f32.mxu0 0.0
        %v2581 = vand.u32 %v2247, 4294901760
        %v2582 = vsub.f32 %v2247, %v2581
        %v2583 = vand.u32 %v2582, 4294901760
        %2584 = vmatmul.mubr.f32.gmra.mrb[0].mxu0 %v2583
        %v2585 = vpop.f32.mrb[0].mxu0
        %v2586 = vadd.f32 %v2503, %v2585
        %v2587 = vpop.f32.mrb[0].mxu0
        %2588 = vdwg.mxu0
        %2589 = vmatprep.subr.mxu0 0.0
        %v2590 = vand.u32 %v187, 4294901760
        %v2591 = vsub.f32 %v187, %v2590
        %v2592 = vand.u32 %v2591, 4294901760
        %2593 = vmatpush1.msra.mxu0 %v2592
        %2594 = vmatprep.subr.mxu0 0.0
        %v2595 = vand.u32 %v188, 4294901760
        %v2596 = vsub.f32 %v188, %v2595
        %v2597 = vand.u32 %v2596, 4294901760
        %2598 = vmatpush1.msra.mxu0 %v2597
        %2599 = vmatprep.subr.mxu0 0.0
        %2600 = vmatpush1.msra.mxu0 0.0
        %2601 = vmatprep.subr.mxu0 0.0
        %2602 = vmatpush1.msra.mxu0 0.0
        %2603 = vmatprep.subr.mxu0 0.0
        %2604 = vmatpush1.msra.mxu0 0.0
        %2605 = vmatprep.subr.mxu0 0.0
        %2606 = vmatpush1.msra.mxu0 0.0
        %2607 = vmatprep.subr.mxu0 0.0
        %2608 = vmatpush1.msra.mxu0 0.0
        %2609 = vmatprep.subr.mxu0 0.0
        %2610 = vmatpush1.msra.mxu0 0.0
        %2611 = vmatprep.subr.mxu0 0.0
        %2612 = vmatpush1.msra.mxu0 0.0
        %2613 = vmatprep.subr.mxu0 0.0
        %2614 = vmatpush1.msra.mxu0 0.0
        %2615 = vmatprep.subr.mxu0 0.0
        %2616 = vmatpush1.msra.mxu0 0.0
        %2617 = vmatprep.subr.mxu0 0.0
        %2618 = vmatpush1.msra.mxu0 0.0
        %2619 = vmatprep.subr.mxu0 0.0
        %2620 = vmatpush1.msra.mxu0 0.0
        %2621 = vmatprep.subr.mxu0 0.0
        %2622 = vmatpush1.msra.mxu0 0.0
        %2623 = vmatprep.subr.mxu0 0.0
        %2624 = vmatpush1.msra.mxu0 0.0
        %2625 = vmatprep.subr.mxu0 0.0
        %2626 = vmatpush1.msra.mxu0 0.0
        %2627 = vmatprep.subr.mxu0 0.0
        %2628 = vmatpush1.msra.mxu0 0.0
        %2629 = vmatprep.subr.mxu0 0.0
        %2630 = vmatpush1.msra.mxu0 0.0
        %2631 = vmatprep.subr.mxu0 0.0
        %2632 = vmatpush1.msra.mxu0 0.0
        %2633 = vmatprep.subr.mxu0 0.0
        %2634 = vmatpush1.msra.mxu0 0.0
        %2635 = vmatprep.subr.mxu0 0.0
        %2636 = vmatpush1.msra.mxu0 0.0
        %2637 = vmatprep.subr.mxu0 0.0
        %2638 = vmatpush1.msra.mxu0 0.0
        %2639 = vmatprep.subr.mxu0 0.0
        %2640 = vmatpush1.msra.mxu0 0.0
        %2641 = vmatprep.subr.mxu0 0.0
        %2642 = vmatpush1.msra.mxu0 0.0
        %2643 = vmatprep.subr.mxu0 0.0
        %2644 = vmatpush1.msra.mxu0 0.0
        %2645 = vmatprep.subr.mxu0 0.0
        %2646 = vmatpush1.msra.mxu0 0.0
        %2647 = vmatprep.subr.mxu0 0.0
        %2648 = vmatpush1.msra.mxu0 0.0
        %2649 = vmatprep.subr.mxu0 0.0
        %2650 = vmatpush1.msra.mxu0 0.0
        %2651 = vmatprep.subr.mxu0 0.0
        %2652 = vmatpush1.msra.mxu0 0.0
        %2653 = vmatprep.subr.mxu0 0.0
        %2654 = vmatpush1.msra.mxu0 0.0
        %2655 = vmatprep.subr.mxu0 0.0
        %2656 = vmatpush1.msra.mxu0 0.0
        %2657 = vmatprep.subr.mxu0 0.0
        %2658 = vmatpush1.msra.mxu0 0.0
        %2659 = vmatprep.mubr.f32.mxu0 0.0
        %v2660 = vand.u32 %v2245, 4294901760
        %2661 = vmatmul.mubr.f32.gmra.mrb[0].mxu0 %v2660
        %v2662 = vpop.f32.mrb[0].mxu0
        %v2663 = vadd.f32 %v2578, %v2662
        %v2664 = vpop.f32.mrb[0].mxu0
        %2665 = vmatprep.mubr.f32.mxu0 0.0
        %v2666 = vand.u32 %v2247, 4294901760
        %2667 = vmatmul.mubr.f32.gmra.mrb[0].mxu0 %v2666
        %v2668 = vpop.f32.mrb[0].mxu0
        %v2669 = vadd.f32 %v2586, %v2668
        %v2670 = vpop.f32.mrb[0].mxu0
        %2671 = vdwg.mxu0
        %2672 = vmatprep.subr.mxu0 0.0
        %v2673 = vand.u32 %v187, 4294901760
        %2674 = vmatpush1.msra.mxu0 %v2673
        %2675 = vmatprep.subr.mxu0 0.0
        %v2676 = vand.u32 %v188, 4294901760
        %2677 = vmatpush1.msra.mxu0 %v2676
        %2678 = vmatprep.subr.mxu0 0.0
        %2679 = vmatpush1.msra.mxu0 0.0
        %2680 = vmatprep.subr.mxu0 0.0
        %2681 = vmatpush1.msra.mxu0 0.0
        %2682 = vmatprep.subr.mxu0 0.0
        %2683 = vmatpush1.msra.mxu0 0.0
        %2684 = vmatprep.subr.mxu0 0.0
        %2685 = vmatpush1.msra.mxu0 0.0
        %2686 = vmatprep.subr.mxu0 0.0
        %2687 = vmatpush1.msra.mxu0 0.0
        %2688 = vmatprep.subr.mxu0 0.0
        %2689 = vmatpush1.msra.mxu0 0.0
        %2690 = vmatprep.subr.mxu0 0.0
        %2691 = vmatpush1.msra.mxu0 0.0
        %2692 = vmatprep.subr.mxu0 0.0
        %2693 = vmatpush1.msra.mxu0 0.0
        %2694 = vmatprep.subr.mxu0 0.0
        %2695 = vmatpush1.msra.mxu0 0.0
        %2696 = vmatprep.subr.mxu0 0.0
        %2697 = vmatpush1.msra.mxu0 0.0
        %2698 = vmatprep.subr.mxu0 0.0
        %2699 = vmatpush1.msra.mxu0 0.0
        %2700 = vmatprep.subr.mxu0 0.0
        %2701 = vmatpush1.msra.mxu0 0.0
        %2702 = vmatprep.subr.mxu0 0.0
        %2703 = vmatpush1.msra.mxu0 0.0
        %2704 = vmatprep.subr.mxu0 0.0
        %2705 = vmatpush1.msra.mxu0 0.0
        %2706 = vmatprep.subr.mxu0 0.0
        %2707 = vmatpush1.msra.mxu0 0.0
        %2708 = vmatprep.subr.mxu0 0.0
        %2709 = vmatpush1.msra.mxu0 0.0
        %2710 = vmatprep.subr.mxu0 0.0
        %2711 = vmatpush1.msra.mxu0 0.0
        %2712 = vmatprep.subr.mxu0 0.0
        %2713 = vmatpush1.msra.mxu0 0.0
        %2714 = vmatprep.subr.mxu0 0.0
        %2715 = vmatpush1.msra.mxu0 0.0
        %2716 = vmatprep.subr.mxu0 0.0
        %2717 = vmatpush1.msra.mxu0 0.0
        %2718 = vmatprep.subr.mxu0 0.0
        %2719 = vmatpush1.msra.mxu0 0.0
        %2720 = vmatprep.subr.mxu0 0.0
        %2721 = vmatpush1.msra.mxu0 0.0
        %2722 = vmatprep.subr.mxu0 0.0
        %2723 = vmatpush1.msra.mxu0 0.0
        %2724 = vmatprep.subr.mxu0 0.0
        %2725 = vmatpush1.msra.mxu0 0.0
        %2726 = vmatprep.subr.mxu0 0.0
        %2727 = vmatpush1.msra.mxu0 0.0
        %2728 = vmatprep.subr.mxu0 0.0
        %2729 = vmatpush1.msra.mxu0 0.0
        %2730 = vmatprep.subr.mxu0 0.0
        %2731 = vmatpush1.msra.mxu0 0.0
        %2732 = vmatprep.subr.mxu0 0.0
        %2733 = vmatpush1.msra.mxu0 0.0
        %2734 = vmatprep.subr.mxu0 0.0
        %2735 = vmatpush1.msra.mxu0 0.0
        %2736 = vmatprep.subr.mxu0 0.0
        %2737 = vmatpush1.msra.mxu0 0.0
        %2738 = vmatprep.mubr.f32.mxu0 0.0
        %v2739 = vand.u32 %v2245, 4294901760
        %2740 = vmatmul.mubr.f32.gmra.mrb[0].mxu0 %v2739
        %v2741 = vpop.f32.mrb[0].mxu0
        %v2742 = vadd.f32 %v2663, %v2741
        %v2743 = vpop.f32.mrb[0].mxu0
        %2744 = vmatprep.mubr.f32.mxu0 0.0
        %v2745 = vand.u32 %v2247, 4294901760
        %2746 = vmatmul.mubr.f32.gmra.mrb[0].mxu0 %v2745
        %v2747 = vpop.f32.mrb[0].mxu0
        %v2748 = vadd.f32 %v2669, %v2747
        %v2749 = vpop.f32.mrb[0].mxu0
        %2750 = vdwg.mxu0
        %v2751 = vsel %vm197, %v2238, 0
        %v2753 = vsel %vm197, %v2239, 0
        %2755 = vmatprep.subr.mxu0 0.0
        %v2756 = vand.u32 %v184, 4294901760
        %2757 = vmatpush1.msra.mxu0 %v2756
        %2758 = vmatprep.subr.mxu0 0.0
        %v2759 = vand.u32 %v185, 4294901760
        %2760 = vmatpush1.msra.mxu0 %v2759
        %2761 = vmatprep.subr.mxu0 0.0
        %2762 = vmatpush1.msra.mxu0 0.0
        %2763 = vmatprep.subr.mxu0 0.0
        %2764 = vmatpush1.msra.mxu0 0.0
        %2765 = vmatprep.subr.mxu0 0.0
        %2766 = vmatpush1.msra.mxu0 0.0
        %2767 = vmatprep.subr.mxu0 0.0
        %2768 = vmatpush1.msra.mxu0 0.0
        %2769 = vmatprep.subr.mxu0 0.0
        %2770 = vmatpush1.msra.mxu0 0.0
        %2771 = vmatprep.subr.mxu0 0.0
        %2772 = vmatpush1.msra.mxu0 0.0
        %2773 = vmatprep.subr.mxu0 0.0
        %2774 = vmatpush1.msra.mxu0 0.0
        %2775 = vmatprep.subr.mxu0 0.0
        %2776 = vmatpush1.msra.mxu0 0.0
        %2777 = vmatprep.subr.mxu0 0.0
        %2778 = vmatpush1.msra.mxu0 0.0
        %2779 = vmatprep.subr.mxu0 0.0
        %2780 = vmatpush1.msra.mxu0 0.0
        %2781 = vmatprep.subr.mxu0 0.0
        %2782 = vmatpush1.msra.mxu0 0.0
        %2783 = vmatprep.subr.mxu0 0.0
        %2784 = vmatpush1.msra.mxu0 0.0
        %2785 = vmatprep.subr.mxu0 0.0
        %2786 = vmatpush1.msra.mxu0 0.0
        %2787 = vmatprep.subr.mxu0 0.0
        %2788 = vmatpush1.msra.mxu0 0.0
        %2789 = vmatprep.subr.mxu0 0.0
        %2790 = vmatpush1.msra.mxu0 0.0
        %2791 = vmatprep.subr.mxu0 0.0
        %2792 = vmatpush1.msra.mxu0 0.0
        %2793 = vmatprep.subr.mxu0 0.0
        %2794 = vmatpush1.msra.mxu0 0.0
        %2795 = vmatprep.subr.mxu0 0.0
        %2796 = vmatpush1.msra.mxu0 0.0
        %2797 = vmatprep.subr.mxu0 0.0
        %2798 = vmatpush1.msra.mxu0 0.0
        %2799 = vmatprep.subr.mxu0 0.0
        %2800 = vmatpush1.msra.mxu0 0.0
        %2801 = vmatprep.subr.mxu0 0.0
        %2802 = vmatpush1.msra.mxu0 0.0
        %2803 = vmatprep.subr.mxu0 0.0
        %2804 = vmatpush1.msra.mxu0 0.0
        %2805 = vmatprep.subr.mxu0 0.0
        %2806 = vmatpush1.msra.mxu0 0.0
        %2807 = vmatprep.subr.mxu0 0.0
        %2808 = vmatpush1.msra.mxu0 0.0
        %2809 = vmatprep.subr.mxu0 0.0
        %2810 = vmatpush1.msra.mxu0 0.0
        %2811 = vmatprep.subr.mxu0 0.0
        %2812 = vmatpush1.msra.mxu0 0.0
        %2813 = vmatprep.subr.mxu0 0.0
        %2814 = vmatpush1.msra.mxu0 0.0
        %2815 = vmatprep.subr.mxu0 0.0
        %2816 = vmatpush1.msra.mxu0 0.0
        %2817 = vmatprep.subr.mxu0 0.0
        %2818 = vmatpush1.msra.mxu0 0.0
        %2819 = vmatprep.subr.mxu0 0.0
        %2820 = vmatpush1.msra.mxu0 0.0
        %2821 = vmatprep.mubr.f32.mxu0 0.0
        %v2822 = vand.u32 %v2751, 4294901760
        %v2823 = vsub.f32 %v2751, %v2822
        %v2824 = vand.u32 %v2823, 4294901760
        %v2825 = vsub.f32 %v2823, %v2824
        %v2826 = vand.u32 %v2825, 4294901760
        %2827 = vmatmul.mubr.f32.gmra.mrb[0].mxu0 %v2826
        %v2828 = vpop.f32.mrb[0].mxu0
        %v2829 = vadd.f32 %v2742, %v2828
        %v2830 = vpop.f32.mrb[0].mxu0
        %2831 = vmatprep.mubr.f32.mxu0 0.0
        %v2832 = vand.u32 %v2753, 4294901760
        %v2833 = vsub.f32 %v2753, %v2832
        %v2834 = vand.u32 %v2833, 4294901760
        %v2835 = vsub.f32 %v2833, %v2834
        %v2836 = vand.u32 %v2835, 4294901760
        %2837 = vmatmul.mubr.f32.gmra.mrb[0].mxu0 %v2836
        %v2838 = vpop.f32.mrb[0].mxu0
        %v2839 = vadd.f32 %v2748, %v2838
        %v2840 = vpop.f32.mrb[0].mxu0
        %2841 = vdwg.mxu0
        %2842 = vmatprep.subr.mxu0 0.0
        %v2843 = vand.u32 %v184, 4294901760
        %v2844 = vsub.f32 %v184, %v2843
        %v2845 = vand.u32 %v2844, 4294901760
        %v2846 = vsub.f32 %v2844, %v2845
        %v2847 = vand.u32 %v2846, 4294901760
        %2848 = vmatpush1.msra.mxu0 %v2847
        %2849 = vmatprep.subr.mxu0 0.0
        %v2850 = vand.u32 %v185, 4294901760
        %v2851 = vsub.f32 %v185, %v2850
        %v2852 = vand.u32 %v2851, 4294901760
        %v2853 = vsub.f32 %v2851, %v2852
        %v2854 = vand.u32 %v2853, 4294901760
        %2855 = vmatpush1.msra.mxu0 %v2854
        %2856 = vmatprep.subr.mxu0 0.0
        %2857 = vmatpush1.msra.mxu0 0.0
        %2858 = vmatprep.subr.mxu0 0.0
        %2859 = vmatpush1.msra.mxu0 0.0
        %2860 = vmatprep.subr.mxu0 0.0
        %2861 = vmatpush1.msra.mxu0 0.0
        %2862 = vmatprep.subr.mxu0 0.0
        %2863 = vmatpush1.msra.mxu0 0.0
        %2864 = vmatprep.subr.mxu0 0.0
        %2865 = vmatpush1.msra.mxu0 0.0
        %2866 = vmatprep.subr.mxu0 0.0
        %2867 = vmatpush1.msra.mxu0 0.0
        %2868 = vmatprep.subr.mxu0 0.0
        %2869 = vmatpush1.msra.mxu0 0.0
        %2870 = vmatprep.subr.mxu0 0.0
        %2871 = vmatpush1.msra.mxu0 0.0
        %2872 = vmatprep.subr.mxu0 0.0
        %2873 = vmatpush1.msra.mxu0 0.0
        %2874 = vmatprep.subr.mxu0 0.0
        %2875 = vmatpush1.msra.mxu0 0.0
        %2876 = vmatprep.subr.mxu0 0.0
        %2877 = vmatpush1.msra.mxu0 0.0
        %2878 = vmatprep.subr.mxu0 0.0
        %2879 = vmatpush1.msra.mxu0 0.0
        %2880 = vmatprep.subr.mxu0 0.0
        %2881 = vmatpush1.msra.mxu0 0.0
        %2882 = vmatprep.subr.mxu0 0.0
        %2883 = vmatpush1.msra.mxu0 0.0
        %2884 = vmatprep.subr.mxu0 0.0
        %2885 = vmatpush1.msra.mxu0 0.0
        %2886 = vmatprep.subr.mxu0 0.0
        %2887 = vmatpush1.msra.mxu0 0.0
        %2888 = vmatprep.subr.mxu0 0.0
        %2889 = vmatpush1.msra.mxu0 0.0
        %2890 = vmatprep.subr.mxu0 0.0
        %2891 = vmatpush1.msra.mxu0 0.0
        %2892 = vmatprep.subr.mxu0 0.0
        %2893 = vmatpush1.msra.mxu0 0.0
        %2894 = vmatprep.subr.mxu0 0.0
        %2895 = vmatpush1.msra.mxu0 0.0
        %2896 = vmatprep.subr.mxu0 0.0
        %2897 = vmatpush1.msra.mxu0 0.0
        %2898 = vmatprep.subr.mxu0 0.0
        %2899 = vmatpush1.msra.mxu0 0.0
        %2900 = vmatprep.subr.mxu0 0.0
        %2901 = vmatpush1.msra.mxu0 0.0
        %2902 = vmatprep.subr.mxu0 0.0
        %2903 = vmatpush1.msra.mxu0 0.0
        %2904 = vmatprep.subr.mxu0 0.0
        %2905 = vmatpush1.msra.mxu0 0.0
        %2906 = vmatprep.subr.mxu0 0.0
        %2907 = vmatpush1.msra.mxu0 0.0
        %2908 = vmatprep.subr.mxu0 0.0
        %2909 = vmatpush1.msra.mxu0 0.0
        %2910 = vmatprep.subr.mxu0 0.0
        %2911 = vmatpush1.msra.mxu0 0.0
        %2912 = vmatprep.subr.mxu0 0.0
        %2913 = vmatpush1.msra.mxu0 0.0
        %2914 = vmatprep.subr.mxu0 0.0
        %2915 = vmatpush1.msra.mxu0 0.0
        %2916 = vmatprep.mubr.f32.mxu0 0.0
        %v2917 = vand.u32 %v2751, 4294901760
        %2918 = vmatmul.mubr.f32.gmra.mrb[0].mxu0 %v2917
        %v2919 = vpop.f32.mrb[0].mxu0
        %v2920 = vadd.f32 %v2829, %v2919
        %v2921 = vpop.f32.mrb[0].mxu0
        %2922 = vmatprep.mubr.f32.mxu0 0.0
        %v2923 = vand.u32 %v2753, 4294901760
        %2924 = vmatmul.mubr.f32.gmra.mrb[0].mxu0 %v2923
        %v2925 = vpop.f32.mrb[0].mxu0
        %v2926 = vadd.f32 %v2839, %v2925
        %v2927 = vpop.f32.mrb[0].mxu0
        %2928 = vdwg.mxu0
        %2929 = vmatprep.subr.mxu0 0.0
        %v2930 = vand.u32 %v184, 4294901760
        %v2931 = vsub.f32 %v184, %v2930
        %2932 = vmatpush1.msra.mxu0 %v2931
        %2933 = vmatprep.subr.mxu0 0.0
        %v2934 = vand.u32 %v185, 4294901760
        %v2935 = vsub.f32 %v185, %v2934
        %2936 = vmatpush1.msra.mxu0 %v2935
        %2937 = vmatprep.subr.mxu0 0.0
        %2938 = vmatpush1.msra.mxu0 0.0
        %2939 = vmatprep.subr.mxu0 0.0
        %2940 = vmatpush1.msra.mxu0 0.0
        %2941 = vmatprep.subr.mxu0 0.0
        %2942 = vmatpush1.msra.mxu0 0.0
        %2943 = vmatprep.subr.mxu0 0.0
        %2944 = vmatpush1.msra.mxu0 0.0
        %2945 = vmatprep.subr.mxu0 0.0
        %2946 = vmatpush1.msra.mxu0 0.0
        %2947 = vmatprep.subr.mxu0 0.0
        %2948 = vmatpush1.msra.mxu0 0.0
        %2949 = vmatprep.subr.mxu0 0.0
        %2950 = vmatpush1.msra.mxu0 0.0
        %2951 = vmatprep.subr.mxu0 0.0
        %2952 = vmatpush1.msra.mxu0 0.0
        %2953 = vmatprep.subr.mxu0 0.0
        %2954 = vmatpush1.msra.mxu0 0.0
        %2955 = vmatprep.subr.mxu0 0.0
        %2956 = vmatpush1.msra.mxu0 0.0
        %2957 = vmatprep.subr.mxu0 0.0
        %2958 = vmatpush1.msra.mxu0 0.0
        %2959 = vmatprep.subr.mxu0 0.0
        %2960 = vmatpush1.msra.mxu0 0.0
        %2961 = vmatprep.subr.mxu0 0.0
        %2962 = vmatpush1.msra.mxu0 0.0
        %2963 = vmatprep.subr.mxu0 0.0
        %2964 = vmatpush1.msra.mxu0 0.0
        %2965 = vmatprep.subr.mxu0 0.0
        %2966 = vmatpush1.msra.mxu0 0.0
        %2967 = vmatprep.subr.mxu0 0.0
        %2968 = vmatpush1.msra.mxu0 0.0
        %2969 = vmatprep.subr.mxu0 0.0
        %2970 = vmatpush1.msra.mxu0 0.0
        %2971 = vmatprep.subr.mxu0 0.0
        %2972 = vmatpush1.msra.mxu0 0.0
        %2973 = vmatprep.subr.mxu0 0.0
        %2974 = vmatpush1.msra.mxu0 0.0
        %2975 = vmatprep.subr.mxu0 0.0
        %2976 = vmatpush1.msra.mxu0 0.0
        %2977 = vmatprep.subr.mxu0 0.0
        %2978 = vmatpush1.msra.mxu0 0.0
        %2979 = vmatprep.subr.mxu0 0.0
        %2980 = vmatpush1.msra.mxu0 0.0
        %2981 = vmatprep.subr.mxu0 0.0
        %2982 = vmatpush1.msra.mxu0 0.0
        %2983 = vmatprep.subr.mxu0 0.0
        %2984 = vmatpush1.msra.mxu0 0.0
        %2985 = vmatprep.subr.mxu0 0.0
        %2986 = vmatpush1.msra.mxu0 0.0
        %2987 = vmatprep.subr.mxu0 0.0
        %2988 = vmatpush1.msra.mxu0 0.0
        %2989 = vmatprep.subr.mxu0 0.0
        %2990 = vmatpush1.msra.mxu0 0.0
        %2991 = vmatprep.subr.mxu0 0.0
        %2992 = vmatpush1.msra.mxu0 0.0
        %2993 = vmatprep.subr.mxu0 0.0
        %2994 = vmatpush1.msra.mxu0 0.0
        %2995 = vmatprep.subr.mxu0 0.0
        %2996 = vmatpush1.msra.mxu0 0.0
        %2997 = vmatprep.mubr.f32.mxu0 0.0
        %v2998 = vand.u32 %v2751, 4294901760
        %v2999 = vsub.f32 %v2751, %v2998
        %3000 = vmatmul.mubr.f32.gmra.mrb[0].mxu0 %v2999
        %v3001 = vpop.f32.mrb[0].mxu0
        %v3002 = vadd.f32 %v2920, %v3001
        %v3003 = vpop.f32.mrb[0].mxu0
        %3004 = vmatprep.mubr.f32.mxu0 0.0
        %v3005 = vand.u32 %v2753, 4294901760
        %v3006 = vsub.f32 %v2753, %v3005
        %3007 = vmatmul.mubr.f32.gmra.mrb[0].mxu0 %v3006
        %v3008 = vpop.f32.mrb[0].mxu0
        %v3009 = vadd.f32 %v2926, %v3008
        %v3010 = vpop.f32.mrb[0].mxu0
        %3011 = vdwg.mxu0
        %3012 = vmatprep.subr.mxu0 0.0
        %v3013 = vand.u32 %v184, 4294901760
        %3014 = vmatpush1.msra.mxu0 %v3013
        %3015 = vmatprep.subr.mxu0 0.0
        %v3016 = vand.u32 %v185, 4294901760
        %3017 = vmatpush1.msra.mxu0 %v3016
        %3018 = vmatprep.subr.mxu0 0.0
        %3019 = vmatpush1.msra.mxu0 0.0
        %3020 = vmatprep.subr.mxu0 0.0
        %3021 = vmatpush1.msra.mxu0 0.0
        %3022 = vmatprep.subr.mxu0 0.0
        %3023 = vmatpush1.msra.mxu0 0.0
        %3024 = vmatprep.subr.mxu0 0.0
        %3025 = vmatpush1.msra.mxu0 0.0
        %3026 = vmatprep.subr.mxu0 0.0
        %3027 = vmatpush1.msra.mxu0 0.0
        %3028 = vmatprep.subr.mxu0 0.0
        %3029 = vmatpush1.msra.mxu0 0.0
        %3030 = vmatprep.subr.mxu0 0.0
        %3031 = vmatpush1.msra.mxu0 0.0
        %3032 = vmatprep.subr.mxu0 0.0
        %3033 = vmatpush1.msra.mxu0 0.0
        %3034 = vmatprep.subr.mxu0 0.0
        %3035 = vmatpush1.msra.mxu0 0.0
        %3036 = vmatprep.subr.mxu0 0.0
        %3037 = vmatpush1.msra.mxu0 0.0
        %3038 = vmatprep.subr.mxu0 0.0
        %3039 = vmatpush1.msra.mxu0 0.0
        %3040 = vmatprep.subr.mxu0 0.0
        %3041 = vmatpush1.msra.mxu0 0.0
        %3042 = vmatprep.subr.mxu0 0.0
        %3043 = vmatpush1.msra.mxu0 0.0
        %3044 = vmatprep.subr.mxu0 0.0
        %3045 = vmatpush1.msra.mxu0 0.0
        %3046 = vmatprep.subr.mxu0 0.0
        %3047 = vmatpush1.msra.mxu0 0.0
        %3048 = vmatprep.subr.mxu0 0.0
        %3049 = vmatpush1.msra.mxu0 0.0
        %3050 = vmatprep.subr.mxu0 0.0
        %3051 = vmatpush1.msra.mxu0 0.0
        %3052 = vmatprep.subr.mxu0 0.0
        %3053 = vmatpush1.msra.mxu0 0.0
        %3054 = vmatprep.subr.mxu0 0.0
        %3055 = vmatpush1.msra.mxu0 0.0
        %3056 = vmatprep.subr.mxu0 0.0
        %3057 = vmatpush1.msra.mxu0 0.0
        %3058 = vmatprep.subr.mxu0 0.0
        %3059 = vmatpush1.msra.mxu0 0.0
        %3060 = vmatprep.subr.mxu0 0.0
        %3061 = vmatpush1.msra.mxu0 0.0
        %3062 = vmatprep.subr.mxu0 0.0
        %3063 = vmatpush1.msra.mxu0 0.0
        %3064 = vmatprep.subr.mxu0 0.0
        %3065 = vmatpush1.msra.mxu0 0.0
        %3066 = vmatprep.subr.mxu0 0.0
        %3067 = vmatpush1.msra.mxu0 0.0
        %3068 = vmatprep.subr.mxu0 0.0
        %3069 = vmatpush1.msra.mxu0 0.0
        %3070 = vmatprep.subr.mxu0 0.0
        %3071 = vmatpush1.msra.mxu0 0.0
        %3072 = vmatprep.subr.mxu0 0.0
        %3073 = vmatpush1.msra.mxu0 0.0
        %3074 = vmatprep.subr.mxu0 0.0
        %3075 = vmatpush1.msra.mxu0 0.0
        %3076 = vmatprep.subr.mxu0 0.0
        %3077 = vmatpush1.msra.mxu0 0.0
        %3078 = vmatprep.mubr.f32.mxu0 0.0
        %v3079 = vand.u32 %v2751, 4294901760
        %v3080 = vsub.f32 %v2751, %v3079
        %v3081 = vand.u32 %v3080, 4294901760
        %3082 = vmatmul.mubr.f32.gmra.mrb[0].mxu0 %v3081
        %v3083 = vpop.f32.mrb[0].mxu0
        %v3084 = vadd.f32 %v3002, %v3083
        %v3085 = vpop.f32.mrb[0].mxu0
        %3086 = vmatprep.mubr.f32.mxu0 0.0
        %v3087 = vand.u32 %v2753, 4294901760
        %v3088 = vsub.f32 %v2753, %v3087
        %v3089 = vand.u32 %v3088, 4294901760
        %3090 = vmatmul.mubr.f32.gmra.mrb[0].mxu0 %v3089
        %v3091 = vpop.f32.mrb[0].mxu0
        %v3092 = vadd.f32 %v3009, %v3091
        %v3093 = vpop.f32.mrb[0].mxu0
        %3094 = vdwg.mxu0
        %3095 = vmatprep.subr.mxu0 0.0
        %v3096 = vand.u32 %v184, 4294901760
        %v3097 = vsub.f32 %v184, %v3096
        %v3098 = vand.u32 %v3097, 4294901760
        %3099 = vmatpush1.msra.mxu0 %v3098
        %3100 = vmatprep.subr.mxu0 0.0
        %v3101 = vand.u32 %v185, 4294901760
        %v3102 = vsub.f32 %v185, %v3101
        %v3103 = vand.u32 %v3102, 4294901760
        %3104 = vmatpush1.msra.mxu0 %v3103
        %3105 = vmatprep.subr.mxu0 0.0
        %3106 = vmatpush1.msra.mxu0 0.0
        %3107 = vmatprep.subr.mxu0 0.0
        %3108 = vmatpush1.msra.mxu0 0.0
        %3109 = vmatprep.subr.mxu0 0.0
        %3110 = vmatpush1.msra.mxu0 0.0
        %3111 = vmatprep.subr.mxu0 0.0
        %3112 = vmatpush1.msra.mxu0 0.0
        %3113 = vmatprep.subr.mxu0 0.0
        %3114 = vmatpush1.msra.mxu0 0.0
        %3115 = vmatprep.subr.mxu0 0.0
        %3116 = vmatpush1.msra.mxu0 0.0
        %3117 = vmatprep.subr.mxu0 0.0
        %3118 = vmatpush1.msra.mxu0 0.0
        %3119 = vmatprep.subr.mxu0 0.0
        %3120 = vmatpush1.msra.mxu0 0.0
        %3121 = vmatprep.subr.mxu0 0.0
        %3122 = vmatpush1.msra.mxu0 0.0
        %3123 = vmatprep.subr.mxu0 0.0
        %3124 = vmatpush1.msra.mxu0 0.0
        %3125 = vmatprep.subr.mxu0 0.0
        %3126 = vmatpush1.msra.mxu0 0.0
        %3127 = vmatprep.subr.mxu0 0.0
        %3128 = vmatpush1.msra.mxu0 0.0
        %3129 = vmatprep.subr.mxu0 0.0
        %3130 = vmatpush1.msra.mxu0 0.0
        %3131 = vmatprep.subr.mxu0 0.0
        %3132 = vmatpush1.msra.mxu0 0.0
        %3133 = vmatprep.subr.mxu0 0.0
        %3134 = vmatpush1.msra.mxu0 0.0
        %3135 = vmatprep.subr.mxu0 0.0
        %3136 = vmatpush1.msra.mxu0 0.0
        %3137 = vmatprep.subr.mxu0 0.0
        %3138 = vmatpush1.msra.mxu0 0.0
        %3139 = vmatprep.subr.mxu0 0.0
        %3140 = vmatpush1.msra.mxu0 0.0
        %3141 = vmatprep.subr.mxu0 0.0
        %3142 = vmatpush1.msra.mxu0 0.0
        %3143 = vmatprep.subr.mxu0 0.0
        %3144 = vmatpush1.msra.mxu0 0.0
        %3145 = vmatprep.subr.mxu0 0.0
        %3146 = vmatpush1.msra.mxu0 0.0
        %3147 = vmatprep.subr.mxu0 0.0
        %3148 = vmatpush1.msra.mxu0 0.0
        %3149 = vmatprep.subr.mxu0 0.0
        %3150 = vmatpush1.msra.mxu0 0.0
        %3151 = vmatprep.subr.mxu0 0.0
        %3152 = vmatpush1.msra.mxu0 0.0
        %3153 = vmatprep.subr.mxu0 0.0
        %3154 = vmatpush1.msra.mxu0 0.0
        %3155 = vmatprep.subr.mxu0 0.0
        %3156 = vmatpush1.msra.mxu0 0.0
        %3157 = vmatprep.subr.mxu0 0.0
        %3158 = vmatpush1.msra.mxu0 0.0
        %3159 = vmatprep.subr.mxu0 0.0
        %3160 = vmatpush1.msra.mxu0 0.0
        %3161 = vmatprep.subr.mxu0 0.0
        %3162 = vmatpush1.msra.mxu0 0.0
        %3163 = vmatprep.subr.mxu0 0.0
        %3164 = vmatpush1.msra.mxu0 0.0
        %3165 = vmatprep.mubr.f32.mxu0 0.0
        %v3166 = vand.u32 %v2751, 4294901760
        %3167 = vmatmul.mubr.f32.gmra.mrb[0].mxu0 %v3166
        %v3168 = vpop.f32.mrb[0].mxu0
        %v3169 = vadd.f32 %v3084, %v3168
        %v3170 = vpop.f32.mrb[0].mxu0
        %3171 = vmatprep.mubr.f32.mxu0 0.0
        %v3172 = vand.u32 %v2753, 4294901760
        %3173 = vmatmul.mubr.f32.gmra.mrb[0].mxu0 %v3172
        %v3174 = vpop.f32.mrb[0].mxu0
        %v3175 = vadd.f32 %v3092, %v3174
        %v3176 = vpop.f32.mrb[0].mxu0
        %3177 = vdwg.mxu0
        %3178 = vmatprep.subr.mxu0 0.0
        %v3179 = vand.u32 %v184, 4294901760
        %3180 = vmatpush1.msra.mxu0 %v3179
        %3181 = vmatprep.subr.mxu0 0.0
        %v3182 = vand.u32 %v185, 4294901760
        %3183 = vmatpush1.msra.mxu0 %v3182
        %3184 = vmatprep.subr.mxu0 0.0
        %3185 = vmatpush1.msra.mxu0 0.0
        %3186 = vmatprep.subr.mxu0 0.0
        %3187 = vmatpush1.msra.mxu0 0.0
        %3188 = vmatprep.subr.mxu0 0.0
        %3189 = vmatpush1.msra.mxu0 0.0
        %3190 = vmatprep.subr.mxu0 0.0
        %3191 = vmatpush1.msra.mxu0 0.0
        %3192 = vmatprep.subr.mxu0 0.0
        %3193 = vmatpush1.msra.mxu0 0.0
        %3194 = vmatprep.subr.mxu0 0.0
        %3195 = vmatpush1.msra.mxu0 0.0
        %3196 = vmatprep.subr.mxu0 0.0
        %3197 = vmatpush1.msra.mxu0 0.0
        %3198 = vmatprep.subr.mxu0 0.0
        %3199 = vmatpush1.msra.mxu0 0.0
        %3200 = vmatprep.subr.mxu0 0.0
        %3201 = vmatpush1.msra.mxu0 0.0
        %3202 = vmatprep.subr.mxu0 0.0
        %3203 = vmatpush1.msra.mxu0 0.0
        %3204 = vmatprep.subr.mxu0 0.0
        %3205 = vmatpush1.msra.mxu0 0.0
        %3206 = vmatprep.subr.mxu0 0.0
        %3207 = vmatpush1.msra.mxu0 0.0
        %3208 = vmatprep.subr.mxu0 0.0
        %3209 = vmatpush1.msra.mxu0 0.0
        %3210 = vmatprep.subr.mxu0 0.0
        %3211 = vmatpush1.msra.mxu0 0.0
        %3212 = vmatprep.subr.mxu0 0.0
        %3213 = vmatpush1.msra.mxu0 0.0
        %3214 = vmatprep.subr.mxu0 0.0
        %3215 = vmatpush1.msra.mxu0 0.0
        %3216 = vmatprep.subr.mxu0 0.0
        %3217 = vmatpush1.msra.mxu0 0.0
        %3218 = vmatprep.subr.mxu0 0.0
        %3219 = vmatpush1.msra.mxu0 0.0
        %3220 = vmatprep.subr.mxu0 0.0
        %3221 = vmatpush1.msra.mxu0 0.0
        %3222 = vmatprep.subr.mxu0 0.0
        %3223 = vmatpush1.msra.mxu0 0.0
        %3224 = vmatprep.subr.mxu0 0.0
        %3225 = vmatpush1.msra.mxu0 0.0
        %3226 = vmatprep.subr.mxu0 0.0
        %3227 = vmatpush1.msra.mxu0 0.0
        %3228 = vmatprep.subr.mxu0 0.0
        %3229 = vmatpush1.msra.mxu0 0.0
        %3230 = vmatprep.subr.mxu0 0.0
        %3231 = vmatpush1.msra.mxu0 0.0
        %3232 = vmatprep.subr.mxu0 0.0
        %3233 = vmatpush1.msra.mxu0 0.0
        %3234 = vmatprep.subr.mxu0 0.0
        %3235 = vmatpush1.msra.mxu0 0.0
        %3236 = vmatprep.subr.mxu0 0.0
        %3237 = vmatpush1.msra.mxu0 0.0
        %3238 = vmatprep.subr.mxu0 0.0
        %3239 = vmatpush1.msra.mxu0 0.0
        %3240 = vmatprep.subr.mxu0 0.0
        %3241 = vmatpush1.msra.mxu0 0.0
        %3242 = vmatprep.subr.mxu0 0.0
        %3243 = vmatpush1.msra.mxu0 0.0
        %3244 = vmatprep.mubr.f32.mxu0 0.0
        %v3245 = vand.u32 %v2751, 4294901760
        %3246 = vmatmul.mubr.f32.gmra.mrb[0].mxu0 %v3245
        %v3247 = vpop.f32.mrb[0].mxu0
        %v3248 = vadd.f32 %v3169, %v3247
        %v3249 = vpop.f32.mrb[0].mxu0
        %3250 = vmatprep.mubr.f32.mxu0 0.0
        %v3251 = vand.u32 %v2753, 4294901760
        %3252 = vmatmul.mubr.f32.gmra.mrb[0].mxu0 %v3251
        %v3253 = vpop.f32.mrb[0].mxu0
        %v3254 = vadd.f32 %v3175, %v3253
        %v3255 = vpop.f32.mrb[0].mxu0
        %3256 = vdwg.mxu0
        %s3257 = scalar_lea.vmem %s182, 32
        %3258 = vst.msk [vmem:[%s3257] sm:$0xff] %vm1210, %v3248
        %3259 = vst.msk [vmem:[%s3257 + $0x8] sm:$0x7f] %vm1212, %v3254
        %s3260 = scalar_lea.vmem %s150, 48 [#allocation2]
        %v3261 = vld [vmem:[%s3260] sm:$0xff]
        %v3262 = vld [vmem:[%s3260 + $0x8] sm:$0xff]
        %v3265 = vrot.slane %v3261, 1
        %v3266 = vrot.slane %v3262, 1
        %v3267 = vsel %vm193, %v3265, %v3266
        %v3268 = vsel %vm197, %v3267, 0
        %v3270 = vsel %vm197, %v3266, 0
        %3272 = vmatprep.subr.mxu0 0.0
        %v3273 = vand.u32 %v187, 4294901760
        %3274 = vmatpush1.msra.mxu0 %v3273
        %3275 = vmatprep.subr.mxu0 0.0
        %v3276 = vand.u32 %v188, 4294901760
        %3277 = vmatpush1.msra.mxu0 %v3276
        %3278 = vmatprep.subr.mxu0 0.0
        %3279 = vmatpush1.msra.mxu0 0.0
        %3280 = vmatprep.subr.mxu0 0.0
        %3281 = vmatpush1.msra.mxu0 0.0
        %3282 = vmatprep.subr.mxu0 0.0
        %3283 = vmatpush1.msra.mxu0 0.0
        %3284 = vmatprep.subr.mxu0 0.0
        %3285 = vmatpush1.msra.mxu0 0.0
        %3286 = vmatprep.subr.mxu0 0.0
        %3287 = vmatpush1.msra.mxu0 0.0
        %3288 = vmatprep.subr.mxu0 0.0
        %3289 = vmatpush1.msra.mxu0 0.0
        %3290 = vmatprep.subr.mxu0 0.0
        %3291 = vmatpush1.msra.mxu0 0.0
        %3292 = vmatprep.subr.mxu0 0.0
        %3293 = vmatpush1.msra.mxu0 0.0
        %3294 = vmatprep.subr.mxu0 0.0
        %3295 = vmatpush1.msra.mxu0 0.0
        %3296 = vmatprep.subr.mxu0 0.0
        %3297 = vmatpush1.msra.mxu0 0.0
        %3298 = vmatprep.subr.mxu0 0.0
        %3299 = vmatpush1.msra.mxu0 0.0
        %3300 = vmatprep.subr.mxu0 0.0
        %3301 = vmatpush1.msra.mxu0 0.0
        %3302 = vmatprep.subr.mxu0 0.0
        %3303 = vmatpush1.msra.mxu0 0.0
        %3304 = vmatprep.subr.mxu0 0.0
        %3305 = vmatpush1.msra.mxu0 0.0
        %3306 = vmatprep.subr.mxu0 0.0
        %3307 = vmatpush1.msra.mxu0 0.0
        %3308 = vmatprep.subr.mxu0 0.0
        %3309 = vmatpush1.msra.mxu0 0.0
        %3310 = vmatprep.subr.mxu0 0.0
        %3311 = vmatpush1.msra.mxu0 0.0
        %3312 = vmatprep.subr.mxu0 0.0
        %3313 = vmatpush1.msra.mxu0 0.0
        %3314 = vmatprep.subr.mxu0 0.0
        %3315 = vmatpush1.msra.mxu0 0.0
        %3316 = vmatprep.subr.mxu0 0.0
        %3317 = vmatpush1.msra.mxu0 0.0
        %3318 = vmatprep.subr.mxu0 0.0
        %3319 = vmatpush1.msra.mxu0 0.0
        %3320 = vmatprep.subr.mxu0 0.0
        %3321 = vmatpush1.msra.mxu0 0.0
        %3322 = vmatprep.subr.mxu0 0.0
        %3323 = vmatpush1.msra.mxu0 0.0
        %3324 = vmatprep.subr.mxu0 0.0
        %3325 = vmatpush1.msra.mxu0 0.0
        %3326 = vmatprep.subr.mxu0 0.0
        %3327 = vmatpush1.msra.mxu0 0.0
        %3328 = vmatprep.subr.mxu0 0.0
        %3329 = vmatpush1.msra.mxu0 0.0
        %3330 = vmatprep.subr.mxu0 0.0
        %3331 = vmatpush1.msra.mxu0 0.0
        %3332 = vmatprep.subr.mxu0 0.0
        %3333 = vmatpush1.msra.mxu0 0.0
        %3334 = vmatprep.subr.mxu0 0.0
        %3335 = vmatpush1.msra.mxu0 0.0
        %3336 = vmatprep.subr.mxu0 0.0
        %3337 = vmatpush1.msra.mxu0 0.0
        %3338 = vmatprep.mubr.f32.mxu0 0.0
        %v3339 = vand.u32 %v3268, 4294901760
        %v3340 = vsub.f32 %v3268, %v3339
        %v3341 = vand.u32 %v3340, 4294901760
        %v3342 = vsub.f32 %v3340, %v3341
        %v3343 = vand.u32 %v3342, 4294901760
        %3344 = vmatmul.mubr.f32.gmra.mrb[0].mxu0 %v3343
        %v3345 = vpop.f32.mrb[0].mxu0
        %v3346 = vadd.f32 0.0, %v3345
        %v3347 = vpop.f32.mrb[0].mxu0
        %3348 = vmatprep.mubr.f32.mxu0 0.0
        %v3349 = vand.u32 %v3270, 4294901760
        %v3350 = vsub.f32 %v3270, %v3349
        %v3351 = vand.u32 %v3350, 4294901760
        %v3352 = vsub.f32 %v3350, %v3351
        %v3353 = vand.u32 %v3352, 4294901760
        %3354 = vmatmul.mubr.f32.gmra.mrb[0].mxu0 %v3353
        %v3355 = vpop.f32.mrb[0].mxu0
        %v3356 = vadd.f32 0.0, %v3355
        %v3357 = vpop.f32.mrb[0].mxu0
        %3358 = vdwg.mxu0
        %3359 = vmatprep.subr.mxu0 0.0
        %v3360 = vand.u32 %v187, 4294901760
        %v3361 = vsub.f32 %v187, %v3360
        %v3362 = vand.u32 %v3361, 4294901760
        %v3363 = vsub.f32 %v3361, %v3362
        %v3364 = vand.u32 %v3363, 4294901760
        %3365 = vmatpush1.msra.mxu0 %v3364
        %3366 = vmatprep.subr.mxu0 0.0
        %v3367 = vand.u32 %v188, 4294901760
        %v3368 = vsub.f32 %v188, %v3367
        %v3369 = vand.u32 %v3368, 4294901760
        %v3370 = vsub.f32 %v3368, %v3369
        %v3371 = vand.u32 %v3370, 4294901760
        %3372 = vmatpush1.msra.mxu0 %v3371
        %3373 = vmatprep.subr.mxu0 0.0
        %3374 = vmatpush1.msra.mxu0 0.0
        %3375 = vmatprep.subr.mxu0 0.0
        %3376 = vmatpush1.msra.mxu0 0.0
        %3377 = vmatprep.subr.mxu0 0.0
        %3378 = vmatpush1.msra.mxu0 0.0
        %3379 = vmatprep.subr.mxu0 0.0
        %3380 = vmatpush1.msra.mxu0 0.0
        %3381 = vmatprep.subr.mxu0 0.0
        %3382 = vmatpush1.msra.mxu0 0.0
        %3383 = vmatprep.subr.mxu0 0.0
        %3384 = vmatpush1.msra.mxu0 0.0
        %3385 = vmatprep.subr.mxu0 0.0
        %3386 = vmatpush1.msra.mxu0 0.0
        %3387 = vmatprep.subr.mxu0 0.0
        %3388 = vmatpush1.msra.mxu0 0.0
        %3389 = vmatprep.subr.mxu0 0.0
        %3390 = vmatpush1.msra.mxu0 0.0
        %3391 = vmatprep.subr.mxu0 0.0
        %3392 = vmatpush1.msra.mxu0 0.0
        %3393 = vmatprep.subr.mxu0 0.0
        %3394 = vmatpush1.msra.mxu0 0.0
        %3395 = vmatprep.subr.mxu0 0.0
        %3396 = vmatpush1.msra.mxu0 0.0
        %3397 = vmatprep.subr.mxu0 0.0
        %3398 = vmatpush1.msra.mxu0 0.0
        %3399 = vmatprep.subr.mxu0 0.0
        %3400 = vmatpush1.msra.mxu0 0.0
        %3401 = vmatprep.subr.mxu0 0.0
        %3402 = vmatpush1.msra.mxu0 0.0
        %3403 = vmatprep.subr.mxu0 0.0
        %3404 = vmatpush1.msra.mxu0 0.0
        %3405 = vmatprep.subr.mxu0 0.0
        %3406 = vmatpush1.msra.mxu0 0.0
        %3407 = vmatprep.subr.mxu0 0.0
        %3408 = vmatpush1.msra.mxu0 0.0
        %3409 = vmatprep.subr.mxu0 0.0
        %3410 = vmatpush1.msra.mxu0 0.0
        %3411 = vmatprep.subr.mxu0 0.0
        %3412 = vmatpush1.msra.mxu0 0.0
        %3413 = vmatprep.subr.mxu0 0.0
        %3414 = vmatpush1.msra.mxu0 0.0
        %3415 = vmatprep.subr.mxu0 0.0
        %3416 = vmatpush1.msra.mxu0 0.0
        %3417 = vmatprep.subr.mxu0 0.0
        %3418 = vmatpush1.msra.mxu0 0.0
        %3419 = vmatprep.subr.mxu0 0.0
        %3420 = vmatpush1.msra.mxu0 0.0
        %3421 = vmatprep.subr.mxu0 0.0
        %3422 = vmatpush1.msra.mxu0 0.0
        %3423 = vmatprep.subr.mxu0 0.0
        %3424 = vmatpush1.msra.mxu0 0.0
        %3425 = vmatprep.subr.mxu0 0.0
        %3426 = vmatpush1.msra.mxu0 0.0
        %3427 = vmatprep.subr.mxu0 0.0
        %3428 = vmatpush1.msra.mxu0 0.0
        %3429 = vmatprep.subr.mxu0 0.0
        %3430 = vmatpush1.msra.mxu0 0.0
        %3431 = vmatprep.subr.mxu0 0.0
        %3432 = vmatpush1.msra.mxu0 0.0
        %3433 = vmatprep.mubr.f32.mxu0 0.0
        %v3434 = vand.u32 %v3268, 4294901760
        %3435 = vmatmul.mubr.f32.gmra.mrb[0].mxu0 %v3434
        %v3436 = vpop.f32.mrb[0].mxu0
        %v3437 = vadd.f32 %v3346, %v3436
        %v3438 = vpop.f32.mrb[0].mxu0
        %3439 = vmatprep.mubr.f32.mxu0 0.0
        %v3440 = vand.u32 %v3270, 4294901760
        %3441 = vmatmul.mubr.f32.gmra.mrb[0].mxu0 %v3440
        %v3442 = vpop.f32.mrb[0].mxu0
        %v3443 = vadd.f32 %v3356, %v3442
        %v3444 = vpop.f32.mrb[0].mxu0
        %3445 = vdwg.mxu0
        %3446 = vmatprep.subr.mxu0 0.0
        %v3447 = vand.u32 %v187, 4294901760
        %v3448 = vsub.f32 %v187, %v3447
        %3449 = vmatpush1.msra.mxu0 %v3448
        %3450 = vmatprep.subr.mxu0 0.0
        %v3451 = vand.u32 %v188, 4294901760
        %v3452 = vsub.f32 %v188, %v3451
        %3453 = vmatpush1.msra.mxu0 %v3452
        %3454 = vmatprep.subr.mxu0 0.0
        %3455 = vmatpush1.msra.mxu0 0.0
        %3456 = vmatprep.subr.mxu0 0.0
        %3457 = vmatpush1.msra.mxu0 0.0
        %3458 = vmatprep.subr.mxu0 0.0
        %3459 = vmatpush1.msra.mxu0 0.0
        %3460 = vmatprep.subr.mxu0 0.0
        %3461 = vmatpush1.msra.mxu0 0.0
        %3462 = vmatprep.subr.mxu0 0.0
        %3463 = vmatpush1.msra.mxu0 0.0
        %3464 = vmatprep.subr.mxu0 0.0
        %3465 = vmatpush1.msra.mxu0 0.0
        %3466 = vmatprep.subr.mxu0 0.0
        %3467 = vmatpush1.msra.mxu0 0.0
        %3468 = vmatprep.subr.mxu0 0.0
        %3469 = vmatpush1.msra.mxu0 0.0
        %3470 = vmatprep.subr.mxu0 0.0
        %3471 = vmatpush1.msra.mxu0 0.0
        %3472 = vmatprep.subr.mxu0 0.0
        %3473 = vmatpush1.msra.mxu0 0.0
        %3474 = vmatprep.subr.mxu0 0.0
        %3475 = vmatpush1.msra.mxu0 0.0
        %3476 = vmatprep.subr.mxu0 0.0
        %3477 = vmatpush1.msra.mxu0 0.0
        %3478 = vmatprep.subr.mxu0 0.0
        %3479 = vmatpush1.msra.mxu0 0.0
        %3480 = vmatprep.subr.mxu0 0.0
        %3481 = vmatpush1.msra.mxu0 0.0
        %3482 = vmatprep.subr.mxu0 0.0
        %3483 = vmatpush1.msra.mxu0 0.0
        %3484 = vmatprep.subr.mxu0 0.0
        %3485 = vmatpush1.msra.mxu0 0.0
        %3486 = vmatprep.subr.mxu0 0.0
        %3487 = vmatpush1.msra.mxu0 0.0
        %3488 = vmatprep.subr.mxu0 0.0
        %3489 = vmatpush1.msra.mxu0 0.0
        %3490 = vmatprep.subr.mxu0 0.0
        %3491 = vmatpush1.msra.mxu0 0.0
        %3492 = vmatprep.subr.mxu0 0.0
        %3493 = vmatpush1.msra.mxu0 0.0
        %3494 = vmatprep.subr.mxu0 0.0
        %3495 = vmatpush1.msra.mxu0 0.0
        %3496 = vmatprep.subr.mxu0 0.0
        %3497 = vmatpush1.msra.mxu0 0.0
        %3498 = vmatprep.subr.mxu0 0.0
        %3499 = vmatpush1.msra.mxu0 0.0
        %3500 = vmatprep.subr.mxu0 0.0
        %3501 = vmatpush1.msra.mxu0 0.0
        %3502 = vmatprep.subr.mxu0 0.0
        %3503 = vmatpush1.msra.mxu0 0.0
        %3504 = vmatprep.subr.mxu0 0.0
        %3505 = vmatpush1.msra.mxu0 0.0
        %3506 = vmatprep.subr.mxu0 0.0
        %3507 = vmatpush1.msra.mxu0 0.0
        %3508 = vmatprep.subr.mxu0 0.0
        %3509 = vmatpush1.msra.mxu0 0.0
        %3510 = vmatprep.subr.mxu0 0.0
        %3511 = vmatpush1.msra.mxu0 0.0
        %3512 = vmatprep.subr.mxu0 0.0
        %3513 = vmatpush1.msra.mxu0 0.0
        %3514 = vmatprep.mubr.f32.mxu0 0.0
        %v3515 = vand.u32 %v3268, 4294901760
        %v3516 = vsub.f32 %v3268, %v3515
        %3517 = vmatmul.mubr.f32.gmra.mrb[0].mxu0 %v3516
        %v3518 = vpop.f32.mrb[0].mxu0
        %v3519 = vadd.f32 %v3437, %v3518
        %v3520 = vpop.f32.mrb[0].mxu0
        %3521 = vmatprep.mubr.f32.mxu0 0.0
        %v3522 = vand.u32 %v3270, 4294901760
        %v3523 = vsub.f32 %v3270, %v3522
        %3524 = vmatmul.mubr.f32.gmra.mrb[0].mxu0 %v3523
        %v3525 = vpop.f32.mrb[0].mxu0
        %v3526 = vadd.f32 %v3443, %v3525
        %v3527 = vpop.f32.mrb[0].mxu0
        %3528 = vdwg.mxu0
        %3529 = vmatprep.subr.mxu0 0.0
        %v3530 = vand.u32 %v187, 4294901760
        %3531 = vmatpush1.msra.mxu0 %v3530
        %3532 = vmatprep.subr.mxu0 0.0
        %v3533 = vand.u32 %v188, 4294901760
        %3534 = vmatpush1.msra.mxu0 %v3533
        %3535 = vmatprep.subr.mxu0 0.0
        %3536 = vmatpush1.msra.mxu0 0.0
        %3537 = vmatprep.subr.mxu0 0.0
        %3538 = vmatpush1.msra.mxu0 0.0
        %3539 = vmatprep.subr.mxu0 0.0
        %3540 = vmatpush1.msra.mxu0 0.0
        %3541 = vmatprep.subr.mxu0 0.0
        %3542 = vmatpush1.msra.mxu0 0.0
        %3543 = vmatprep.subr.mxu0 0.0
        %3544 = vmatpush1.msra.mxu0 0.0
        %3545 = vmatprep.subr.mxu0 0.0
        %3546 = vmatpush1.msra.mxu0 0.0
        %3547 = vmatprep.subr.mxu0 0.0
        %3548 = vmatpush1.msra.mxu0 0.0
        %3549 = vmatprep.subr.mxu0 0.0
        %3550 = vmatpush1.msra.mxu0 0.0
        %3551 = vmatprep.subr.mxu0 0.0
        %3552 = vmatpush1.msra.mxu0 0.0
        %3553 = vmatprep.subr.mxu0 0.0
        %3554 = vmatpush1.msra.mxu0 0.0
        %3555 = vmatprep.subr.mxu0 0.0
        %3556 = vmatpush1.msra.mxu0 0.0
        %3557 = vmatprep.subr.mxu0 0.0
        %3558 = vmatpush1.msra.mxu0 0.0
        %3559 = vmatprep.subr.mxu0 0.0
        %3560 = vmatpush1.msra.mxu0 0.0
        %3561 = vmatprep.subr.mxu0 0.0
        %3562 = vmatpush1.msra.mxu0 0.0
        %3563 = vmatprep.subr.mxu0 0.0
        %3564 = vmatpush1.msra.mxu0 0.0
        %3565 = vmatprep.subr.mxu0 0.0
        %3566 = vmatpush1.msra.mxu0 0.0
        %3567 = vmatprep.subr.mxu0 0.0
        %3568 = vmatpush1.msra.mxu0 0.0
        %3569 = vmatprep.subr.mxu0 0.0
        %3570 = vmatpush1.msra.mxu0 0.0
        %3571 = vmatprep.subr.mxu0 0.0
        %3572 = vmatpush1.msra.mxu0 0.0
        %3573 = vmatprep.subr.mxu0 0.0
        %3574 = vmatpush1.msra.mxu0 0.0
        %3575 = vmatprep.subr.mxu0 0.0
        %3576 = vmatpush1.msra.mxu0 0.0
        %3577 = vmatprep.subr.mxu0 0.0
        %3578 = vmatpush1.msra.mxu0 0.0
        %3579 = vmatprep.subr.mxu0 0.0
        %3580 = vmatpush1.msra.mxu0 0.0
        %3581 = vmatprep.subr.mxu0 0.0
        %3582 = vmatpush1.msra.mxu0 0.0
        %3583 = vmatprep.subr.mxu0 0.0
        %3584 = vmatpush1.msra.mxu0 0.0
        %3585 = vmatprep.subr.mxu0 0.0
        %3586 = vmatpush1.msra.mxu0 0.0
        %3587 = vmatprep.subr.mxu0 0.0
        %3588 = vmatpush1.msra.mxu0 0.0
        %3589 = vmatprep.subr.mxu0 0.0
        %3590 = vmatpush1.msra.mxu0 0.0
        %3591 = vmatprep.subr.mxu0 0.0
        %3592 = vmatpush1.msra.mxu0 0.0
        %3593 = vmatprep.subr.mxu0 0.0
        %3594 = vmatpush1.msra.mxu0 0.0
        %3595 = vmatprep.mubr.f32.mxu0 0.0
        %v3596 = vand.u32 %v3268, 4294901760
        %v3597 = vsub.f32 %v3268, %v3596
        %v3598 = vand.u32 %v3597, 4294901760
        %3599 = vmatmul.mubr.f32.gmra.mrb[0].mxu0 %v3598
        %v3600 = vpop.f32.mrb[0].mxu0
        %v3601 = vadd.f32 %v3519, %v3600
        %v3602 = vpop.f32.mrb[0].mxu0
        %3603 = vmatprep.mubr.f32.mxu0 0.0
        %v3604 = vand.u32 %v3270, 4294901760
        %v3605 = vsub.f32 %v3270, %v3604
        %v3606 = vand.u32 %v3605, 4294901760
        %3607 = vmatmul.mubr.f32.gmra.mrb[0].mxu0 %v3606
        %v3608 = vpop.f32.mrb[0].mxu0
        %v3609 = vadd.f32 %v3526, %v3608
        %v3610 = vpop.f32.mrb[0].mxu0
        %3611 = vdwg.mxu0
        %3612 = vmatprep.subr.mxu0 0.0
        %v3613 = vand.u32 %v187, 4294901760
        %v3614 = vsub.f32 %v187, %v3613
        %v3615 = vand.u32 %v3614, 4294901760
        %3616 = vmatpush1.msra.mxu0 %v3615
        %3617 = vmatprep.subr.mxu0 0.0
        %v3618 = vand.u32 %v188, 4294901760
        %v3619 = vsub.f32 %v188, %v3618
        %v3620 = vand.u32 %v3619, 4294901760
        %3621 = vmatpush1.msra.mxu0 %v3620
        %3622 = vmatprep.subr.mxu0 0.0
        %3623 = vmatpush1.msra.mxu0 0.0
        %3624 = vmatprep.subr.mxu0 0.0
        %3625 = vmatpush1.msra.mxu0 0.0
        %3626 = vmatprep.subr.mxu0 0.0
        %3627 = vmatpush1.msra.mxu0 0.0
        %3628 = vmatprep.subr.mxu0 0.0
        %3629 = vmatpush1.msra.mxu0 0.0
        %3630 = vmatprep.subr.mxu0 0.0
        %3631 = vmatpush1.msra.mxu0 0.0
        %3632 = vmatprep.subr.mxu0 0.0
        %3633 = vmatpush1.msra.mxu0 0.0
        %3634 = vmatprep.subr.mxu0 0.0
        %3635 = vmatpush1.msra.mxu0 0.0
        %3636 = vmatprep.subr.mxu0 0.0
        %3637 = vmatpush1.msra.mxu0 0.0
        %3638 = vmatprep.subr.mxu0 0.0
        %3639 = vmatpush1.msra.mxu0 0.0
        %3640 = vmatprep.subr.mxu0 0.0
        %3641 = vmatpush1.msra.mxu0 0.0
        %3642 = vmatprep.subr.mxu0 0.0
        %3643 = vmatpush1.msra.mxu0 0.0
        %3644 = vmatprep.subr.mxu0 0.0
        %3645 = vmatpush1.msra.mxu0 0.0
        %3646 = vmatprep.subr.mxu0 0.0
        %3647 = vmatpush1.msra.mxu0 0.0
        %3648 = vmatprep.subr.mxu0 0.0
        %3649 = vmatpush1.msra.mxu0 0.0
        %3650 = vmatprep.subr.mxu0 0.0
        %3651 = vmatpush1.msra.mxu0 0.0
        %3652 = vmatprep.subr.mxu0 0.0
        %3653 = vmatpush1.msra.mxu0 0.0
        %3654 = vmatprep.subr.mxu0 0.0
        %3655 = vmatpush1.msra.mxu0 0.0
        %3656 = vmatprep.subr.mxu0 0.0
        %3657 = vmatpush1.msra.mxu0 0.0
        %3658 = vmatprep.subr.mxu0 0.0
        %3659 = vmatpush1.msra.mxu0 0.0
        %3660 = vmatprep.subr.mxu0 0.0
        %3661 = vmatpush1.msra.mxu0 0.0
        %3662 = vmatprep.subr.mxu0 0.0
        %3663 = vmatpush1.msra.mxu0 0.0
        %3664 = vmatprep.subr.mxu0 0.0
        %3665 = vmatpush1.msra.mxu0 0.0
        %3666 = vmatprep.subr.mxu0 0.0
        %3667 = vmatpush1.msra.mxu0 0.0
        %3668 = vmatprep.subr.mxu0 0.0
        %3669 = vmatpush1.msra.mxu0 0.0
        %3670 = vmatprep.subr.mxu0 0.0
        %3671 = vmatpush1.msra.mxu0 0.0
        %3672 = vmatprep.subr.mxu0 0.0
        %3673 = vmatpush1.msra.mxu0 0.0
        %3674 = vmatprep.subr.mxu0 0.0
        %3675 = vmatpush1.msra.mxu0 0.0
        %3676 = vmatprep.subr.mxu0 0.0
        %3677 = vmatpush1.msra.mxu0 0.0
        %3678 = vmatprep.subr.mxu0 0.0
        %3679 = vmatpush1.msra.mxu0 0.0
        %3680 = vmatprep.subr.mxu0 0.0
        %3681 = vmatpush1.msra.mxu0 0.0
        %3682 = vmatprep.mubr.f32.mxu0 0.0
        %v3683 = vand.u32 %v3268, 4294901760
        %3684 = vmatmul.mubr.f32.gmra.mrb[0].mxu0 %v3683
        %v3685 = vpop.f32.mrb[0].mxu0
        %v3686 = vadd.f32 %v3601, %v3685
        %v3687 = vpop.f32.mrb[0].mxu0
        %3688 = vmatprep.mubr.f32.mxu0 0.0
        %v3689 = vand.u32 %v3270, 4294901760
        %3690 = vmatmul.mubr.f32.gmra.mrb[0].mxu0 %v3689
        %v3691 = vpop.f32.mrb[0].mxu0
        %v3692 = vadd.f32 %v3609, %v3691
        %v3693 = vpop.f32.mrb[0].mxu0
        %3694 = vdwg.mxu0
        %3695 = vmatprep.subr.mxu0 0.0
        %v3696 = vand.u32 %v187, 4294901760
        %3697 = vmatpush1.msra.mxu0 %v3696
        %3698 = vmatprep.subr.mxu0 0.0
        %v3699 = vand.u32 %v188, 4294901760
        %3700 = vmatpush1.msra.mxu0 %v3699
        %3701 = vmatprep.subr.mxu0 0.0
        %3702 = vmatpush1.msra.mxu0 0.0
        %3703 = vmatprep.subr.mxu0 0.0
        %3704 = vmatpush1.msra.mxu0 0.0
        %3705 = vmatprep.subr.mxu0 0.0
        %3706 = vmatpush1.msra.mxu0 0.0
        %3707 = vmatprep.subr.mxu0 0.0
        %3708 = vmatpush1.msra.mxu0 0.0
        %3709 = vmatprep.subr.mxu0 0.0
        %3710 = vmatpush1.msra.mxu0 0.0
        %3711 = vmatprep.subr.mxu0 0.0
        %3712 = vmatpush1.msra.mxu0 0.0
        %3713 = vmatprep.subr.mxu0 0.0
        %3714 = vmatpush1.msra.mxu0 0.0
        %3715 = vmatprep.subr.mxu0 0.0
        %3716 = vmatpush1.msra.mxu0 0.0
        %3717 = vmatprep.subr.mxu0 0.0
        %3718 = vmatpush1.msra.mxu0 0.0
        %3719 = vmatprep.subr.mxu0 0.0
        %3720 = vmatpush1.msra.mxu0 0.0
        %3721 = vmatprep.subr.mxu0 0.0
        %3722 = vmatpush1.msra.mxu0 0.0
        %3723 = vmatprep.subr.mxu0 0.0
        %3724 = vmatpush1.msra.mxu0 0.0
        %3725 = vmatprep.subr.mxu0 0.0
        %3726 = vmatpush1.msra.mxu0 0.0
        %3727 = vmatprep.subr.mxu0 0.0
        %3728 = vmatpush1.msra.mxu0 0.0
        %3729 = vmatprep.subr.mxu0 0.0
        %3730 = vmatpush1.msra.mxu0 0.0
        %3731 = vmatprep.subr.mxu0 0.0
        %3732 = vmatpush1.msra.mxu0 0.0
        %3733 = vmatprep.subr.mxu0 0.0
        %3734 = vmatpush1.msra.mxu0 0.0
        %3735 = vmatprep.subr.mxu0 0.0
        %3736 = vmatpush1.msra.mxu0 0.0
        %3737 = vmatprep.subr.mxu0 0.0
        %3738 = vmatpush1.msra.mxu0 0.0
        %3739 = vmatprep.subr.mxu0 0.0
        %3740 = vmatpush1.msra.mxu0 0.0
        %3741 = vmatprep.subr.mxu0 0.0
        %3742 = vmatpush1.msra.mxu0 0.0
        %3743 = vmatprep.subr.mxu0 0.0
        %3744 = vmatpush1.msra.mxu0 0.0
        %3745 = vmatprep.subr.mxu0 0.0
        %3746 = vmatpush1.msra.mxu0 0.0
        %3747 = vmatprep.subr.mxu0 0.0
        %3748 = vmatpush1.msra.mxu0 0.0
        %3749 = vmatprep.subr.mxu0 0.0
        %3750 = vmatpush1.msra.mxu0 0.0
        %3751 = vmatprep.subr.mxu0 0.0
        %3752 = vmatpush1.msra.mxu0 0.0
        %3753 = vmatprep.subr.mxu0 0.0
        %3754 = vmatpush1.msra.mxu0 0.0
        %3755 = vmatprep.subr.mxu0 0.0
        %3756 = vmatpush1.msra.mxu0 0.0
        %3757 = vmatprep.subr.mxu0 0.0
        %3758 = vmatpush1.msra.mxu0 0.0
        %3759 = vmatprep.subr.mxu0 0.0
        %3760 = vmatpush1.msra.mxu0 0.0
        %3761 = vmatprep.mubr.f32.mxu0 0.0
        %v3762 = vand.u32 %v3268, 4294901760
        %3763 = vmatmul.mubr.f32.gmra.mrb[0].mxu0 %v3762
        %v3764 = vpop.f32.mrb[0].mxu0
        %v3765 = vadd.f32 %v3686, %v3764
        %v3766 = vpop.f32.mrb[0].mxu0
        %3767 = vmatprep.mubr.f32.mxu0 0.0
        %v3768 = vand.u32 %v3270, 4294901760
        %3769 = vmatmul.mubr.f32.gmra.mrb[0].mxu0 %v3768
        %v3770 = vpop.f32.mrb[0].mxu0
        %v3771 = vadd.f32 %v3692, %v3770
        %v3772 = vpop.f32.mrb[0].mxu0
        %3773 = vdwg.mxu0
        %v3774 = vsel %vm197, %v3261, 0
        %v3776 = vsel %vm197, %v3262, 0
        %3778 = vmatprep.subr.mxu0 0.0
        %v3779 = vand.u32 %v184, 4294901760
        %3780 = vmatpush1.msra.mxu0 %v3779
        %3781 = vmatprep.subr.mxu0 0.0
        %v3782 = vand.u32 %v185, 4294901760
        %3783 = vmatpush1.msra.mxu0 %v3782
        %3784 = vmatprep.subr.mxu0 0.0
        %3785 = vmatpush1.msra.mxu0 0.0
        %3786 = vmatprep.subr.mxu0 0.0
        %3787 = vmatpush1.msra.mxu0 0.0
        %3788 = vmatprep.subr.mxu0 0.0
        %3789 = vmatpush1.msra.mxu0 0.0
        %3790 = vmatprep.subr.mxu0 0.0
        %3791 = vmatpush1.msra.mxu0 0.0
        %3792 = vmatprep.subr.mxu0 0.0
        %3793 = vmatpush1.msra.mxu0 0.0
        %3794 = vmatprep.subr.mxu0 0.0
        %3795 = vmatpush1.msra.mxu0 0.0
        %3796 = vmatprep.subr.mxu0 0.0
        %3797 = vmatpush1.msra.mxu0 0.0
        %3798 = vmatprep.subr.mxu0 0.0
        %3799 = vmatpush1.msra.mxu0 0.0
        %3800 = vmatprep.subr.mxu0 0.0
        %3801 = vmatpush1.msra.mxu0 0.0
        %3802 = vmatprep.subr.mxu0 0.0
        %3803 = vmatpush1.msra.mxu0 0.0
        %3804 = vmatprep.subr.mxu0 0.0
        %3805 = vmatpush1.msra.mxu0 0.0
        %3806 = vmatprep.subr.mxu0 0.0
        %3807 = vmatpush1.msra.mxu0 0.0
        %3808 = vmatprep.subr.mxu0 0.0
        %3809 = vmatpush1.msra.mxu0 0.0
        %3810 = vmatprep.subr.mxu0 0.0
        %3811 = vmatpush1.msra.mxu0 0.0
        %3812 = vmatprep.subr.mxu0 0.0
        %3813 = vmatpush1.msra.mxu0 0.0
        %3814 = vmatprep.subr.mxu0 0.0
        %3815 = vmatpush1.msra.mxu0 0.0
        %3816 = vmatprep.subr.mxu0 0.0
        %3817 = vmatpush1.msra.mxu0 0.0
        %3818 = vmatprep.subr.mxu0 0.0
        %3819 = vmatpush1.msra.mxu0 0.0
        %3820 = vmatprep.subr.mxu0 0.0
        %3821 = vmatpush1.msra.mxu0 0.0
        %3822 = vmatprep.subr.mxu0 0.0
        %3823 = vmatpush1.msra.mxu0 0.0
        %3824 = vmatprep.subr.mxu0 0.0
        %3825 = vmatpush1.msra.mxu0 0.0
        %3826 = vmatprep.subr.mxu0 0.0
        %3827 = vmatpush1.msra.mxu0 0.0
        %3828 = vmatprep.subr.mxu0 0.0
        %3829 = vmatpush1.msra.mxu0 0.0
        %3830 = vmatprep.subr.mxu0 0.0
        %3831 = vmatpush1.msra.mxu0 0.0
        %3832 = vmatprep.subr.mxu0 0.0
        %3833 = vmatpush1.msra.mxu0 0.0
        %3834 = vmatprep.subr.mxu0 0.0
        %3835 = vmatpush1.msra.mxu0 0.0
        %3836 = vmatprep.subr.mxu0 0.0
        %3837 = vmatpush1.msra.mxu0 0.0
        %3838 = vmatprep.subr.mxu0 0.0
        %3839 = vmatpush1.msra.mxu0 0.0
        %3840 = vmatprep.subr.mxu0 0.0
        %3841 = vmatpush1.msra.mxu0 0.0
        %3842 = vmatprep.subr.mxu0 0.0
        %3843 = vmatpush1.msra.mxu0 0.0
        %3844 = vmatprep.mubr.f32.mxu0 0.0
        %v3845 = vand.u32 %v3774, 4294901760
        %v3846 = vsub.f32 %v3774, %v3845
        %v3847 = vand.u32 %v3846, 4294901760
        %v3848 = vsub.f32 %v3846, %v3847
        %v3849 = vand.u32 %v3848, 4294901760
        %3850 = vmatmul.mubr.f32.gmra.mrb[0].mxu0 %v3849
        %v3851 = vpop.f32.mrb[0].mxu0
        %v3852 = vadd.f32 %v3765, %v3851
        %v3853 = vpop.f32.mrb[0].mxu0
        %3854 = vmatprep.mubr.f32.mxu0 0.0
        %v3855 = vand.u32 %v3776, 4294901760
        %v3856 = vsub.f32 %v3776, %v3855
        %v3857 = vand.u32 %v3856, 4294901760
        %v3858 = vsub.f32 %v3856, %v3857
        %v3859 = vand.u32 %v3858, 4294901760
        %3860 = vmatmul.mubr.f32.gmra.mrb[0].mxu0 %v3859
        %v3861 = vpop.f32.mrb[0].mxu0
        %v3862 = vadd.f32 %v3771, %v3861
        %v3863 = vpop.f32.mrb[0].mxu0
        %3864 = vdwg.mxu0
        %3865 = vmatprep.subr.mxu0 0.0
        %v3866 = vand.u32 %v184, 4294901760
        %v3867 = vsub.f32 %v184, %v3866
        %v3868 = vand.u32 %v3867, 4294901760
        %v3869 = vsub.f32 %v3867, %v3868
        %v3870 = vand.u32 %v3869, 4294901760
        %3871 = vmatpush1.msra.mxu0 %v3870
        %3872 = vmatprep.subr.mxu0 0.0
        %v3873 = vand.u32 %v185, 4294901760
        %v3874 = vsub.f32 %v185, %v3873
        %v3875 = vand.u32 %v3874, 4294901760
        %v3876 = vsub.f32 %v3874, %v3875
        %v3877 = vand.u32 %v3876, 4294901760
        %3878 = vmatpush1.msra.mxu0 %v3877
        %3879 = vmatprep.subr.mxu0 0.0
        %3880 = vmatpush1.msra.mxu0 0.0
        %3881 = vmatprep.subr.mxu0 0.0
        %3882 = vmatpush1.msra.mxu0 0.0
        %3883 = vmatprep.subr.mxu0 0.0
        %3884 = vmatpush1.msra.mxu0 0.0
        %3885 = vmatprep.subr.mxu0 0.0
        %3886 = vmatpush1.msra.mxu0 0.0
        %3887 = vmatprep.subr.mxu0 0.0
        %3888 = vmatpush1.msra.mxu0 0.0
        %3889 = vmatprep.subr.mxu0 0.0
        %3890 = vmatpush1.msra.mxu0 0.0
        %3891 = vmatprep.subr.mxu0 0.0
        %3892 = vmatpush1.msra.mxu0 0.0
        %3893 = vmatprep.subr.mxu0 0.0
        %3894 = vmatpush1.msra.mxu0 0.0
        %3895 = vmatprep.subr.mxu0 0.0
        %3896 = vmatpush1.msra.mxu0 0.0
        %3897 = vmatprep.subr.mxu0 0.0
        %3898 = vmatpush1.msra.mxu0 0.0
        %3899 = vmatprep.subr.mxu0 0.0
        %3900 = vmatpush1.msra.mxu0 0.0
        %3901 = vmatprep.subr.mxu0 0.0
        %3902 = vmatpush1.msra.mxu0 0.0
        %3903 = vmatprep.subr.mxu0 0.0
        %3904 = vmatpush1.msra.mxu0 0.0
        %3905 = vmatprep.subr.mxu0 0.0
        %3906 = vmatpush1.msra.mxu0 0.0
        %3907 = vmatprep.subr.mxu0 0.0
        %3908 = vmatpush1.msra.mxu0 0.0
        %3909 = vmatprep.subr.mxu0 0.0
        %3910 = vmatpush1.msra.mxu0 0.0
        %3911 = vmatprep.subr.mxu0 0.0
        %3912 = vmatpush1.msra.mxu0 0.0
        %3913 = vmatprep.subr.mxu0 0.0
        %3914 = vmatpush1.msra.mxu0 0.0
        %3915 = vmatprep.subr.mxu0 0.0
        %3916 = vmatpush1.msra.mxu0 0.0
        %3917 = vmatprep.subr.mxu0 0.0
        %3918 = vmatpush1.msra.mxu0 0.0
        %3919 = vmatprep.subr.mxu0 0.0
        %3920 = vmatpush1.msra.mxu0 0.0
        %3921 = vmatprep.subr.mxu0 0.0
        %3922 = vmatpush1.msra.mxu0 0.0
        %3923 = vmatprep.subr.mxu0 0.0
        %3924 = vmatpush1.msra.mxu0 0.0
        %3925 = vmatprep.subr.mxu0 0.0
        %3926 = vmatpush1.msra.mxu0 0.0
        %3927 = vmatprep.subr.mxu0 0.0
        %3928 = vmatpush1.msra.mxu0 0.0
        %3929 = vmatprep.subr.mxu0 0.0
        %3930 = vmatpush1.msra.mxu0 0.0
        %3931 = vmatprep.subr.mxu0 0.0
        %3932 = vmatpush1.msra.mxu0 0.0
        %3933 = vmatprep.subr.mxu0 0.0
        %3934 = vmatpush1.msra.mxu0 0.0
        %3935 = vmatprep.subr.mxu0 0.0
        %3936 = vmatpush1.msra.mxu0 0.0
        %3937 = vmatprep.subr.mxu0 0.0
        %3938 = vmatpush1.msra.mxu0 0.0
        %3939 = vmatprep.mubr.f32.mxu0 0.0
        %v3940 = vand.u32 %v3774, 4294901760
        %3941 = vmatmul.mubr.f32.gmra.mrb[0].mxu0 %v3940
        %v3942 = vpop.f32.mrb[0].mxu0
        %v3943 = vadd.f32 %v3852, %v3942
        %v3944 = vpop.f32.mrb[0].mxu0
        %3945 = vmatprep.mubr.f32.mxu0 0.0
        %v3946 = vand.u32 %v3776, 4294901760
        %3947 = vmatmul.mubr.f32.gmra.mrb[0].mxu0 %v3946
        %v3948 = vpop.f32.mrb[0].mxu0
        %v3949 = vadd.f32 %v3862, %v3948
        %v3950 = vpop.f32.mrb[0].mxu0
        %3951 = vdwg.mxu0
        %3952 = vmatprep.subr.mxu0 0.0
        %v3953 = vand.u32 %v184, 4294901760
        %v3954 = vsub.f32 %v184, %v3953
        %3955 = vmatpush1.msra.mxu0 %v3954
        %3956 = vmatprep.subr.mxu0 0.0
        %v3957 = vand.u32 %v185, 4294901760
        %v3958 = vsub.f32 %v185, %v3957
        %3959 = vmatpush1.msra.mxu0 %v3958
        %3960 = vmatprep.subr.mxu0 0.0
        %3961 = vmatpush1.msra.mxu0 0.0
        %3962 = vmatprep.subr.mxu0 0.0
        %3963 = vmatpush1.msra.mxu0 0.0
        %3964 = vmatprep.subr.mxu0 0.0
        %3965 = vmatpush1.msra.mxu0 0.0
        %3966 = vmatprep.subr.mxu0 0.0
        %3967 = vmatpush1.msra.mxu0 0.0
        %3968 = vmatprep.subr.mxu0 0.0
        %3969 = vmatpush1.msra.mxu0 0.0
        %3970 = vmatprep.subr.mxu0 0.0
        %3971 = vmatpush1.msra.mxu0 0.0
        %3972 = vmatprep.subr.mxu0 0.0
        %3973 = vmatpush1.msra.mxu0 0.0
        %3974 = vmatprep.subr.mxu0 0.0
        %3975 = vmatpush1.msra.mxu0 0.0
        %3976 = vmatprep.subr.mxu0 0.0
        %3977 = vmatpush1.msra.mxu0 0.0
        %3978 = vmatprep.subr.mxu0 0.0
        %3979 = vmatpush1.msra.mxu0 0.0
        %3980 = vmatprep.subr.mxu0 0.0
        %3981 = vmatpush1.msra.mxu0 0.0
        %3982 = vmatprep.subr.mxu0 0.0
        %3983 = vmatpush1.msra.mxu0 0.0
        %3984 = vmatprep.subr.mxu0 0.0
        %3985 = vmatpush1.msra.mxu0 0.0
        %3986 = vmatprep.subr.mxu0 0.0
        %3987 = vmatpush1.msra.mxu0 0.0
        %3988 = vmatprep.subr.mxu0 0.0
        %3989 = vmatpush1.msra.mxu0 0.0
        %3990 = vmatprep.subr.mxu0 0.0
        %3991 = vmatpush1.msra.mxu0 0.0
        %3992 = vmatprep.subr.mxu0 0.0
        %3993 = vmatpush1.msra.mxu0 0.0
        %3994 = vmatprep.subr.mxu0 0.0
        %3995 = vmatpush1.msra.mxu0 0.0
        %3996 = vmatprep.subr.mxu0 0.0
        %3997 = vmatpush1.msra.mxu0 0.0
        %3998 = vmatprep.subr.mxu0 0.0
        %3999 = vmatpush1.msra.mxu0 0.0
        %4000 = vmatprep.subr.mxu0 0.0
        %4001 = vmatpush1.msra.mxu0 0.0
        %4002 = vmatprep.subr.mxu0 0.0
        %4003 = vmatpush1.msra.mxu0 0.0
        %4004 = vmatprep.subr.mxu0 0.0
        %4005 = vmatpush1.msra.mxu0 0.0
        %4006 = vmatprep.subr.mxu0 0.0
        %4007 = vmatpush1.msra.mxu0 0.0
        %4008 = vmatprep.subr.mxu0 0.0
        %4009 = vmatpush1.msra.mxu0 0.0
        %4010 = vmatprep.subr.mxu0 0.0
        %4011 = vmatpush1.msra.mxu0 0.0
        %4012 = vmatprep.subr.mxu0 0.0
        %4013 = vmatpush1.msra.mxu0 0.0
        %4014 = vmatprep.subr.mxu0 0.0
        %4015 = vmatpush1.msra.mxu0 0.0
        %4016 = vmatprep.subr.mxu0 0.0
        %4017 = vmatpush1.msra.mxu0 0.0
        %4018 = vmatprep.subr.mxu0 0.0
        %4019 = vmatpush1.msra.mxu0 0.0
        %4020 = vmatprep.mubr.f32.mxu0 0.0
        %v4021 = vand.u32 %v3774, 4294901760
        %v4022 = vsub.f32 %v3774, %v4021
        %4023 = vmatmul.mubr.f32.gmra.mrb[0].mxu0 %v4022
        %v4024 = vpop.f32.mrb[0].mxu0
        %v4025 = vadd.f32 %v3943, %v4024
        %v4026 = vpop.f32.mrb[0].mxu0
        %4027 = vmatprep.mubr.f32.mxu0 0.0
        %v4028 = vand.u32 %v3776, 4294901760
        %v4029 = vsub.f32 %v3776, %v4028
        %4030 = vmatmul.mubr.f32.gmra.mrb[0].mxu0 %v4029
        %v4031 = vpop.f32.mrb[0].mxu0
        %v4032 = vadd.f32 %v3949, %v4031
        %v4033 = vpop.f32.mrb[0].mxu0
        %4034 = vdwg.mxu0
        %4035 = vmatprep.subr.mxu0 0.0
        %v4036 = vand.u32 %v184, 4294901760
        %4037 = vmatpush1.msra.mxu0 %v4036
        %4038 = vmatprep.subr.mxu0 0.0
        %v4039 = vand.u32 %v185, 4294901760
        %4040 = vmatpush1.msra.mxu0 %v4039
        %4041 = vmatprep.subr.mxu0 0.0
        %4042 = vmatpush1.msra.mxu0 0.0
        %4043 = vmatprep.subr.mxu0 0.0
        %4044 = vmatpush1.msra.mxu0 0.0
        %4045 = vmatprep.subr.mxu0 0.0
        %4046 = vmatpush1.msra.mxu0 0.0
        %4047 = vmatprep.subr.mxu0 0.0
        %4048 = vmatpush1.msra.mxu0 0.0
        %4049 = vmatprep.subr.mxu0 0.0
        %4050 = vmatpush1.msra.mxu0 0.0
        %4051 = vmatprep.subr.mxu0 0.0
        %4052 = vmatpush1.msra.mxu0 0.0
        %4053 = vmatprep.subr.mxu0 0.0
        %4054 = vmatpush1.msra.mxu0 0.0
        %4055 = vmatprep.subr.mxu0 0.0
        %4056 = vmatpush1.msra.mxu0 0.0
        %4057 = vmatprep.subr.mxu0 0.0
        %4058 = vmatpush1.msra.mxu0 0.0
        %4059 = vmatprep.subr.mxu0 0.0
        %4060 = vmatpush1.msra.mxu0 0.0
        %4061 = vmatprep.subr.mxu0 0.0
        %4062 = vmatpush1.msra.mxu0 0.0
        %4063 = vmatprep.subr.mxu0 0.0
        %4064 = vmatpush1.msra.mxu0 0.0
        %4065 = vmatprep.subr.mxu0 0.0
        %4066 = vmatpush1.msra.mxu0 0.0
        %4067 = vmatprep.subr.mxu0 0.0
        %4068 = vmatpush1.msra.mxu0 0.0
        %4069 = vmatprep.subr.mxu0 0.0
        %4070 = vmatpush1.msra.mxu0 0.0
        %4071 = vmatprep.subr.mxu0 0.0
        %4072 = vmatpush1.msra.mxu0 0.0
        %4073 = vmatprep.subr.mxu0 0.0
        %4074 = vmatpush1.msra.mxu0 0.0
        %4075 = vmatprep.subr.mxu0 0.0
        %4076 = vmatpush1.msra.mxu0 0.0
        %4077 = vmatprep.subr.mxu0 0.0
        %4078 = vmatpush1.msra.mxu0 0.0
        %4079 = vmatprep.subr.mxu0 0.0
        %4080 = vmatpush1.msra.mxu0 0.0
        %4081 = vmatprep.subr.mxu0 0.0
        %4082 = vmatpush1.msra.mxu0 0.0
        %4083 = vmatprep.subr.mxu0 0.0
        %4084 = vmatpush1.msra.mxu0 0.0
        %4085 = vmatprep.subr.mxu0 0.0
        %4086 = vmatpush1.msra.mxu0 0.0
        %4087 = vmatprep.subr.mxu0 0.0
        %4088 = vmatpush1.msra.mxu0 0.0
        %4089 = vmatprep.subr.mxu0 0.0
        %4090 = vmatpush1.msra.mxu0 0.0
        %4091 = vmatprep.subr.mxu0 0.0
        %4092 = vmatpush1.msra.mxu0 0.0
        %4093 = vmatprep.subr.mxu0 0.0
        %4094 = vmatpush1.msra.mxu0 0.0
        %4095 = vmatprep.subr.mxu0 0.0
        %4096 = vmatpush1.msra.mxu0 0.0
        %4097 = vmatprep.subr.mxu0 0.0
        %4098 = vmatpush1.msra.mxu0 0.0
        %4099 = vmatprep.subr.mxu0 0.0
        %4100 = vmatpush1.msra.mxu0 0.0
        %4101 = vmatprep.mubr.f32.mxu0 0.0
        %v4102 = vand.u32 %v3774, 4294901760
        %v4103 = vsub.f32 %v3774, %v4102
        %v4104 = vand.u32 %v4103, 4294901760
        %4105 = vmatmul.mubr.f32.gmra.mrb[0].mxu0 %v4104
        %v4106 = vpop.f32.mrb[0].mxu0
        %v4107 = vadd.f32 %v4025, %v4106
        %v4108 = vpop.f32.mrb[0].mxu0
        %4109 = vmatprep.mubr.f32.mxu0 0.0
        %v4110 = vand.u32 %v3776, 4294901760
        %v4111 = vsub.f32 %v3776, %v4110
        %v4112 = vand.u32 %v4111, 4294901760
        %4113 = vmatmul.mubr.f32.gmra.mrb[0].mxu0 %v4112
        %v4114 = vpop.f32.mrb[0].mxu0
        %v4115 = vadd.f32 %v4032, %v4114
        %v4116 = vpop.f32.mrb[0].mxu0
        %4117 = vdwg.mxu0
        %4118 = vmatprep.subr.mxu0 0.0
        %v4119 = vand.u32 %v184, 4294901760
        %v4120 = vsub.f32 %v184, %v4119
        %v4121 = vand.u32 %v4120, 4294901760
        %4122 = vmatpush1.msra.mxu0 %v4121
        %4123 = vmatprep.subr.mxu0 0.0
        %v4124 = vand.u32 %v185, 4294901760
        %v4125 = vsub.f32 %v185, %v4124
        %v4126 = vand.u32 %v4125, 4294901760
        %4127 = vmatpush1.msra.mxu0 %v4126
        %4128 = vmatprep.subr.mxu0 0.0
        %4129 = vmatpush1.msra.mxu0 0.0
        %4130 = vmatprep.subr.mxu0 0.0
        %4131 = vmatpush1.msra.mxu0 0.0
        %4132 = vmatprep.subr.mxu0 0.0
        %4133 = vmatpush1.msra.mxu0 0.0
        %4134 = vmatprep.subr.mxu0 0.0
        %4135 = vmatpush1.msra.mxu0 0.0
        %4136 = vmatprep.subr.mxu0 0.0
        %4137 = vmatpush1.msra.mxu0 0.0
        %4138 = vmatprep.subr.mxu0 0.0
        %4139 = vmatpush1.msra.mxu0 0.0
        %4140 = vmatprep.subr.mxu0 0.0
        %4141 = vmatpush1.msra.mxu0 0.0
        %4142 = vmatprep.subr.mxu0 0.0
        %4143 = vmatpush1.msra.mxu0 0.0
        %4144 = vmatprep.subr.mxu0 0.0
        %4145 = vmatpush1.msra.mxu0 0.0
        %4146 = vmatprep.subr.mxu0 0.0
        %4147 = vmatpush1.msra.mxu0 0.0
        %4148 = vmatprep.subr.mxu0 0.0
        %4149 = vmatpush1.msra.mxu0 0.0
        %4150 = vmatprep.subr.mxu0 0.0
        %4151 = vmatpush1.msra.mxu0 0.0
        %4152 = vmatprep.subr.mxu0 0.0
        %4153 = vmatpush1.msra.mxu0 0.0
        %4154 = vmatprep.subr.mxu0 0.0
        %4155 = vmatpush1.msra.mxu0 0.0
        %4156 = vmatprep.subr.mxu0 0.0
        %4157 = vmatpush1.msra.mxu0 0.0
        %4158 = vmatprep.subr.mxu0 0.0
        %4159 = vmatpush1.msra.mxu0 0.0
        %4160 = vmatprep.subr.mxu0 0.0
        %4161 = vmatpush1.msra.mxu0 0.0
        %4162 = vmatprep.subr.mxu0 0.0
        %4163 = vmatpush1.msra.mxu0 0.0
        %4164 = vmatprep.subr.mxu0 0.0
        %4165 = vmatpush1.msra.mxu0 0.0
        %4166 = vmatprep.subr.mxu0 0.0
        %4167 = vmatpush1.msra.mxu0 0.0
        %4168 = vmatprep.subr.mxu0 0.0
        %4169 = vmatpush1.msra.mxu0 0.0
        %4170 = vmatprep.subr.mxu0 0.0
        %4171 = vmatpush1.msra.mxu0 0.0
        %4172 = vmatprep.subr.mxu0 0.0
        %4173 = vmatpush1.msra.mxu0 0.0
        %4174 = vmatprep.subr.mxu0 0.0
        %4175 = vmatpush1.msra.mxu0 0.0
        %4176 = vmatprep.subr.mxu0 0.0
        %4177 = vmatpush1.msra.mxu0 0.0
        %4178 = vmatprep.subr.mxu0 0.0
        %4179 = vmatpush1.msra.mxu0 0.0
        %4180 = vmatprep.subr.mxu0 0.0
        %4181 = vmatpush1.msra.mxu0 0.0
        %4182 = vmatprep.subr.mxu0 0.0
        %4183 = vmatpush1.msra.mxu0 0.0
        %4184 = vmatprep.subr.mxu0 0.0
        %4185 = vmatpush1.msra.mxu0 0.0
        %4186 = vmatprep.subr.mxu0 0.0
        %4187 = vmatpush1.msra.mxu0 0.0
        %4188 = vmatprep.mubr.f32.mxu0 0.0
        %v4189 = vand.u32 %v3774, 4294901760
        %4190 = vmatmul.mubr.f32.gmra.mrb[0].mxu0 %v4189
        %v4191 = vpop.f32.mrb[0].mxu0
        %v4192 = vadd.f32 %v4107, %v4191
        %v4193 = vpop.f32.mrb[0].mxu0
        %4194 = vmatprep.mubr.f32.mxu0 0.0
        %v4195 = vand.u32 %v3776, 4294901760
        %4196 = vmatmul.mubr.f32.gmra.mrb[0].mxu0 %v4195
        %v4197 = vpop.f32.mrb[0].mxu0
        %v4198 = vadd.f32 %v4115, %v4197
        %v4199 = vpop.f32.mrb[0].mxu0
        %4200 = vdwg.mxu0
        %4201 = vmatprep.subr.mxu0 0.0
        %v4202 = vand.u32 %v184, 4294901760
        %4203 = vmatpush1.msra.mxu0 %v4202
        %4204 = vmatprep.subr.mxu0 0.0
        %v4205 = vand.u32 %v185, 4294901760
        %4206 = vmatpush1.msra.mxu0 %v4205
        %4207 = vmatprep.subr.mxu0 0.0
        %4208 = vmatpush1.msra.mxu0 0.0
        %4209 = vmatprep.subr.mxu0 0.0
        %4210 = vmatpush1.msra.mxu0 0.0
        %4211 = vmatprep.subr.mxu0 0.0
        %4212 = vmatpush1.msra.mxu0 0.0
        %4213 = vmatprep.subr.mxu0 0.0
        %4214 = vmatpush1.msra.mxu0 0.0
        %4215 = vmatprep.subr.mxu0 0.0
        %4216 = vmatpush1.msra.mxu0 0.0
        %4217 = vmatprep.subr.mxu0 0.0
        %4218 = vmatpush1.msra.mxu0 0.0
        %4219 = vmatprep.subr.mxu0 0.0
        %4220 = vmatpush1.msra.mxu0 0.0
        %4221 = vmatprep.subr.mxu0 0.0
        %4222 = vmatpush1.msra.mxu0 0.0
        %4223 = vmatprep.subr.mxu0 0.0
        %4224 = vmatpush1.msra.mxu0 0.0
        %4225 = vmatprep.subr.mxu0 0.0
        %4226 = vmatpush1.msra.mxu0 0.0
        %4227 = vmatprep.subr.mxu0 0.0
        %4228 = vmatpush1.msra.mxu0 0.0
        %4229 = vmatprep.subr.mxu0 0.0
        %4230 = vmatpush1.msra.mxu0 0.0
        %4231 = vmatprep.subr.mxu0 0.0
        %4232 = vmatpush1.msra.mxu0 0.0
        %4233 = vmatprep.subr.mxu0 0.0
        %4234 = vmatpush1.msra.mxu0 0.0
        %4235 = vmatprep.subr.mxu0 0.0
        %4236 = vmatpush1.msra.mxu0 0.0
        %4237 = vmatprep.subr.mxu0 0.0
        %4238 = vmatpush1.msra.mxu0 0.0
        %4239 = vmatprep.subr.mxu0 0.0
        %4240 = vmatpush1.msra.mxu0 0.0
        %4241 = vmatprep.subr.mxu0 0.0
        %4242 = vmatpush1.msra.mxu0 0.0
        %4243 = vmatprep.subr.mxu0 0.0
        %4244 = vmatpush1.msra.mxu0 0.0
        %4245 = vmatprep.subr.mxu0 0.0
        %4246 = vmatpush1.msra.mxu0 0.0
        %4247 = vmatprep.subr.mxu0 0.0
        %4248 = vmatpush1.msra.mxu0 0.0
        %4249 = vmatprep.subr.mxu0 0.0
        %4250 = vmatpush1.msra.mxu0 0.0
        %4251 = vmatprep.subr.mxu0 0.0
        %4252 = vmatpush1.msra.mxu0 0.0
        %4253 = vmatprep.subr.mxu0 0.0
        %4254 = vmatpush1.msra.mxu0 0.0
        %4255 = vmatprep.subr.mxu0 0.0
        %4256 = vmatpush1.msra.mxu0 0.0
        %4257 = vmatprep.subr.mxu0 0.0
        %4258 = vmatpush1.msra.mxu0 0.0
        %4259 = vmatprep.subr.mxu0 0.0
        %4260 = vmatpush1.msra.mxu0 0.0
        %4261 = vmatprep.subr.mxu0 0.0
        %4262 = vmatpush1.msra.mxu0 0.0
        %4263 = vmatprep.subr.mxu0 0.0
        %4264 = vmatpush1.msra.mxu0 0.0
        %4265 = vmatprep.subr.mxu0 0.0
        %4266 = vmatpush1.msra.mxu0 0.0
        %4267 = vmatprep.mubr.f32.mxu0 0.0
        %v4268 = vand.u32 %v3774, 4294901760
        %4269 = vmatmul.mubr.f32.gmra.mrb[0].mxu0 %v4268
        %v4270 = vpop.f32.mrb[0].mxu0
        %v4271 = vadd.f32 %v4192, %v4270
        %v4272 = vpop.f32.mrb[0].mxu0
        %4273 = vmatprep.mubr.f32.mxu0 0.0
        %v4274 = vand.u32 %v3776, 4294901760
        %4275 = vmatmul.mubr.f32.gmra.mrb[0].mxu0 %v4274
        %v4276 = vpop.f32.mrb[0].mxu0
        %v4277 = vadd.f32 %v4198, %v4276
        %v4278 = vpop.f32.mrb[0].mxu0
        %4279 = vdwg.mxu0
        %s4280 = scalar_lea.vmem %s182, 48
        %4281 = vst.msk [vmem:[%s4280] sm:$0xff] %vm1210, %v4271
        %4282 = vst.msk [vmem:[%s4280 + $0x8] sm:$0x7f] %vm1212, %v4277
        %s4283 = smul.u32 4, %s17
        %p4284 = scmp.lt.s32.totalorder %s4283, 7
        %s4285 = scalar_select %p4284, %s4283, 7
        %s4286 = smul.addr %s4285, 2
        %s4287 = smul.addr %s4286, 8
        %s4288 = scalar_lea.vmem %s2, %s4287
        // Predicated region
        $region37: #{tpu_custom_call.1} parent=27 // pred_check
          %p4289 = pneg %p82
        $region38: #{tpu_custom_call.1} parent=27 // pred_check_branch
          %4291 = sbr.rel (%p4289) target = $region40
        $region39: #{tpu_custom_call.1} parent=27 // pred_region
          %s4292 = smul.u32 4, %s17
        $region40: #{tpu_custom_call.1} parent=27 // pred_fallthru
          _
      $region28: #{tpu_custom_call.1} parent=5 // pred_fallthru
        _
      %p4293 = scmp.le.s32.totalorder 2, %s12
      // Predicated region
      $region41: #{tpu_custom_call.1} parent=5 // pred_check
        %p4294 = pneg %p4293
      $region42: #{tpu_custom_call.1} parent=5 // pred_check_branch
        %4296 = sbr.rel (%p4294) target = $region44
      $region43: #{tpu_custom_call.1} parent=5 // pred_region
        %s4297 = ssub.s32 %s12, 2
        // Predicated region
        $region45: #{tpu_custom_call.1} parent=43 // pred_check
          %p4298 = pneg %p88
        $region46: #{tpu_custom_call.1} parent=43 // pred_check_branch
          %4300 = sbr.rel (%p4298) target = $region48
        $region47: #{tpu_custom_call.1} parent=43 // pred_region
          %s4301 = smul.u32 4, %s18
          %p4302 = scmp.lt.s32.totalorder %s4301, 7
          %s4303 = scalar_select %p4302, %s4301, 7
          %s4304 = smul.addr %s4303, 2
          %s4305 = smul.addr %s4304, 8
          %s4306 = scalar_lea.vmem %s2, %s4305
        $region48: #{tpu_custom_call.1} parent=43 // pred_fallthru
          _
      $region44: #{tpu_custom_call.1} parent=5 // pred_fallthru
        _
    $region6: #{tpu_custom_call.1} parent=1 // loop_footer
      %s16 = sadd.s32 1, %s12
    $region7: #{tpu_custom_call.1} parent=1 // loop_footer_branch
      %11 = sbr.rel target = $region3
    $region8: #{tpu_custom_call.1} parent=1 // loop_exit
      _
    %4307 = vsyncpa [#allocation3], 1
    %s4308 = scalar_lea.sflag [#allocation3], 1
    %4309 = vsyncpa %s4308, 1
    %4310 = vsyncpa [#allocation5], 1

</llo_original>
